<compile_context>
chip_gen: v6e
topology: v6e:2x2x1
jax: 0.10.0
libtpu: 0.0.40
codegen_flags: <defaults>
</compile_context>

<pallas_src>
import jax
import jax.numpy as jnp
from jax import lax
from jax.experimental import pallas as pl
from jax.experimental.pallas import tpu as pltpu


# ----------------------------- fused Pallas kernel ------------------------------

def _rnn_fused_kernel(x_ref, enc_w_ref, enc_b_ref,
                      w_ih_ref, w_hh_ref, b_ref,
                      h0_ref, c0_ref,
                      fc_w_ref, fc_b_ref,
                      logits_ref, hT_ref, cT_ref):
    # x:      (T*B, I)
    # enc_w:  (I, H)        enc_b: (1, H)
    # w_ih:   (L, H, 4H)    w_hh:  (L, H, 4H)   b: (L, 1, 4H)  (b_ih + b_hh, gates i,f,g,o)
    # h0/c0:  (L, B, H)
    # fc_w:   (H, C)        fc_b:  (1, C)
    # logits: (T*B, C)      hT/cT: (L, B, H)
    n_layers, B, H = h0_ref.shape
    TB = x_ref.shape[0]
    T = TB // B
    f32 = jnp.float32

    # ---- notes_encoder: one (T*B, I) @ (I, H) matmul ----
    layer_in = (jnp.dot(x_ref[...], enc_w_ref[...], preferred_element_type=f32)
                + enc_b_ref[...])                                        # (T*B, H)

    # ---- n_layers-deep LSTM, time loop fully unrolled (T static & small) ----
    for l in range(n_layers):
        w_ih = w_ih_ref[l]                                               # (H, 4H)
        w_hh = w_hh_ref[l]                                               # (H, 4H)
        b = b_ref[l]                                                     # (1, 4H)

        # Hoisted input projection + bias: one big matmul off the serial chain.
        gx = jnp.dot(layer_in, w_ih, preferred_element_type=f32) + b     # (T*B, 4H)

        h = h0_ref[l]                                                    # (B, H)
        c = c0_ref[l]                                                    # (B, H)
        ys = []
        for t in range(T):                                               # unrolled
            gates = gx[t * B:(t + 1) * B, :] + jnp.dot(
                h, w_hh, preferred_element_type=f32)                     # (B, 4H)
            # Full-width transcendentals on the EUP, then static lane slices.
            sig = jax.nn.sigmoid(gates)
            th = jnp.tanh(gates)
            i_g = sig[:, 0 * H:1 * H]
            f_g = sig[:, 1 * H:2 * H]
            g_g = th[:, 2 * H:3 * H]
            o_g = sig[:, 3 * H:4 * H]
            c = f_g * c + i_g * g_g
            h = o_g * jnp.tanh(c)
            ys.append(h)
        hT_ref[l] = h
        cT_ref[l] = c
        layer_in = jnp.concatenate(ys, axis=0)                           # (T*B, H)

    # ---- logits_fc ----
    logits_ref[...] = (jnp.dot(layer_in, fc_w_ref[...], preferred_element_type=f32)
                       + fc_b_ref[...])


# ----------------------------- model wrapper -------------------------------

def init_params(key, input_size, hidden_size, num_classes, n_layers):
    """Deterministic parameter init (same shapes as the PyTorch module)."""
    def u(k, shape, fan_in):
        bound = 1.0 / jnp.sqrt(jnp.float32(fan_in))
        return jax.random.uniform(k, shape, jnp.float32, -bound, bound)

    keys = iter(jax.random.split(key, 4 + 4 * n_layers))
    params = {
        "enc_w": u(next(keys), (hidden_size, input_size), input_size),   # nn.Linear
        "enc_b": u(next(keys), (hidden_size,), input_size),
        "fc_w": u(next(keys), (num_classes, hidden_size), hidden_size),  # nn.Linear
        "fc_b": u(next(keys), (num_classes,), hidden_size),
        "lstm": [],
    }
    for _layer in range(n_layers):
        in_sz = hidden_size  # LSTM(hidden, hidden, n_layers): all layers take H
        params["lstm"].append({
            "w_ih": u(next(keys), (4 * hidden_size, in_sz), hidden_size),
            "w_hh": u(next(keys), (4 * hidden_size, hidden_size), hidden_size),
            "b_ih": u(next(keys), (4 * hidden_size,), hidden_size),
            "b_hh": u(next(keys), (4 * hidden_size,), hidden_size),
        })
    return params


def rnn_forward(params, input_sequences, input_sequences_lengths=None, hidden=None):
    # NOTE: input_sequences_lengths is accepted but unused, exactly like the
    # reference PyTorch forward (no packing happens there).
    T, B, I = input_sequences.shape
    H = params["enc_w"].shape[0]
    C = params["fc_w"].shape[0]
    n_layers = len(params["lstm"])

    # Pad batch up to an f32 sublane multiple (8) for dense vregs; slice back at the end.
    B_pad = -(-B // 8) * 8
    x = input_sequences
    if B_pad != B:
        x = jnp.pad(x, ((0, 0), (0, B_pad - B), (0, 0)))
    x2d = x.reshape(T * B_pad, I)

    if hidden is None:
        h0 = jnp.zeros((n_layers, B_pad, H), jnp.float32)
        c0 = jnp.zeros((n_layers, B_pad, H), jnp.float32)
    else:
        h0, c0 = hidden
        if B_pad != B:
            h0 = jnp.pad(h0, ((0, 0), (0, B_pad - B), (0, 0)))
            c0 = jnp.pad(c0, ((0, 0), (0, B_pad - B), (0, 0)))

    # Stack per-layer LSTM parameters (every layer is H -> H).
    w_ih_all = jnp.stack([p["w_ih"].T for p in params["lstm"]], 0)       # (L, H, 4H)
    w_hh_all = jnp.stack([p["w_hh"].T for p in params["lstm"]], 0)       # (L, H, 4H)
    b_all = jnp.stack([(p["b_ih"] + p["b_hh"]).reshape(1, 4 * H)
                       for p in params["lstm"]], 0)                      # (L, 1, 4H)

    vmem = pl.BlockSpec(memory_space=pltpu.MemorySpace.VMEM)
    logits2d, hT, cT = pl.pallas_call(
        _rnn_fused_kernel,
        out_shape=(
            jax.ShapeDtypeStruct((T * B_pad, C), jnp.float32),
            jax.ShapeDtypeStruct((n_layers, B_pad, H), jnp.float32),
            jax.ShapeDtypeStruct((n_layers, B_pad, H), jnp.float32),
        ),
        in_specs=[vmem] * 10,
        out_specs=(vmem, vmem, vmem),
        # TODO(synk): if H/T/B are scaled up, tile T with a grid + BlockSpecs and set
        # pltpu.CompilerParams(vmem_limit_bytes=...) (v5e 16 MiB / v7x 32 MiB scoped).
    )(x2d, params["enc_w"].T, params["enc_b"].reshape(1, H),
      w_ih_all, w_hh_all, b_all, h0, c0,
      params["fc_w"].T, params["fc_b"].reshape(1, C))

    logits = logits2d.reshape(T, B_pad, C)[:, :B, :]                     # (T, B, C)
    hidden_out = (hT[:, :B, :], cT[:, :B, :])

    # transpose(0,1) -> stack((logits, 1-logits), dim=3) -> view(-1, 2)
    logits_bt = jnp.transpose(logits, (1, 0, 2))                         # (B, T, C)
    binary_logits = jnp.stack((logits_bt, 1.0 - logits_bt), axis=3)      # (B, T, C, 2)
    logits_flatten = binary_logits.reshape(-1, 2)
    return logits_flatten, hidden_out


# --------------------------- pure-JAX reference -----------------------------

def rnn_forward_ref(params, x, hidden=None):
    hp = lax.Precision.HIGHEST
    T, B, I = x.shape
    H = params["enc_w"].shape[0]
    n_layers = len(params["lstm"])
    enc = jnp.dot(x, params["enc_w"].T, precision=hp) + params["enc_b"]
    if hidden is None:
        h0 = jnp.zeros((n_layers, B, H), jnp.float32)
        c0 = jnp.zeros((n_layers, B, H), jnp.float32)
    else:
        h0, c0 = hidden
    layer_in = enc
    h_fin, c_fin = [], []
    for layer in range(n_layers):
        p = params["lstm"][layer]

        def step(carry, x_t, p=p):
            h, c = carry
            gates = (jnp.dot(x_t, p["w_ih"].T, precision=hp)
                     + jnp.dot(h, p["w_hh"].T, precision=hp)
                     + p["b_ih"] + p["b_hh"])
            i_g, f_g, g_g, o_g = jnp.split(gates, 4, axis=-1)
            c_new = jax.nn.sigmoid(f_g) * c + jax.nn.sigmoid(i_g) * jnp.tanh(g_g)
            h_new = jax.nn.sigmoid(o_g) * jnp.tanh(c_new)
            return (h_new, c_new), h_new

        (hT, cT), ys = lax.scan(step, (h0[layer], c0[layer]), layer_in)
        layer_in = ys
        h_fin.append(hT)
        c_fin.append(cT)
    logits = jnp.dot(layer_in, params["fc_w"].T, precision=hp) + params["fc_b"]
    logits_bt = jnp.transpose(logits, (1, 0, 2))
    binary = jnp.stack((logits_bt, 1.0 - logits_bt), axis=3)
    return binary.reshape(-1, 2), (jnp.stack(h_fin, 0), jnp.stack(c_fin, 0))


# --------------------------------- main -------------------------------------

if __name__ == "__main__":
    seq_len, batch = 8, 2
    input_size, hidden_size, num_classes, n_layers = 16, 32, 16, 4

    key = jax.random.PRNGKey(0)
    k_param, k_x = jax.random.split(key)
    params = init_params(k_param, input_size, hidden_size, num_classes, n_layers)

    x = jax.random.normal(k_x, (seq_len, batch, input_size), jnp.float32)
    lengths = jnp.full((batch,), seq_len, jnp.int32)  # unused, as in the PyTorch forward

    logits_flat, (h_out, c_out) = jax.jit(rnn_forward)(params, x, lengths)
    jax.block_until_ready((logits_flat, h_out, c_out))

    # sanity check vs pure-JAX reference (tightened tolerance: all-f32 path)
    ref_logits, (ref_h, ref_c) = rnn_forward_ref(params, x)
    assert logits_flat.shape == (batch * seq_len * num_classes, 2)
    assert h_out.shape == (n_layers, batch, hidden_size)
    assert c_out.shape == (n_layers, batch, hidden_size)
    assert jnp.allclose(logits_flat, ref_logits, atol=1e-3, rtol=1e-3)
    assert jnp.allclose(h_out, ref_h, atol=1e-3, rtol=1e-3)
    assert jnp.allclose(c_out, ref_c, atol=1e-3, rtol=1e-3)

    print("KERNEL_OK")
</pallas_src>

<mosaic_0001>
module attributes {stable_mosaic.version = 11 : i64} {
  func.func @_rnn_fused_kernel(%arg0: memref<64x16xf32, #tpu.memory_space<vmem>>, %arg1: memref<16x32xf32, #tpu.memory_space<vmem>>, %arg2: memref<1x32xf32, #tpu.memory_space<vmem>>, %arg3: memref<4x32x128xf32, #tpu.memory_space<vmem>>, %arg4: memref<4x32x128xf32, #tpu.memory_space<vmem>>, %arg5: memref<4x1x128xf32, #tpu.memory_space<vmem>>, %arg6: memref<4x8x32xf32, #tpu.memory_space<vmem>>, %arg7: memref<4x8x32xf32, #tpu.memory_space<vmem>>, %arg8: memref<32x16xf32, #tpu.memory_space<vmem>>, %arg9: memref<1x16xf32, #tpu.memory_space<vmem>>, %arg10: memref<64x16xf32, #tpu.memory_space<vmem>>, %arg11: memref<4x8x32xf32, #tpu.memory_space<vmem>>, %arg12: memref<4x8x32xf32, #tpu.memory_space<vmem>>) attributes {dimension_semantics = [], scalar_prefetch = 0 : i64, scratch_operands = 0 : i64, tpu.core_type = #tpu.core_type<tc>} {
    %c0 = arith.constant 0 : index
    %c0_0 = arith.constant 0 : index
    %0 = vector.load %arg0[%c0, %c0_0] : memref<64x16xf32, #tpu.memory_space<vmem>>, vector<64x16xf32>
    %c0_1 = arith.constant 0 : index
    %c0_2 = arith.constant 0 : index
    %1 = vector.load %arg1[%c0_1, %c0_2] : memref<16x32xf32, #tpu.memory_space<vmem>>, vector<16x32xf32>
    %cst = arith.constant dense<0.000000e+00> : vector<64x32xf32>
    %2 = tpu.matmul %0, %1, %cst {dimension_numbers = #tpu.dot_dimension_numbers<[1], [0], [0], [1], [0, 0, 1, 1], [], []>} : vector<64x16xf32>, vector<16x32xf32>, vector<64x32xf32> -> vector<64x32xf32>
    %c0_3 = arith.constant 0 : index
    %c0_4 = arith.constant 0 : index
    %3 = vector.load %arg2[%c0_3, %c0_4] : memref<1x32xf32, #tpu.memory_space<vmem>>, vector<1x32xf32>
    %4 = vector.broadcast %3 : vector<1x32xf32> to vector<64x32xf32>
    %5 = arith.addf %2, %4 : vector<64x32xf32>
    %c0_5 = arith.constant 0 : index
    %c0_6 = arith.constant 0 : index
    %c0_7 = arith.constant 0 : index
    %6 = vector.load %arg3[%c0_5, %c0_6, %c0_7] : memref<4x32x128xf32, #tpu.memory_space<vmem>>, vector<1x32x128xf32>
    %7 = vector.shape_cast %6 : vector<1x32x128xf32> to vector<32x128xf32>
    %c0_8 = arith.constant 0 : index
    %c0_9 = arith.constant 0 : index
    %c0_10 = arith.constant 0 : index
    %8 = vector.load %arg4[%c0_8, %c0_9, %c0_10] : memref<4x32x128xf32, #tpu.memory_space<vmem>>, vector<1x32x128xf32>
    %9 = vector.shape_cast %8 : vector<1x32x128xf32> to vector<32x128xf32>
    %c0_11 = arith.constant 0 : index
    %c0_12 = arith.constant 0 : index
    %c0_13 = arith.constant 0 : index
    %10 = vector.load %arg5[%c0_11, %c0_12, %c0_13] : memref<4x1x128xf32, #tpu.memory_space<vmem>>, vector<1x1x128xf32>
    %11 = vector.shape_cast %10 : vector<1x1x128xf32> to vector<1x128xf32>
    %cst_14 = arith.constant dense<0.000000e+00> : vector<64x128xf32>
    %12 = tpu.matmul %5, %7, %cst_14 {dimension_numbers = #tpu.dot_dimension_numbers<[1], [0], [0], [1], [0, 0, 1, 1], [], []>} : vector<64x32xf32>, vector<32x128xf32>, vector<64x128xf32> -> vector<64x128xf32>
    %13 = vector.broadcast %11 : vector<1x128xf32> to vector<64x128xf32>
    %14 = arith.addf %12, %13 : vector<64x128xf32>
    %c0_15 = arith.constant 0 : index
    %c0_16 = arith.constant 0 : index
    %c0_17 = arith.constant 0 : index
    %15 = vector.load %arg6[%c0_15, %c0_16, %c0_17] : memref<4x8x32xf32, #tpu.memory_space<vmem>>, vector<1x8x32xf32>
    %16 = vector.shape_cast %15 : vector<1x8x32xf32> to vector<8x32xf32>
    %c0_18 = arith.constant 0 : index
    %c0_19 = arith.constant 0 : index
    %c0_20 = arith.constant 0 : index
    %17 = vector.load %arg7[%c0_18, %c0_19, %c0_20] : memref<4x8x32xf32, #tpu.memory_space<vmem>>, vector<1x8x32xf32>
    %18 = vector.shape_cast %17 : vector<1x8x32xf32> to vector<8x32xf32>
    %19 = vector.extract_strided_slice %14 {offsets = [0, 0], sizes = [8, 128], strides = [1, 1]} : vector<64x128xf32> to vector<8x128xf32>
    %cst_21 = arith.constant dense<0.000000e+00> : vector<8x128xf32>
    %20 = tpu.matmul %16, %9, %cst_21 {dimension_numbers = #tpu.dot_dimension_numbers<[1], [0], [0], [1], [0, 0, 1, 1], [], []>} : vector<8x32xf32>, vector<32x128xf32>, vector<8x128xf32> -> vector<8x128xf32>
    %21 = arith.addf %19, %20 : vector<8x128xf32>
    %22 = arith.negf %21 : vector<8x128xf32>
    %23 = math.exp %22 : vector<8x128xf32>
    %cst_22 = arith.constant 1.000000e+00 : f32
    %24 = vector.broadcast %cst_22 : f32 to vector<8x128xf32>
    %25 = arith.addf %24, %23 : vector<8x128xf32>
    %26 = arith.divf %24, %25 : vector<8x128xf32>
    %27 = math.tanh %21 : vector<8x128xf32>
    %28 = vector.extract_strided_slice %26 {offsets = [0, 0], sizes = [8, 32], strides = [1, 1]} : vector<8x128xf32> to vector<8x32xf32>
    %29 = vector.extract_strided_slice %26 {offsets = [0, 32], sizes = [8, 32], strides = [1, 1]} : vector<8x128xf32> to vector<8x32xf32>
    %30 = vector.extract_strided_slice %27 {offsets = [0, 64], sizes = [8, 32], strides = [1, 1]} : vector<8x128xf32> to vector<8x32xf32>
    %31 = vector.extract_strided_slice %26 {offsets = [0, 96], sizes = [8, 32], strides = [1, 1]} : vector<8x128xf32> to vector<8x32xf32>
    %32 = arith.mulf %29, %18 : vector<8x32xf32>
    %33 = arith.mulf %28, %30 : vector<8x32xf32>
    %34 = arith.addf %32, %33 : vector<8x32xf32>
    %35 = math.tanh %34 : vector<8x32xf32>
    %36 = arith.mulf %31, %35 : vector<8x32xf32>
    %37 = vector.extract_strided_slice %14 {offsets = [8, 0], sizes = [8, 128], strides = [1, 1]} : vector<64x128xf32> to vector<8x128xf32>
    %cst_23 = arith.constant dense<0.000000e+00> : vector<8x128xf32>
    %38 = tpu.matmul %36, %9, %cst_23 {dimension_numbers = #tpu.dot_dimension_numbers<[1], [0], [0], [1], [0, 0, 1, 1], [], []>} : vector<8x32xf32>, vector<32x128xf32>, vector<8x128xf32> -> vector<8x128xf32>
    %39 = arith.addf %37, %38 : vector<8x128xf32>
    %40 = arith.negf %39 : vector<8x128xf32>
    %41 = math.exp %40 : vector<8x128xf32>
    %cst_24 = arith.constant 1.000000e+00 : f32
    %42 = vector.broadcast %cst_24 : f32 to vector<8x128xf32>
    %43 = arith.addf %42, %41 : vector<8x128xf32>
    %44 = arith.divf %42, %43 : vector<8x128xf32>
    %45 = math.tanh %39 : vector<8x128xf32>
    %46 = vector.extract_strided_slice %44 {offsets = [0, 0], sizes = [8, 32], strides = [1, 1]} : vector<8x128xf32> to vector<8x32xf32>
    %47 = vector.extract_strided_slice %44 {offsets = [0, 32], sizes = [8, 32], strides = [1, 1]} : vector<8x128xf32> to vector<8x32xf32>
    %48 = vector.extract_strided_slice %45 {offsets = [0, 64], sizes = [8, 32], strides = [1, 1]} : vector<8x128xf32> to vector<8x32xf32>
    %49 = vector.extract_strided_slice %44 {offsets = [0, 96], sizes = [8, 32], strides = [1, 1]} : vector<8x128xf32> to vector<8x32xf32>
    %50 = arith.mulf %47, %34 : vector<8x32xf32>
    %51 = arith.mulf %46, %48 : vector<8x32xf32>
    %52 = arith.addf %50, %51 : vector<8x32xf32>
    %53 = math.tanh %52 : vector<8x32xf32>
    %54 = arith.mulf %49, %53 : vector<8x32xf32>
    %55 = vector.extract_strided_slice %14 {offsets = [16, 0], sizes = [8, 128], strides = [1, 1]} : vector<64x128xf32> to vector<8x128xf32>
    %cst_25 = arith.constant dense<0.000000e+00> : vector<8x128xf32>
    %56 = tpu.matmul %54, %9, %cst_25 {dimension_numbers = #tpu.dot_dimension_numbers<[1], [0], [0], [1], [0, 0, 1, 1], [], []>} : vector<8x32xf32>, vector<32x128xf32>, vector<8x128xf32> -> vector<8x128xf32>
    %57 = arith.addf %55, %56 : vector<8x128xf32>
    %58 = arith.negf %57 : vector<8x128xf32>
    %59 = math.exp %58 : vector<8x128xf32>
    %cst_26 = arith.constant 1.000000e+00 : f32
    %60 = vector.broadcast %cst_26 : f32 to vector<8x128xf32>
    %61 = arith.addf %60, %59 : vector<8x128xf32>
    %62 = arith.divf %60, %61 : vector<8x128xf32>
    %63 = math.tanh %57 : vector<8x128xf32>
    %64 = vector.extract_strided_slice %62 {offsets = [0, 0], sizes = [8, 32], strides = [1, 1]} : vector<8x128xf32> to vector<8x32xf32>
    %65 = vector.extract_strided_slice %62 {offsets = [0, 32], sizes = [8, 32], strides = [1, 1]} : vector<8x128xf32> to vector<8x32xf32>
    %66 = vector.extract_strided_slice %63 {offsets = [0, 64], sizes = [8, 32], strides = [1, 1]} : vector<8x128xf32> to vector<8x32xf32>
    %67 = vector.extract_strided_slice %62 {offsets = [0, 96], sizes = [8, 32], strides = [1, 1]} : vector<8x128xf32> to vector<8x32xf32>
    %68 = arith.mulf %65, %52 : vector<8x32xf32>
    %69 = arith.mulf %64, %66 : vector<8x32xf32>
    %70 = arith.addf %68, %69 : vector<8x32xf32>
    %71 = math.tanh %70 : vector<8x32xf32>
    %72 = arith.mulf %67, %71 : vector<8x32xf32>
    %73 = vector.extract_strided_slice %14 {offsets = [24, 0], sizes = [8, 128], strides = [1, 1]} : vector<64x128xf32> to vector<8x128xf32>
    %cst_27 = arith.constant dense<0.000000e+00> : vector<8x128xf32>
    %74 = tpu.matmul %72, %9, %cst_27 {dimension_numbers = #tpu.dot_dimension_numbers<[1], [0], [0], [1], [0, 0, 1, 1], [], []>} : vector<8x32xf32>, vector<32x128xf32>, vector<8x128xf32> -> vector<8x128xf32>
    %75 = arith.addf %73, %74 : vector<8x128xf32>
    %76 = arith.negf %75 : vector<8x128xf32>
    %77 = math.exp %76 : vector<8x128xf32>
    %cst_28 = arith.constant 1.000000e+00 : f32
    %78 = vector.broadcast %cst_28 : f32 to vector<8x128xf32>
    %79 = arith.addf %78, %77 : vector<8x128xf32>
    %80 = arith.divf %78, %79 : vector<8x128xf32>
    %81 = math.tanh %75 : vector<8x128xf32>
    %82 = vector.extract_strided_slice %80 {offsets = [0, 0], sizes = [8, 32], strides = [1, 1]} : vector<8x128xf32> to vector<8x32xf32>
    %83 = vector.extract_strided_slice %80 {offsets = [0, 32], sizes = [8, 32], strides = [1, 1]} : vector<8x128xf32> to vector<8x32xf32>
    %84 = vector.extract_strided_slice %81 {offsets = [0, 64], sizes = [8, 32], strides = [1, 1]} : vector<8x128xf32> to vector<8x32xf32>
    %85 = vector.extract_strided_slice %80 {offsets = [0, 96], sizes = [8, 32], strides = [1, 1]} : vector<8x128xf32> to vector<8x32xf32>
    %86 = arith.mulf %83, %70 : vector<8x32xf32>
    %87 = arith.mulf %82, %84 : vector<8x32xf32>
    %88 = arith.addf %86, %87 : vector<8x32xf32>
    %89 = math.tanh %88 : vector<8x32xf32>
    %90 = arith.mulf %85, %89 : vector<8x32xf32>
    %91 = vector.extract_strided_slice %14 {offsets = [32, 0], sizes = [8, 128], strides = [1, 1]} : vector<64x128xf32> to vector<8x128xf32>
    %cst_29 = arith.constant dense<0.000000e+00> : vector<8x128xf32>
    %92 = tpu.matmul %90, %9, %cst_29 {dimension_numbers = #tpu.dot_dimension_numbers<[1], [0], [0], [1], [0, 0, 1, 1], [], []>} : vector<8x32xf32>, vector<32x128xf32>, vector<8x128xf32> -> vector<8x128xf32>
    %93 = arith.addf %91, %92 : vector<8x128xf32>
    %94 = arith.negf %93 : vector<8x128xf32>
    %95 = math.exp %94 : vector<8x128xf32>
    %cst_30 = arith.constant 1.000000e+00 : f32
    %96 = vector.broadcast %cst_30 : f32 to vector<8x128xf32>
    %97 = arith.addf %96, %95 : vector<8x128xf32>
    %98 = arith.divf %96, %97 : vector<8x128xf32>
    %99 = math.tanh %93 : vector<8x128xf32>
    %100 = vector.extract_strided_slice %98 {offsets = [0, 0], sizes = [8, 32], strides = [1, 1]} : vector<8x128xf32> to vector<8x32xf32>
    %101 = vector.extract_strided_slice %98 {offsets = [0, 32], sizes = [8, 32], strides = [1, 1]} : vector<8x128xf32> to vector<8x32xf32>
    %102 = vector.extract_strided_slice %99 {offsets = [0, 64], sizes = [8, 32], strides = [1, 1]} : vector<8x128xf32> to vector<8x32xf32>
    %103 = vector.extract_strided_slice %98 {offsets = [0, 96], sizes = [8, 32], strides = [1, 1]} : vector<8x128xf32> to vector<8x32xf32>
    %104 = arith.mulf %101, %88 : vector<8x32xf32>
    %105 = arith.mulf %100, %102 : vector<8x32xf32>
    %106 = arith.addf %104, %105 : vector<8x32xf32>
    %107 = math.tanh %106 : vector<8x32xf32>
    %108 = arith.mulf %103, %107 : vector<8x32xf32>
    %109 = vector.extract_strided_slice %14 {offsets = [40, 0], sizes = [8, 128], strides = [1, 1]} : vector<64x128xf32> to vector<8x128xf32>
    %cst_31 = arith.constant dense<0.000000e+00> : vector<8x128xf32>
    %110 = tpu.matmul %108, %9, %cst_31 {dimension_numbers = #tpu.dot_dimension_numbers<[1], [0], [0], [1], [0, 0, 1, 1], [], []>} : vector<8x32xf32>, vector<32x128xf32>, vector<8x128xf32> -> vector<8x128xf32>
    %111 = arith.addf %109, %110 : vector<8x128xf32>
    %112 = arith.negf %111 : vector<8x128xf32>
    %113 = math.exp %112 : vector<8x128xf32>
    %cst_32 = arith.constant 1.000000e+00 : f32
    %114 = vector.broadcast %cst_32 : f32 to vector<8x128xf32>
    %115 = arith.addf %114, %113 : vector<8x128xf32>
    %116 = arith.divf %114, %115 : vector<8x128xf32>
    %117 = math.tanh %111 : vector<8x128xf32>
    %118 = vector.extract_strided_slice %116 {offsets = [0, 0], sizes = [8, 32], strides = [1, 1]} : vector<8x128xf32> to vector<8x32xf32>
    %119 = vector.extract_strided_slice %116 {offsets = [0, 32], sizes = [8, 32], strides = [1, 1]} : vector<8x128xf32> to vector<8x32xf32>
    %120 = vector.extract_strided_slice %117 {offsets = [0, 64], sizes = [8, 32], strides = [1, 1]} : vector<8x128xf32> to vector<8x32xf32>
    %121 = vector.extract_strided_slice %116 {offsets = [0, 96], sizes = [8, 32], strides = [1, 1]} : vector<8x128xf32> to vector<8x32xf32>
    %122 = arith.mulf %119, %106 : vector<8x32xf32>
    %123 = arith.mulf %118, %120 : vector<8x32xf32>
    %124 = arith.addf %122, %123 : vector<8x32xf32>
    %125 = math.tanh %124 : vector<8x32xf32>
    %126 = arith.mulf %121, %125 : vector<8x32xf32>
    %127 = vector.extract_strided_slice %14 {offsets = [48, 0], sizes = [8, 128], strides = [1, 1]} : vector<64x128xf32> to vector<8x128xf32>
    %cst_33 = arith.constant dense<0.000000e+00> : vector<8x128xf32>
    %128 = tpu.matmul %126, %9, %cst_33 {dimension_numbers = #tpu.dot_dimension_numbers<[1], [0], [0], [1], [0, 0, 1, 1], [], []>} : vector<8x32xf32>, vector<32x128xf32>, vector<8x128xf32> -> vector<8x128xf32>
    %129 = arith.addf %127, %128 : vector<8x128xf32>
    %130 = arith.negf %129 : vector<8x128xf32>
    %131 = math.exp %130 : vector<8x128xf32>
    %cst_34 = arith.constant 1.000000e+00 : f32
    %132 = vector.broadcast %cst_34 : f32 to vector<8x128xf32>
    %133 = arith.addf %132, %131 : vector<8x128xf32>
    %134 = arith.divf %132, %133 : vector<8x128xf32>
    %135 = math.tanh %129 : vector<8x128xf32>
    %136 = vector.extract_strided_slice %134 {offsets = [0, 0], sizes = [8, 32], strides = [1, 1]} : vector<8x128xf32> to vector<8x32xf32>
    %137 = vector.extract_strided_slice %134 {offsets = [0, 32], sizes = [8, 32], strides = [1, 1]} : vector<8x128xf32> to vector<8x32xf32>
    %138 = vector.extract_strided_slice %135 {offsets = [0, 64], sizes = [8, 32], strides = [1, 1]} : vector<8x128xf32> to vector<8x32xf32>
    %139 = vector.extract_strided_slice %134 {offsets = [0, 96], sizes = [8, 32], strides = [1, 1]} : vector<8x128xf32> to vector<8x32xf32>
    %140 = arith.mulf %137, %124 : vector<8x32xf32>
    %141 = arith.mulf %136, %138 : vector<8x32xf32>
    %142 = arith.addf %140, %141 : vector<8x32xf32>
    %143 = math.tanh %142 : vector<8x32xf32>
    %144 = arith.mulf %139, %143 : vector<8x32xf32>
    %145 = vector.extract_strided_slice %14 {offsets = [56, 0], sizes = [8, 128], strides = [1, 1]} : vector<64x128xf32> to vector<8x128xf32>
    %cst_35 = arith.constant dense<0.000000e+00> : vector<8x128xf32>
    %146 = tpu.matmul %144, %9, %cst_35 {dimension_numbers = #tpu.dot_dimension_numbers<[1], [0], [0], [1], [0, 0, 1, 1], [], []>} : vector<8x32xf32>, vector<32x128xf32>, vector<8x128xf32> -> vector<8x128xf32>
    %147 = arith.addf %145, %146 : vector<8x128xf32>
    %148 = arith.negf %147 : vector<8x128xf32>
    %149 = math.exp %148 : vector<8x128xf32>
    %cst_36 = arith.constant 1.000000e+00 : f32
    %150 = vector.broadcast %cst_36 : f32 to vector<8x128xf32>
    %151 = arith.addf %150, %149 : vector<8x128xf32>
    %152 = arith.divf %150, %151 : vector<8x128xf32>
    %153 = math.tanh %147 : vector<8x128xf32>
    %154 = vector.extract_strided_slice %152 {offsets = [0, 0], sizes = [8, 32], strides = [1, 1]} : vector<8x128xf32> to vector<8x32xf32>
    %155 = vector.extract_strided_slice %152 {offsets = [0, 32], sizes = [8, 32], strides = [1, 1]} : vector<8x128xf32> to vector<8x32xf32>
    %156 = vector.extract_strided_slice %153 {offsets = [0, 64], sizes = [8, 32], strides = [1, 1]} : vector<8x128xf32> to vector<8x32xf32>
    %157 = vector.extract_strided_slice %152 {offsets = [0, 96], sizes = [8, 32], strides = [1, 1]} : vector<8x128xf32> to vector<8x32xf32>
    %158 = arith.mulf %155, %142 : vector<8x32xf32>
    %159 = arith.mulf %154, %156 : vector<8x32xf32>
    %160 = arith.addf %158, %159 : vector<8x32xf32>
    %161 = math.tanh %160 : vector<8x32xf32>
    %162 = arith.mulf %157, %161 : vector<8x32xf32>
    %c0_37 = arith.constant 0 : index
    %c0_38 = arith.constant 0 : index
    %c0_39 = arith.constant 0 : index
    %163 = vector.load %arg11[%c0_37, %c0_38, %c0_39] : memref<4x8x32xf32, #tpu.memory_space<vmem>>, vector<1x8x32xf32>
    %164 = vector.shape_cast %163 : vector<1x8x32xf32> to vector<8x32xf32>
    %165 = vector.shape_cast %162 : vector<8x32xf32> to vector<1x8x32xf32>
    tpu.vector_store %arg11[%c0_37, %c0_38, %c0_39], %165 {strides = array<i32>} : memref<4x8x32xf32, #tpu.memory_space<vmem>>, vector<1x8x32xf32>,
    %c0_40 = arith.constant 0 : index
    %c0_41 = arith.constant 0 : index
    %c0_42 = arith.constant 0 : index
    %166 = vector.load %arg12[%c0_40, %c0_41, %c0_42] : memref<4x8x32xf32, #tpu.memory_space<vmem>>, vector<1x8x32xf32>
    %167 = vector.shape_cast %166 : vector<1x8x32xf32> to vector<8x32xf32>
    %168 = vector.shape_cast %160 : vector<8x32xf32> to vector<1x8x32xf32>
    tpu.vector_store %arg12[%c0_40, %c0_41, %c0_42], %168 {strides = array<i32>} : memref<4x8x32xf32, #tpu.memory_space<vmem>>, vector<1x8x32xf32>,
    %169 = tpu.concatenate %36, %54, %72, %90, %108, %126, %144, %162 in 0 : vector<8x32xf32>, vector<8x32xf32>, vector<8x32xf32>, vector<8x32xf32>, vector<8x32xf32>, vector<8x32xf32>, vector<8x32xf32>, vector<8x32xf32> -> vector<64x32xf32>
    %c1 = arith.constant 1 : index
    %c0_43 = arith.constant 0 : index
    %c0_44 = arith.constant 0 : index
    %170 = vector.load %arg3[%c1, %c0_43, %c0_44] : memref<4x32x128xf32, #tpu.memory_space<vmem>>, vector<1x32x128xf32>
    %171 = vector.shape_cast %170 : vector<1x32x128xf32> to vector<32x128xf32>
    %c1_45 = arith.constant 1 : index
    %c0_46 = arith.constant 0 : index
    %c0_47 = arith.constant 0 : index
    %172 = vector.load %arg4[%c1_45, %c0_46, %c0_47] : memref<4x32x128xf32, #tpu.memory_space<vmem>>, vector<1x32x128xf32>
    %173 = vector.shape_cast %172 : vector<1x32x128xf32> to vector<32x128xf32>
    %c1_48 = arith.constant 1 : index
    %c0_49 = arith.constant 0 : index
    %c0_50 = arith.constant 0 : index
    %174 = vector.load %arg5[%c1_48, %c0_49, %c0_50] : memref<4x1x128xf32, #tpu.memory_space<vmem>>, vector<1x1x128xf32>
    %175 = vector.shape_cast %174 : vector<1x1x128xf32> to vector<1x128xf32>
    %cst_51 = arith.constant dense<0.000000e+00> : vector<64x128xf32>
    %176 = tpu.matmul %169, %171, %cst_51 {dimension_numbers = #tpu.dot_dimension_numbers<[1], [0], [0], [1], [0, 0, 1, 1], [], []>} : vector<64x32xf32>, vector<32x128xf32>, vector<64x128xf32> -> vector<64x128xf32>
    %177 = vector.broadcast %175 : vector<1x128xf32> to vector<64x128xf32>
    %178 = arith.addf %176, %177 : vector<64x128xf32>
    %c1_52 = arith.constant 1 : index
    %c0_53 = arith.constant 0 : index
    %c0_54 = arith.constant 0 : index
    %179 = vector.load %arg6[%c1_52, %c0_53, %c0_54] : memref<4x8x32xf32, #tpu.memory_space<vmem>>, vector<1x8x32xf32>
    %180 = vector.shape_cast %179 : vector<1x8x32xf32> to vector<8x32xf32>
    %c1_55 = arith.constant 1 : index
    %c0_56 = arith.constant 0 : index
    %c0_57 = arith.constant 0 : index
    %181 = vector.load %arg7[%c1_55, %c0_56, %c0_57] : memref<4x8x32xf32, #tpu.memory_space<vmem>>, vector<1x8x32xf32>
    %182 = vector.shape_cast %181 : vector<1x8x32xf32> to vector<8x32xf32>
    %183 = vector.extract_strided_slice %178 {offsets = [0, 0], sizes = [8, 128], strides = [1, 1]} : vector<64x128xf32> to vector<8x128xf32>
    %cst_58 = arith.constant dense<0.000000e+00> : vector<8x128xf32>
    %184 = tpu.matmul %180, %173, %cst_58 {dimension_numbers = #tpu.dot_dimension_numbers<[1], [0], [0], [1], [0, 0, 1, 1], [], []>} : vector<8x32xf32>, vector<32x128xf32>, vector<8x128xf32> -> vector<8x128xf32>
    %185 = arith.addf %183, %184 : vector<8x128xf32>
    %186 = arith.negf %185 : vector<8x128xf32>
    %187 = math.exp %186 : vector<8x128xf32>
    %cst_59 = arith.constant 1.000000e+00 : f32
    %188 = vector.broadcast %cst_59 : f32 to vector<8x128xf32>
    %189 = arith.addf %188, %187 : vector<8x128xf32>
    %190 = arith.divf %188, %189 : vector<8x128xf32>
    %191 = math.tanh %185 : vector<8x128xf32>
    %192 = vector.extract_strided_slice %190 {offsets = [0, 0], sizes = [8, 32], strides = [1, 1]} : vector<8x128xf32> to vector<8x32xf32>
    %193 = vector.extract_strided_slice %190 {offsets = [0, 32], sizes = [8, 32], strides = [1, 1]} : vector<8x128xf32> to vector<8x32xf32>
    %194 = vector.extract_strided_slice %191 {offsets = [0, 64], sizes = [8, 32], strides = [1, 1]} : vector<8x128xf32> to vector<8x32xf32>
    %195 = vector.extract_strided_slice %190 {offsets = [0, 96], sizes = [8, 32], strides = [1, 1]} : vector<8x128xf32> to vector<8x32xf32>
    %196 = arith.mulf %193, %182 : vector<8x32xf32>
    %197 = arith.mulf %192, %194 : vector<8x32xf32>
    %198 = arith.addf %196, %197 : vector<8x32xf32>
    %199 = math.tanh %198 : vector<8x32xf32>
    %200 = arith.mulf %195, %199 : vector<8x32xf32>
    %201 = vector.extract_strided_slice %178 {offsets = [8, 0], sizes = [8, 128], strides = [1, 1]} : vector<64x128xf32> to vector<8x128xf32>
    %cst_60 = arith.constant dense<0.000000e+00> : vector<8x128xf32>
    %202 = tpu.matmul %200, %173, %cst_60 {dimension_numbers = #tpu.dot_dimension_numbers<[1], [0], [0], [1], [0, 0, 1, 1], [], []>} : vector<8x32xf32>, vector<32x128xf32>, vector<8x128xf32> -> vector<8x128xf32>
    %203 = arith.addf %201, %202 : vector<8x128xf32>
    %204 = arith.negf %203 : vector<8x128xf32>
    %205 = math.exp %204 : vector<8x128xf32>
    %cst_61 = arith.constant 1.000000e+00 : f32
    %206 = vector.broadcast %cst_61 : f32 to vector<8x128xf32>
    %207 = arith.addf %206, %205 : vector<8x128xf32>
    %208 = arith.divf %206, %207 : vector<8x128xf32>
    %209 = math.tanh %203 : vector<8x128xf32>
    %210 = vector.extract_strided_slice %208 {offsets = [0, 0], sizes = [8, 32], strides = [1, 1]} : vector<8x128xf32> to vector<8x32xf32>
    %211 = vector.extract_strided_slice %208 {offsets = [0, 32], sizes = [8, 32], strides = [1, 1]} : vector<8x128xf32> to vector<8x32xf32>
    %212 = vector.extract_strided_slice %209 {offsets = [0, 64], sizes = [8, 32], strides = [1, 1]} : vector<8x128xf32> to vector<8x32xf32>
    %213 = vector.extract_strided_slice %208 {offsets = [0, 96], sizes = [8, 32], strides = [1, 1]} : vector<8x128xf32> to vector<8x32xf32>
    %214 = arith.mulf %211, %198 : vector<8x32xf32>
    %215 = arith.mulf %210, %212 : vector<8x32xf32>
    %216 = arith.addf %214, %215 : vector<8x32xf32>
    %217 = math.tanh %216 : vector<8x32xf32>
    %218 = arith.mulf %213, %217 : vector<8x32xf32>
    %219 = vector.extract_strided_slice %178 {offsets = [16, 0], sizes = [8, 128], strides = [1, 1]} : vector<64x128xf32> to vector<8x128xf32>
    %cst_62 = arith.constant dense<0.000000e+00> : vector<8x128xf32>
    %220 = tpu.matmul %218, %173, %cst_62 {dimension_numbers = #tpu.dot_dimension_numbers<[1], [0], [0], [1], [0, 0, 1, 1], [], []>} : vector<8x32xf32>, vector<32x128xf32>, vector<8x128xf32> -> vector<8x128xf32>
    %221 = arith.addf %219, %220 : vector<8x128xf32>
    %222 = arith.negf %221 : vector<8x128xf32>
    %223 = math.exp %222 : vector<8x128xf32>
    %cst_63 = arith.constant 1.000000e+00 : f32
    %224 = vector.broadcast %cst_63 : f32 to vector<8x128xf32>
    %225 = arith.addf %224, %223 : vector<8x128xf32>
    %226 = arith.divf %224, %225 : vector<8x128xf32>
    %227 = math.tanh %221 : vector<8x128xf32>
    %228 = vector.extract_strided_slice %226 {offsets = [0, 0], sizes = [8, 32], strides = [1, 1]} : vector<8x128xf32> to vector<8x32xf32>
    %229 = vector.extract_strided_slice %226 {offsets = [0, 32], sizes = [8, 32], strides = [1, 1]} : vector<8x128xf32> to vector<8x32xf32>
    %230 = vector.extract_strided_slice %227 {offsets = [0, 64], sizes = [8, 32], strides = [1, 1]} : vector<8x128xf32> to vector<8x32xf32>
    %231 = vector.extract_strided_slice %226 {offsets = [0, 96], sizes = [8, 32], strides = [1, 1]} : vector<8x128xf32> to vector<8x32xf32>
    %232 = arith.mulf %229, %216 : vector<8x32xf32>
    %233 = arith.mulf %228, %230 : vector<8x32xf32>
    %234 = arith.addf %232, %233 : vector<8x32xf32>
    %235 = math.tanh %234 : vector<8x32xf32>
    %236 = arith.mulf %231, %235 : vector<8x32xf32>
    %237 = vector.extract_strided_slice %178 {offsets = [24, 0], sizes = [8, 128], strides = [1, 1]} : vector<64x128xf32> to vector<8x128xf32>
    %cst_64 = arith.constant dense<0.000000e+00> : vector<8x128xf32>
    %238 = tpu.matmul %236, %173, %cst_64 {dimension_numbers = #tpu.dot_dimension_numbers<[1], [0], [0], [1], [0, 0, 1, 1], [], []>} : vector<8x32xf32>, vector<32x128xf32>, vector<8x128xf32> -> vector<8x128xf32>
    %239 = arith.addf %237, %238 : vector<8x128xf32>
    %240 = arith.negf %239 : vector<8x128xf32>
    %241 = math.exp %240 : vector<8x128xf32>
    %cst_65 = arith.constant 1.000000e+00 : f32
    %242 = vector.broadcast %cst_65 : f32 to vector<8x128xf32>
    %243 = arith.addf %242, %241 : vector<8x128xf32>
    %244 = arith.divf %242, %243 : vector<8x128xf32>
    %245 = math.tanh %239 : vector<8x128xf32>
    %246 = vector.extract_strided_slice %244 {offsets = [0, 0], sizes = [8, 32], strides = [1, 1]} : vector<8x128xf32> to vector<8x32xf32>
    %247 = vector.extract_strided_slice %244 {offsets = [0, 32], sizes = [8, 32], strides = [1, 1]} : vector<8x128xf32> to vector<8x32xf32>
    %248 = vector.extract_strided_slice %245 {offsets = [0, 64], sizes = [8, 32], strides = [1, 1]} : vector<8x128xf32> to vector<8x32xf32>
    %249 = vector.extract_strided_slice %244 {offsets = [0, 96], sizes = [8, 32], strides = [1, 1]} : vector<8x128xf32> to vector<8x32xf32>
    %250 = arith.mulf %247, %234 : vector<8x32xf32>
    %251 = arith.mulf %246, %248 : vector<8x32xf32>
    %252 = arith.addf %250, %251 : vector<8x32xf32>
    %253 = math.tanh %252 : vector<8x32xf32>
    %254 = arith.mulf %249, %253 : vector<8x32xf32>
    %255 = vector.extract_strided_slice %178 {offsets = [32, 0], sizes = [8, 128], strides = [1, 1]} : vector<64x128xf32> to vector<8x128xf32>
    %cst_66 = arith.constant dense<0.000000e+00> : vector<8x128xf32>
    %256 = tpu.matmul %254, %173, %cst_66 {dimension_numbers = #tpu.dot_dimension_numbers<[1], [0], [0], [1], [0, 0, 1, 1], [], []>} : vector<8x32xf32>, vector<32x128xf32>, vector<8x128xf32> -> vector<8x128xf32>
    %257 = arith.addf %255, %256 : vector<8x128xf32>
    %258 = arith.negf %257 : vector<8x128xf32>
    %259 = math.exp %258 : vector<8x128xf32>
    %cst_67 = arith.constant 1.000000e+00 : f32
    %260 = vector.broadcast %cst_67 : f32 to vector<8x128xf32>
    %261 = arith.addf %260, %259 : vector<8x128xf32>
    %262 = arith.divf %260, %261 : vector<8x128xf32>
    %263 = math.tanh %257 : vector<8x128xf32>
    %264 = vector.extract_strided_slice %262 {offsets = [0, 0], sizes = [8, 32], strides = [1, 1]} : vector<8x128xf32> to vector<8x32xf32>
    %265 = vector.extract_strided_slice %262 {offsets = [0, 32], sizes = [8, 32], strides = [1, 1]} : vector<8x128xf32> to vector<8x32xf32>
    %266 = vector.extract_strided_slice %263 {offsets = [0, 64], sizes = [8, 32], strides = [1, 1]} : vector<8x128xf32> to vector<8x32xf32>
    %267 = vector.extract_strided_slice %262 {offsets = [0, 96], sizes = [8, 32], strides = [1, 1]} : vector<8x128xf32> to vector<8x32xf32>
    %268 = arith.mulf %265, %252 : vector<8x32xf32>
    %269 = arith.mulf %264, %266 : vector<8x32xf32>
    %270 = arith.addf %268, %269 : vector<8x32xf32>
    %271 = math.tanh %270 : vector<8x32xf32>
    %272 = arith.mulf %267, %271 : vector<8x32xf32>
    %273 = vector.extract_strided_slice %178 {offsets = [40, 0], sizes = [8, 128], strides = [1, 1]} : vector<64x128xf32> to vector<8x128xf32>
    %cst_68 = arith.constant dense<0.000000e+00> : vector<8x128xf32>
    %274 = tpu.matmul %272, %173, %cst_68 {dimension_numbers = #tpu.dot_dimension_numbers<[1], [0], [0], [1], [0, 0, 1, 1], [], []>} : vector<8x32xf32>, vector<32x128xf32>, vector<8x128xf32> -> vector<8x128xf32>
    %275 = arith.addf %273, %274 : vector<8x128xf32>
    %276 = arith.negf %275 : vector<8x128xf32>
    %277 = math.exp %276 : vector<8x128xf32>
    %cst_69 = arith.constant 1.000000e+00 : f32
    %278 = vector.broadcast %cst_69 : f32 to vector<8x128xf32>
    %279 = arith.addf %278, %277 : vector<8x128xf32>
    %280 = arith.divf %278, %279 : vector<8x128xf32>
    %281 = math.tanh %275 : vector<8x128xf32>
    %282 = vector.extract_strided_slice %280 {offsets = [0, 0], sizes = [8, 32], strides = [1, 1]} : vector<8x128xf32> to vector<8x32xf32>
    %283 = vector.extract_strided_slice %280 {offsets = [0, 32], sizes = [8, 32], strides = [1, 1]} : vector<8x128xf32> to vector<8x32xf32>
    %284 = vector.extract_strided_slice %281 {offsets = [0, 64], sizes = [8, 32], strides = [1, 1]} : vector<8x128xf32> to vector<8x32xf32>
    %285 = vector.extract_strided_slice %280 {offsets = [0, 96], sizes = [8, 32], strides = [1, 1]} : vector<8x128xf32> to vector<8x32xf32>
    %286 = arith.mulf %283, %270 : vector<8x32xf32>
    %287 = arith.mulf %282, %284 : vector<8x32xf32>
    %288 = arith.addf %286, %287 : vector<8x32xf32>
    %289 = math.tanh %288 : vector<8x32xf32>
    %290 = arith.mulf %285, %289 : vector<8x32xf32>
    %291 = vector.extract_strided_slice %178 {offsets = [48, 0], sizes = [8, 128], strides = [1, 1]} : vector<64x128xf32> to vector<8x128xf32>
    %cst_70 = arith.constant dense<0.000000e+00> : vector<8x128xf32>
    %292 = tpu.matmul %290, %173, %cst_70 {dimension_numbers = #tpu.dot_dimension_numbers<[1], [0], [0], [1], [0, 0, 1, 1], [], []>} : vector<8x32xf32>, vector<32x128xf32>, vector<8x128xf32> -> vector<8x128xf32>
    %293 = arith.addf %291, %292 : vector<8x128xf32>
    %294 = arith.negf %293 : vector<8x128xf32>
    %295 = math.exp %294 : vector<8x128xf32>
    %cst_71 = arith.constant 1.000000e+00 : f32
    %296 = vector.broadcast %cst_71 : f32 to vector<8x128xf32>
    %297 = arith.addf %296, %295 : vector<8x128xf32>
    %298 = arith.divf %296, %297 : vector<8x128xf32>
    %299 = math.tanh %293 : vector<8x128xf32>
    %300 = vector.extract_strided_slice %298 {offsets = [0, 0], sizes = [8, 32], strides = [1, 1]} : vector<8x128xf32> to vector<8x32xf32>
    %301 = vector.extract_strided_slice %298 {offsets = [0, 32], sizes = [8, 32], strides = [1, 1]} : vector<8x128xf32> to vector<8x32xf32>
    %302 = vector.extract_strided_slice %299 {offsets = [0, 64], sizes = [8, 32], strides = [1, 1]} : vector<8x128xf32> to vector<8x32xf32>
    %303 = vector.extract_strided_slice %298 {offsets = [0, 96], sizes = [8, 32], strides = [1, 1]} : vector<8x128xf32> to vector<8x32xf32>
    %304 = arith.mulf %301, %288 : vector<8x32xf32>
    %305 = arith.mulf %300, %302 : vector<8x32xf32>
    %306 = arith.addf %304, %305 : vector<8x32xf32>
    %307 = math.tanh %306 : vector<8x32xf32>
    %308 = arith.mulf %303, %307 : vector<8x32xf32>
    %309 = vector.extract_strided_slice %178 {offsets = [56, 0], sizes = [8, 128], strides = [1, 1]} : vector<64x128xf32> to vector<8x128xf32>
    %cst_72 = arith.constant dense<0.000000e+00> : vector<8x128xf32>
    %310 = tpu.matmul %308, %173, %cst_72 {dimension_numbers = #tpu.dot_dimension_numbers<[1], [0], [0], [1], [0, 0, 1, 1], [], []>} : vector<8x32xf32>, vector<32x128xf32>, vector<8x128xf32> -> vector<8x128xf32>
    %311 = arith.addf %309, %310 : vector<8x128xf32>
    %312 = arith.negf %311 : vector<8x128xf32>
    %313 = math.exp %312 : vector<8x128xf32>
    %cst_73 = arith.constant 1.000000e+00 : f32
    %314 = vector.broadcast %cst_73 : f32 to vector<8x128xf32>
    %315 = arith.addf %314, %313 : vector<8x128xf32>
    %316 = arith.divf %314, %315 : vector<8x128xf32>
    %317 = math.tanh %311 : vector<8x128xf32>
    %318 = vector.extract_strided_slice %316 {offsets = [0, 0], sizes = [8, 32], strides = [1, 1]} : vector<8x128xf32> to vector<8x32xf32>
    %319 = vector.extract_strided_slice %316 {offsets = [0, 32], sizes = [8, 32], strides = [1, 1]} : vector<8x128xf32> to vector<8x32xf32>
    %320 = vector.extract_strided_slice %317 {offsets = [0, 64], sizes = [8, 32], strides = [1, 1]} : vector<8x128xf32> to vector<8x32xf32>
    %321 = vector.extract_strided_slice %316 {offsets = [0, 96], sizes = [8, 32], strides = [1, 1]} : vector<8x128xf32> to vector<8x32xf32>
    %322 = arith.mulf %319, %306 : vector<8x32xf32>
    %323 = arith.mulf %318, %320 : vector<8x32xf32>
    %324 = arith.addf %322, %323 : vector<8x32xf32>
    %325 = math.tanh %324 : vector<8x32xf32>
    %326 = arith.mulf %321, %325 : vector<8x32xf32>
    %c1_74 = arith.constant 1 : index
    %c0_75 = arith.constant 0 : index
    %c0_76 = arith.constant 0 : index
    %327 = vector.load %arg11[%c1_74, %c0_75, %c0_76] : memref<4x8x32xf32, #tpu.memory_space<vmem>>, vector<1x8x32xf32>
    %328 = vector.shape_cast %327 : vector<1x8x32xf32> to vector<8x32xf32>
    %329 = vector.shape_cast %326 : vector<8x32xf32> to vector<1x8x32xf32>
    tpu.vector_store %arg11[%c1_74, %c0_75, %c0_76], %329 {strides = array<i32>} : memref<4x8x32xf32, #tpu.memory_space<vmem>>, vector<1x8x32xf32>,
    %c1_77 = arith.constant 1 : index
    %c0_78 = arith.constant 0 : index
    %c0_79 = arith.constant 0 : index
    %330 = vector.load %arg12[%c1_77, %c0_78, %c0_79] : memref<4x8x32xf32, #tpu.memory_space<vmem>>, vector<1x8x32xf32>
    %331 = vector.shape_cast %330 : vector<1x8x32xf32> to vector<8x32xf32>
    %332 = vector.shape_cast %324 : vector<8x32xf32> to vector<1x8x32xf32>
    tpu.vector_store %arg12[%c1_77, %c0_78, %c0_79], %332 {strides = array<i32>} : memref<4x8x32xf32, #tpu.memory_space<vmem>>, vector<1x8x32xf32>,
    %333 = tpu.concatenate %200, %218, %236, %254, %272, %290, %308, %326 in 0 : vector<8x32xf32>, vector<8x32xf32>, vector<8x32xf32>, vector<8x32xf32>, vector<8x32xf32>, vector<8x32xf32>, vector<8x32xf32>, vector<8x32xf32> -> vector<64x32xf32>
    %c2 = arith.constant 2 : index
    %c0_80 = arith.constant 0 : index
    %c0_81 = arith.constant 0 : index
    %334 = vector.load %arg3[%c2, %c0_80, %c0_81] : memref<4x32x128xf32, #tpu.memory_space<vmem>>, vector<1x32x128xf32>
    %335 = vector.shape_cast %334 : vector<1x32x128xf32> to vector<32x128xf32>
    %c2_82 = arith.constant 2 : index
    %c0_83 = arith.constant 0 : index
    %c0_84 = arith.constant 0 : index
    %336 = vector.load %arg4[%c2_82, %c0_83, %c0_84] : memref<4x32x128xf32, #tpu.memory_space<vmem>>, vector<1x32x128xf32>
    %337 = vector.shape_cast %336 : vector<1x32x128xf32> to vector<32x128xf32>
    %c2_85 = arith.constant 2 : index
    %c0_86 = arith.constant 0 : index
    %c0_87 = arith.constant 0 : index
    %338 = vector.load %arg5[%c2_85, %c0_86, %c0_87] : memref<4x1x128xf32, #tpu.memory_space<vmem>>, vector<1x1x128xf32>
    %339 = vector.shape_cast %338 : vector<1x1x128xf32> to vector<1x128xf32>
    %cst_88 = arith.constant dense<0.000000e+00> : vector<64x128xf32>
    %340 = tpu.matmul %333, %335, %cst_88 {dimension_numbers = #tpu.dot_dimension_numbers<[1], [0], [0], [1], [0, 0, 1, 1], [], []>} : vector<64x32xf32>, vector<32x128xf32>, vector<64x128xf32> -> vector<64x128xf32>
    %341 = vector.broadcast %339 : vector<1x128xf32> to vector<64x128xf32>
    %342 = arith.addf %340, %341 : vector<64x128xf32>
    %c2_89 = arith.constant 2 : index
    %c0_90 = arith.constant 0 : index
    %c0_91 = arith.constant 0 : index
    %343 = vector.load %arg6[%c2_89, %c0_90, %c0_91] : memref<4x8x32xf32, #tpu.memory_space<vmem>>, vector<1x8x32xf32>
    %344 = vector.shape_cast %343 : vector<1x8x32xf32> to vector<8x32xf32>
    %c2_92 = arith.constant 2 : index
    %c0_93 = arith.constant 0 : index
    %c0_94 = arith.constant 0 : index
    %345 = vector.load %arg7[%c2_92, %c0_93, %c0_94] : memref<4x8x32xf32, #tpu.memory_space<vmem>>, vector<1x8x32xf32>
    %346 = vector.shape_cast %345 : vector<1x8x32xf32> to vector<8x32xf32>
    %347 = vector.extract_strided_slice %342 {offsets = [0, 0], sizes = [8, 128], strides = [1, 1]} : vector<64x128xf32> to vector<8x128xf32>
    %cst_95 = arith.constant dense<0.000000e+00> : vector<8x128xf32>
    %348 = tpu.matmul %344, %337, %cst_95 {dimension_numbers = #tpu.dot_dimension_numbers<[1], [0], [0], [1], [0, 0, 1, 1], [], []>} : vector<8x32xf32>, vector<32x128xf32>, vector<8x128xf32> -> vector<8x128xf32>
    %349 = arith.addf %347, %348 : vector<8x128xf32>
    %350 = arith.negf %349 : vector<8x128xf32>
    %351 = math.exp %350 : vector<8x128xf32>
    %cst_96 = arith.constant 1.000000e+00 : f32
    %352 = vector.broadcast %cst_96 : f32 to vector<8x128xf32>
    %353 = arith.addf %352, %351 : vector<8x128xf32>
    %354 = arith.divf %352, %353 : vector<8x128xf32>
    %355 = math.tanh %349 : vector<8x128xf32>
    %356 = vector.extract_strided_slice %354 {offsets = [0, 0], sizes = [8, 32], strides = [1, 1]} : vector<8x128xf32> to vector<8x32xf32>
    %357 = vector.extract_strided_slice %354 {offsets = [0, 32], sizes = [8, 32], strides = [1, 1]} : vector<8x128xf32> to vector<8x32xf32>
    %358 = vector.extract_strided_slice %355 {offsets = [0, 64], sizes = [8, 32], strides = [1, 1]} : vector<8x128xf32> to vector<8x32xf32>
    %359 = vector.extract_strided_slice %354 {offsets = [0, 96], sizes = [8, 32], strides = [1, 1]} : vector<8x128xf32> to vector<8x32xf32>
    %360 = arith.mulf %357, %346 : vector<8x32xf32>
    %361 = arith.mulf %356, %358 : vector<8x32xf32>
    %362 = arith.addf %360, %361 : vector<8x32xf32>
    %363 = math.tanh %362 : vector<8x32xf32>
    %364 = arith.mulf %359, %363 : vector<8x32xf32>
    %365 = vector.extract_strided_slice %342 {offsets = [8, 0], sizes = [8, 128], strides = [1, 1]} : vector<64x128xf32> to vector<8x128xf32>
    %cst_97 = arith.constant dense<0.000000e+00> : vector<8x128xf32>
    %366 = tpu.matmul %364, %337, %cst_97 {dimension_numbers = #tpu.dot_dimension_numbers<[1], [0], [0], [1], [0, 0, 1, 1], [], []>} : vector<8x32xf32>, vector<32x128xf32>, vector<8x128xf32> -> vector<8x128xf32>
    %367 = arith.addf %365, %366 : vector<8x128xf32>
    %368 = arith.negf %367 : vector<8x128xf32>
    %369 = math.exp %368 : vector<8x128xf32>
    %cst_98 = arith.constant 1.000000e+00 : f32
    %370 = vector.broadcast %cst_98 : f32 to vector<8x128xf32>
    %371 = arith.addf %370, %369 : vector<8x128xf32>
    %372 = arith.divf %370, %371 : vector<8x128xf32>
    %373 = math.tanh %367 : vector<8x128xf32>
    %374 = vector.extract_strided_slice %372 {offsets = [0, 0], sizes = [8, 32], strides = [1, 1]} : vector<8x128xf32> to vector<8x32xf32>
    %375 = vector.extract_strided_slice %372 {offsets = [0, 32], sizes = [8, 32], strides = [1, 1]} : vector<8x128xf32> to vector<8x32xf32>
    %376 = vector.extract_strided_slice %373 {offsets = [0, 64], sizes = [8, 32], strides = [1, 1]} : vector<8x128xf32> to vector<8x32xf32>
    %377 = vector.extract_strided_slice %372 {offsets = [0, 96], sizes = [8, 32], strides = [1, 1]} : vector<8x128xf32> to vector<8x32xf32>
    %378 = arith.mulf %375, %362 : vector<8x32xf32>
    %379 = arith.mulf %374, %376 : vector<8x32xf32>
    %380 = arith.addf %378, %379 : vector<8x32xf32>
    %381 = math.tanh %380 : vector<8x32xf32>
    %382 = arith.mulf %377, %381 : vector<8x32xf32>
    %383 = vector.extract_strided_slice %342 {offsets = [16, 0], sizes = [8, 128], strides = [1, 1]} : vector<64x128xf32> to vector<8x128xf32>
    %cst_99 = arith.constant dense<0.000000e+00> : vector<8x128xf32>
    %384 = tpu.matmul %382, %337, %cst_99 {dimension_numbers = #tpu.dot_dimension_numbers<[1], [0], [0], [1], [0, 0, 1, 1], [], []>} : vector<8x32xf32>, vector<32x128xf32>, vector<8x128xf32> -> vector<8x128xf32>
    %385 = arith.addf %383, %384 : vector<8x128xf32>
    %386 = arith.negf %385 : vector<8x128xf32>
    %387 = math.exp %386 : vector<8x128xf32>
    %cst_100 = arith.constant 1.000000e+00 : f32
    %388 = vector.broadcast %cst_100 : f32 to vector<8x128xf32>
    %389 = arith.addf %388, %387 : vector<8x128xf32>
    %390 = arith.divf %388, %389 : vector<8x128xf32>
    %391 = math.tanh %385 : vector<8x128xf32>
    %392 = vector.extract_strided_slice %390 {offsets = [0, 0], sizes = [8, 32], strides = [1, 1]} : vector<8x128xf32> to vector<8x32xf32>
    %393 = vector.extract_strided_slice %390 {offsets = [0, 32], sizes = [8, 32], strides = [1, 1]} : vector<8x128xf32> to vector<8x32xf32>
    %394 = vector.extract_strided_slice %391 {offsets = [0, 64], sizes = [8, 32], strides = [1, 1]} : vector<8x128xf32> to vector<8x32xf32>
    %395 = vector.extract_strided_slice %390 {offsets = [0, 96], sizes = [8, 32], strides = [1, 1]} : vector<8x128xf32> to vector<8x32xf32>
    %396 = arith.mulf %393, %380 : vector<8x32xf32>
    %397 = arith.mulf %392, %394 : vector<8x32xf32>
    %398 = arith.addf %396, %397 : vector<8x32xf32>
    %399 = math.tanh %398 : vector<8x32xf32>
    %400 = arith.mulf %395, %399 : vector<8x32xf32>
    %401 = vector.extract_strided_slice %342 {offsets = [24, 0], sizes = [8, 128], strides = [1, 1]} : vector<64x128xf32> to vector<8x128xf32>
    %cst_101 = arith.constant dense<0.000000e+00> : vector<8x128xf32>
    %402 = tpu.matmul %400, %337, %cst_101 {dimension_numbers = #tpu.dot_dimension_numbers<[1], [0], [0], [1], [0, 0, 1, 1], [], []>} : vector<8x32xf32>, vector<32x128xf32>, vector<8x128xf32> -> vector<8x128xf32>
    %403 = arith.addf %401, %402 : vector<8x128xf32>
    %404 = arith.negf %403 : vector<8x128xf32>
    %405 = math.exp %404 : vector<8x128xf32>
    %cst_102 = arith.constant 1.000000e+00 : f32
    %406 = vector.broadcast %cst_102 : f32 to vector<8x128xf32>
    %407 = arith.addf %406, %405 : vector<8x128xf32>
    %408 = arith.divf %406, %407 : vector<8x128xf32>
    %409 = math.tanh %403 : vector<8x128xf32>
    %410 = vector.extract_strided_slice %408 {offsets = [0, 0], sizes = [8, 32], strides = [1, 1]} : vector<8x128xf32> to vector<8x32xf32>
    %411 = vector.extract_strided_slice %408 {offsets = [0, 32], sizes = [8, 32], strides = [1, 1]} : vector<8x128xf32> to vector<8x32xf32>
    %412 = vector.extract_strided_slice %409 {offsets = [0, 64], sizes = [8, 32], strides = [1, 1]} : vector<8x128xf32> to vector<8x32xf32>
    %413 = vector.extract_strided_slice %408 {offsets = [0, 96], sizes = [8, 32], strides = [1, 1]} : vector<8x128xf32> to vector<8x32xf32>
    %414 = arith.mulf %411, %398 : vector<8x32xf32>
    %415 = arith.mulf %410, %412 : vector<8x32xf32>
    %416 = arith.addf %414, %415 : vector<8x32xf32>
    %417 = math.tanh %416 : vector<8x32xf32>
    %418 = arith.mulf %413, %417 : vector<8x32xf32>
    %419 = vector.extract_strided_slice %342 {offsets = [32, 0], sizes = [8, 128], strides = [1, 1]} : vector<64x128xf32> to vector<8x128xf32>
    %cst_103 = arith.constant dense<0.000000e+00> : vector<8x128xf32>
    %420 = tpu.matmul %418, %337, %cst_103 {dimension_numbers = #tpu.dot_dimension_numbers<[1], [0], [0], [1], [0, 0, 1, 1], [], []>} : vector<8x32xf32>, vector<32x128xf32>, vector<8x128xf32> -> vector<8x128xf32>
    %421 = arith.addf %419, %420 : vector<8x128xf32>
    %422 = arith.negf %421 : vector<8x128xf32>
    %423 = math.exp %422 : vector<8x128xf32>
    %cst_104 = arith.constant 1.000000e+00 : f32
    %424 = vector.broadcast %cst_104 : f32 to vector<8x128xf32>
    %425 = arith.addf %424, %423 : vector<8x128xf32>
    %426 = arith.divf %424, %425 : vector<8x128xf32>
    %427 = math.tanh %421 : vector<8x128xf32>
    %428 = vector.extract_strided_slice %426 {offsets = [0, 0], sizes = [8, 32], strides = [1, 1]} : vector<8x128xf32> to vector<8x32xf32>
    %429 = vector.extract_strided_slice %426 {offsets = [0, 32], sizes = [8, 32], strides = [1, 1]} : vector<8x128xf32> to vector<8x32xf32>
    %430 = vector.extract_strided_slice %427 {offsets = [0, 64], sizes = [8, 32], strides = [1, 1]} : vector<8x128xf32> to vector<8x32xf32>
    %431 = vector.extract_strided_slice %426 {offsets = [0, 96], sizes = [8, 32], strides = [1, 1]} : vector<8x128xf32> to vector<8x32xf32>
    %432 = arith.mulf %429, %416 : vector<8x32xf32>
    %433 = arith.mulf %428, %430 : vector<8x32xf32>
    %434 = arith.addf %432, %433 : vector<8x32xf32>
    %435 = math.tanh %434 : vector<8x32xf32>
    %436 = arith.mulf %431, %435 : vector<8x32xf32>
    %437 = vector.extract_strided_slice %342 {offsets = [40, 0], sizes = [8, 128], strides = [1, 1]} : vector<64x128xf32> to vector<8x128xf32>
    %cst_105 = arith.constant dense<0.000000e+00> : vector<8x128xf32>
    %438 = tpu.matmul %436, %337, %cst_105 {dimension_numbers = #tpu.dot_dimension_numbers<[1], [0], [0], [1], [0, 0, 1, 1], [], []>} : vector<8x32xf32>, vector<32x128xf32>, vector<8x128xf32> -> vector<8x128xf32>
    %439 = arith.addf %437, %438 : vector<8x128xf32>
    %440 = arith.negf %439 : vector<8x128xf32>
    %441 = math.exp %440 : vector<8x128xf32>
    %cst_106 = arith.constant 1.000000e+00 : f32
    %442 = vector.broadcast %cst_106 : f32 to vector<8x128xf32>
    %443 = arith.addf %442, %441 : vector<8x128xf32>
    %444 = arith.divf %442, %443 : vector<8x128xf32>
    %445 = math.tanh %439 : vector<8x128xf32>
    %446 = vector.extract_strided_slice %444 {offsets = [0, 0], sizes = [8, 32], strides = [1, 1]} : vector<8x128xf32> to vector<8x32xf32>
    %447 = vector.extract_strided_slice %444 {offsets = [0, 32], sizes = [8, 32], strides = [1, 1]} : vector<8x128xf32> to vector<8x32xf32>
    %448 = vector.extract_strided_slice %445 {offsets = [0, 64], sizes = [8, 32], strides = [1, 1]} : vector<8x128xf32> to vector<8x32xf32>
    %449 = vector.extract_strided_slice %444 {offsets = [0, 96], sizes = [8, 32], strides = [1, 1]} : vector<8x128xf32> to vector<8x32xf32>
    %450 = arith.mulf %447, %434 : vector<8x32xf32>
    %451 = arith.mulf %446, %448 : vector<8x32xf32>
    %452 = arith.addf %450, %451 : vector<8x32xf32>
    %453 = math.tanh %452 : vector<8x32xf32>
    %454 = arith.mulf %449, %453 : vector<8x32xf32>
    %455 = vector.extract_strided_slice %342 {offsets = [48, 0], sizes = [8, 128], strides = [1, 1]} : vector<64x128xf32> to vector<8x128xf32>
    %cst_107 = arith.constant dense<0.000000e+00> : vector<8x128xf32>
    %456 = tpu.matmul %454, %337, %cst_107 {dimension_numbers = #tpu.dot_dimension_numbers<[1], [0], [0], [1], [0, 0, 1, 1], [], []>} : vector<8x32xf32>, vector<32x128xf32>, vector<8x128xf32> -> vector<8x128xf32>
    %457 = arith.addf %455, %456 : vector<8x128xf32>
    %458 = arith.negf %457 : vector<8x128xf32>
    %459 = math.exp %458 : vector<8x128xf32>
    %cst_108 = arith.constant 1.000000e+00 : f32
    %460 = vector.broadcast %cst_108 : f32 to vector<8x128xf32>
    %461 = arith.addf %460, %459 : vector<8x128xf32>
    %462 = arith.divf %460, %461 : vector<8x128xf32>
    %463 = math.tanh %457 : vector<8x128xf32>
    %464 = vector.extract_strided_slice %462 {offsets = [0, 0], sizes = [8, 32], strides = [1, 1]} : vector<8x128xf32> to vector<8x32xf32>
    %465 = vector.extract_strided_slice %462 {offsets = [0, 32], sizes = [8, 32], strides = [1, 1]} : vector<8x128xf32> to vector<8x32xf32>
    %466 = vector.extract_strided_slice %463 {offsets = [0, 64], sizes = [8, 32], strides = [1, 1]} : vector<8x128xf32> to vector<8x32xf32>
    %467 = vector.extract_strided_slice %462 {offsets = [0, 96], sizes = [8, 32], strides = [1, 1]} : vector<8x128xf32> to vector<8x32xf32>
    %468 = arith.mulf %465, %452 : vector<8x32xf32>
    %469 = arith.mulf %464, %466 : vector<8x32xf32>
    %470 = arith.addf %468, %469 : vector<8x32xf32>
    %471 = math.tanh %470 : vector<8x32xf32>
    %472 = arith.mulf %467, %471 : vector<8x32xf32>
    %473 = vector.extract_strided_slice %342 {offsets = [56, 0], sizes = [8, 128], strides = [1, 1]} : vector<64x128xf32> to vector<8x128xf32>
    %cst_109 = arith.constant dense<0.000000e+00> : vector<8x128xf32>
    %474 = tpu.matmul %472, %337, %cst_109 {dimension_numbers = #tpu.dot_dimension_numbers<[1], [0], [0], [1], [0, 0, 1, 1], [], []>} : vector<8x32xf32>, vector<32x128xf32>, vector<8x128xf32> -> vector<8x128xf32>
    %475 = arith.addf %473, %474 : vector<8x128xf32>
    %476 = arith.negf %475 : vector<8x128xf32>
    %477 = math.exp %476 : vector<8x128xf32>
    %cst_110 = arith.constant 1.000000e+00 : f32
    %478 = vector.broadcast %cst_110 : f32 to vector<8x128xf32>
    %479 = arith.addf %478, %477 : vector<8x128xf32>
    %480 = arith.divf %478, %479 : vector<8x128xf32>
    %481 = math.tanh %475 : vector<8x128xf32>
    %482 = vector.extract_strided_slice %480 {offsets = [0, 0], sizes = [8, 32], strides = [1, 1]} : vector<8x128xf32> to vector<8x32xf32>
    %483 = vector.extract_strided_slice %480 {offsets = [0, 32], sizes = [8, 32], strides = [1, 1]} : vector<8x128xf32> to vector<8x32xf32>
    %484 = vector.extract_strided_slice %481 {offsets = [0, 64], sizes = [8, 32], strides = [1, 1]} : vector<8x128xf32> to vector<8x32xf32>
    %485 = vector.extract_strided_slice %480 {offsets = [0, 96], sizes = [8, 32], strides = [1, 1]} : vector<8x128xf32> to vector<8x32xf32>
    %486 = arith.mulf %483, %470 : vector<8x32xf32>
    %487 = arith.mulf %482, %484 : vector<8x32xf32>
    %488 = arith.addf %486, %487 : vector<8x32xf32>
    %489 = math.tanh %488 : vector<8x32xf32>
    %490 = arith.mulf %485, %489 : vector<8x32xf32>
    %c2_111 = arith.constant 2 : index
    %c0_112 = arith.constant 0 : index
    %c0_113 = arith.constant 0 : index
    %491 = vector.load %arg11[%c2_111, %c0_112, %c0_113] : memref<4x8x32xf32, #tpu.memory_space<vmem>>, vector<1x8x32xf32>
    %492 = vector.shape_cast %491 : vector<1x8x32xf32> to vector<8x32xf32>
    %493 = vector.shape_cast %490 : vector<8x32xf32> to vector<1x8x32xf32>
    tpu.vector_store %arg11[%c2_111, %c0_112, %c0_113], %493 {strides = array<i32>} : memref<4x8x32xf32, #tpu.memory_space<vmem>>, vector<1x8x32xf32>,
    %c2_114 = arith.constant 2 : index
    %c0_115 = arith.constant 0 : index
    %c0_116 = arith.constant 0 : index
    %494 = vector.load %arg12[%c2_114, %c0_115, %c0_116] : memref<4x8x32xf32, #tpu.memory_space<vmem>>, vector<1x8x32xf32>
    %495 = vector.shape_cast %494 : vector<1x8x32xf32> to vector<8x32xf32>
    %496 = vector.shape_cast %488 : vector<8x32xf32> to vector<1x8x32xf32>
    tpu.vector_store %arg12[%c2_114, %c0_115, %c0_116], %496 {strides = array<i32>} : memref<4x8x32xf32, #tpu.memory_space<vmem>>, vector<1x8x32xf32>,
    %497 = tpu.concatenate %364, %382, %400, %418, %436, %454, %472, %490 in 0 : vector<8x32xf32>, vector<8x32xf32>, vector<8x32xf32>, vector<8x32xf32>, vector<8x32xf32>, vector<8x32xf32>, vector<8x32xf32>, vector<8x32xf32> -> vector<64x32xf32>
    %c3 = arith.constant 3 : index
    %c0_117 = arith.constant 0 : index
    %c0_118 = arith.constant 0 : index
    %498 = vector.load %arg3[%c3, %c0_117, %c0_118] : memref<4x32x128xf32, #tpu.memory_space<vmem>>, vector<1x32x128xf32>
    %499 = vector.shape_cast %498 : vector<1x32x128xf32> to vector<32x128xf32>
    %c3_119 = arith.constant 3 : index
    %c0_120 = arith.constant 0 : index
    %c0_121 = arith.constant 0 : index
    %500 = vector.load %arg4[%c3_119, %c0_120, %c0_121] : memref<4x32x128xf32, #tpu.memory_space<vmem>>, vector<1x32x128xf32>
    %501 = vector.shape_cast %500 : vector<1x32x128xf32> to vector<32x128xf32>
    %c3_122 = arith.constant 3 : index
    %c0_123 = arith.constant 0 : index
    %c0_124 = arith.constant 0 : index
    %502 = vector.load %arg5[%c3_122, %c0_123, %c0_124] : memref<4x1x128xf32, #tpu.memory_space<vmem>>, vector<1x1x128xf32>
    %503 = vector.shape_cast %502 : vector<1x1x128xf32> to vector<1x128xf32>
    %cst_125 = arith.constant dense<0.000000e+00> : vector<64x128xf32>
    %504 = tpu.matmul %497, %499, %cst_125 {dimension_numbers = #tpu.dot_dimension_numbers<[1], [0], [0], [1], [0, 0, 1, 1], [], []>} : vector<64x32xf32>, vector<32x128xf32>, vector<64x128xf32> -> vector<64x128xf32>
    %505 = vector.broadcast %503 : vector<1x128xf32> to vector<64x128xf32>
    %506 = arith.addf %504, %505 : vector<64x128xf32>
    %c3_126 = arith.constant 3 : index
    %c0_127 = arith.constant 0 : index
    %c0_128 = arith.constant 0 : index
    %507 = vector.load %arg6[%c3_126, %c0_127, %c0_128] : memref<4x8x32xf32, #tpu.memory_space<vmem>>, vector<1x8x32xf32>
    %508 = vector.shape_cast %507 : vector<1x8x32xf32> to vector<8x32xf32>
    %c3_129 = arith.constant 3 : index
    %c0_130 = arith.constant 0 : index
    %c0_131 = arith.constant 0 : index
    %509 = vector.load %arg7[%c3_129, %c0_130, %c0_131] : memref<4x8x32xf32, #tpu.memory_space<vmem>>, vector<1x8x32xf32>
    %510 = vector.shape_cast %509 : vector<1x8x32xf32> to vector<8x32xf32>
    %511 = vector.extract_strided_slice %506 {offsets = [0, 0], sizes = [8, 128], strides = [1, 1]} : vector<64x128xf32> to vector<8x128xf32>
    %cst_132 = arith.constant dense<0.000000e+00> : vector<8x128xf32>
    %512 = tpu.matmul %508, %501, %cst_132 {dimension_numbers = #tpu.dot_dimension_numbers<[1], [0], [0], [1], [0, 0, 1, 1], [], []>} : vector<8x32xf32>, vector<32x128xf32>, vector<8x128xf32> -> vector<8x128xf32>
    %513 = arith.addf %511, %512 : vector<8x128xf32>
    %514 = arith.negf %513 : vector<8x128xf32>
    %515 = math.exp %514 : vector<8x128xf32>
    %cst_133 = arith.constant 1.000000e+00 : f32
    %516 = vector.broadcast %cst_133 : f32 to vector<8x128xf32>
    %517 = arith.addf %516, %515 : vector<8x128xf32>
    %518 = arith.divf %516, %517 : vector<8x128xf32>
    %519 = math.tanh %513 : vector<8x128xf32>
    %520 = vector.extract_strided_slice %518 {offsets = [0, 0], sizes = [8, 32], strides = [1, 1]} : vector<8x128xf32> to vector<8x32xf32>
    %521 = vector.extract_strided_slice %518 {offsets = [0, 32], sizes = [8, 32], strides = [1, 1]} : vector<8x128xf32> to vector<8x32xf32>
    %522 = vector.extract_strided_slice %519 {offsets = [0, 64], sizes = [8, 32], strides = [1, 1]} : vector<8x128xf32> to vector<8x32xf32>
    %523 = vector.extract_strided_slice %518 {offsets = [0, 96], sizes = [8, 32], strides = [1, 1]} : vector<8x128xf32> to vector<8x32xf32>
    %524 = arith.mulf %521, %510 : vector<8x32xf32>
    %525 = arith.mulf %520, %522 : vector<8x32xf32>
    %526 = arith.addf %524, %525 : vector<8x32xf32>
    %527 = math.tanh %526 : vector<8x32xf32>
    %528 = arith.mulf %523, %527 : vector<8x32xf32>
    %529 = vector.extract_strided_slice %506 {offsets = [8, 0], sizes = [8, 128], strides = [1, 1]} : vector<64x128xf32> to vector<8x128xf32>
    %cst_134 = arith.constant dense<0.000000e+00> : vector<8x128xf32>
    %530 = tpu.matmul %528, %501, %cst_134 {dimension_numbers = #tpu.dot_dimension_numbers<[1], [0], [0], [1], [0, 0, 1, 1], [], []>} : vector<8x32xf32>, vector<32x128xf32>, vector<8x128xf32> -> vector<8x128xf32>
    %531 = arith.addf %529, %530 : vector<8x128xf32>
    %532 = arith.negf %531 : vector<8x128xf32>
    %533 = math.exp %532 : vector<8x128xf32>
    %cst_135 = arith.constant 1.000000e+00 : f32
    %534 = vector.broadcast %cst_135 : f32 to vector<8x128xf32>
    %535 = arith.addf %534, %533 : vector<8x128xf32>
    %536 = arith.divf %534, %535 : vector<8x128xf32>
    %537 = math.tanh %531 : vector<8x128xf32>
    %538 = vector.extract_strided_slice %536 {offsets = [0, 0], sizes = [8, 32], strides = [1, 1]} : vector<8x128xf32> to vector<8x32xf32>
    %539 = vector.extract_strided_slice %536 {offsets = [0, 32], sizes = [8, 32], strides = [1, 1]} : vector<8x128xf32> to vector<8x32xf32>
    %540 = vector.extract_strided_slice %537 {offsets = [0, 64], sizes = [8, 32], strides = [1, 1]} : vector<8x128xf32> to vector<8x32xf32>
    %541 = vector.extract_strided_slice %536 {offsets = [0, 96], sizes = [8, 32], strides = [1, 1]} : vector<8x128xf32> to vector<8x32xf32>
    %542 = arith.mulf %539, %526 : vector<8x32xf32>
    %543 = arith.mulf %538, %540 : vector<8x32xf32>
    %544 = arith.addf %542, %543 : vector<8x32xf32>
    %545 = math.tanh %544 : vector<8x32xf32>
    %546 = arith.mulf %541, %545 : vector<8x32xf32>
    %547 = vector.extract_strided_slice %506 {offsets = [16, 0], sizes = [8, 128], strides = [1, 1]} : vector<64x128xf32> to vector<8x128xf32>
    %cst_136 = arith.constant dense<0.000000e+00> : vector<8x128xf32>
    %548 = tpu.matmul %546, %501, %cst_136 {dimension_numbers = #tpu.dot_dimension_numbers<[1], [0], [0], [1], [0, 0, 1, 1], [], []>} : vector<8x32xf32>, vector<32x128xf32>, vector<8x128xf32> -> vector<8x128xf32>
    %549 = arith.addf %547, %548 : vector<8x128xf32>
    %550 = arith.negf %549 : vector<8x128xf32>
    %551 = math.exp %550 : vector<8x128xf32>
    %cst_137 = arith.constant 1.000000e+00 : f32
    %552 = vector.broadcast %cst_137 : f32 to vector<8x128xf32>
    %553 = arith.addf %552, %551 : vector<8x128xf32>
    %554 = arith.divf %552, %553 : vector<8x128xf32>
    %555 = math.tanh %549 : vector<8x128xf32>
    %556 = vector.extract_strided_slice %554 {offsets = [0, 0], sizes = [8, 32], strides = [1, 1]} : vector<8x128xf32> to vector<8x32xf32>
    %557 = vector.extract_strided_slice %554 {offsets = [0, 32], sizes = [8, 32], strides = [1, 1]} : vector<8x128xf32> to vector<8x32xf32>
    %558 = vector.extract_strided_slice %555 {offsets = [0, 64], sizes = [8, 32], strides = [1, 1]} : vector<8x128xf32> to vector<8x32xf32>
    %559 = vector.extract_strided_slice %554 {offsets = [0, 96], sizes = [8, 32], strides = [1, 1]} : vector<8x128xf32> to vector<8x32xf32>
    %560 = arith.mulf %557, %544 : vector<8x32xf32>
    %561 = arith.mulf %556, %558 : vector<8x32xf32>
    %562 = arith.addf %560, %561 : vector<8x32xf32>
    %563 = math.tanh %562 : vector<8x32xf32>
    %564 = arith.mulf %559, %563 : vector<8x32xf32>
    %565 = vector.extract_strided_slice %506 {offsets = [24, 0], sizes = [8, 128], strides = [1, 1]} : vector<64x128xf32> to vector<8x128xf32>
    %cst_138 = arith.constant dense<0.000000e+00> : vector<8x128xf32>
    %566 = tpu.matmul %564, %501, %cst_138 {dimension_numbers = #tpu.dot_dimension_numbers<[1], [0], [0], [1], [0, 0, 1, 1], [], []>} : vector<8x32xf32>, vector<32x128xf32>, vector<8x128xf32> -> vector<8x128xf32>
    %567 = arith.addf %565, %566 : vector<8x128xf32>
    %568 = arith.negf %567 : vector<8x128xf32>
    %569 = math.exp %568 : vector<8x128xf32>
    %cst_139 = arith.constant 1.000000e+00 : f32
    %570 = vector.broadcast %cst_139 : f32 to vector<8x128xf32>
    %571 = arith.addf %570, %569 : vector<8x128xf32>
    %572 = arith.divf %570, %571 : vector<8x128xf32>
    %573 = math.tanh %567 : vector<8x128xf32>
    %574 = vector.extract_strided_slice %572 {offsets = [0, 0], sizes = [8, 32], strides = [1, 1]} : vector<8x128xf32> to vector<8x32xf32>
    %575 = vector.extract_strided_slice %572 {offsets = [0, 32], sizes = [8, 32], strides = [1, 1]} : vector<8x128xf32> to vector<8x32xf32>
    %576 = vector.extract_strided_slice %573 {offsets = [0, 64], sizes = [8, 32], strides = [1, 1]} : vector<8x128xf32> to vector<8x32xf32>
    %577 = vector.extract_strided_slice %572 {offsets = [0, 96], sizes = [8, 32], strides = [1, 1]} : vector<8x128xf32> to vector<8x32xf32>
    %578 = arith.mulf %575, %562 : vector<8x32xf32>
    %579 = arith.mulf %574, %576 : vector<8x32xf32>
    %580 = arith.addf %578, %579 : vector<8x32xf32>
    %581 = math.tanh %580 : vector<8x32xf32>
    %582 = arith.mulf %577, %581 : vector<8x32xf32>
    %583 = vector.extract_strided_slice %506 {offsets = [32, 0], sizes = [8, 128], strides = [1, 1]} : vector<64x128xf32> to vector<8x128xf32>
    %cst_140 = arith.constant dense<0.000000e+00> : vector<8x128xf32>
    %584 = tpu.matmul %582, %501, %cst_140 {dimension_numbers = #tpu.dot_dimension_numbers<[1], [0], [0], [1], [0, 0, 1, 1], [], []>} : vector<8x32xf32>, vector<32x128xf32>, vector<8x128xf32> -> vector<8x128xf32>
    %585 = arith.addf %583, %584 : vector<8x128xf32>
    %586 = arith.negf %585 : vector<8x128xf32>
    %587 = math.exp %586 : vector<8x128xf32>
    %cst_141 = arith.constant 1.000000e+00 : f32
    %588 = vector.broadcast %cst_141 : f32 to vector<8x128xf32>
    %589 = arith.addf %588, %587 : vector<8x128xf32>
    %590 = arith.divf %588, %589 : vector<8x128xf32>
    %591 = math.tanh %585 : vector<8x128xf32>
    %592 = vector.extract_strided_slice %590 {offsets = [0, 0], sizes = [8, 32], strides = [1, 1]} : vector<8x128xf32> to vector<8x32xf32>
    %593 = vector.extract_strided_slice %590 {offsets = [0, 32], sizes = [8, 32], strides = [1, 1]} : vector<8x128xf32> to vector<8x32xf32>
    %594 = vector.extract_strided_slice %591 {offsets = [0, 64], sizes = [8, 32], strides = [1, 1]} : vector<8x128xf32> to vector<8x32xf32>
    %595 = vector.extract_strided_slice %590 {offsets = [0, 96], sizes = [8, 32], strides = [1, 1]} : vector<8x128xf32> to vector<8x32xf32>
    %596 = arith.mulf %593, %580 : vector<8x32xf32>
    %597 = arith.mulf %592, %594 : vector<8x32xf32>
    %598 = arith.addf %596, %597 : vector<8x32xf32>
    %599 = math.tanh %598 : vector<8x32xf32>
    %600 = arith.mulf %595, %599 : vector<8x32xf32>
    %601 = vector.extract_strided_slice %506 {offsets = [40, 0], sizes = [8, 128], strides = [1, 1]} : vector<64x128xf32> to vector<8x128xf32>
    %cst_142 = arith.constant dense<0.000000e+00> : vector<8x128xf32>
    %602 = tpu.matmul %600, %501, %cst_142 {dimension_numbers = #tpu.dot_dimension_numbers<[1], [0], [0], [1], [0, 0, 1, 1], [], []>} : vector<8x32xf32>, vector<32x128xf32>, vector<8x128xf32> -> vector<8x128xf32>
    %603 = arith.addf %601, %602 : vector<8x128xf32>
    %604 = arith.negf %603 : vector<8x128xf32>
    %605 = math.exp %604 : vector<8x128xf32>
    %cst_143 = arith.constant 1.000000e+00 : f32
    %606 = vector.broadcast %cst_143 : f32 to vector<8x128xf32>
    %607 = arith.addf %606, %605 : vector<8x128xf32>
    %608 = arith.divf %606, %607 : vector<8x128xf32>
    %609 = math.tanh %603 : vector<8x128xf32>
    %610 = vector.extract_strided_slice %608 {offsets = [0, 0], sizes = [8, 32], strides = [1, 1]} : vector<8x128xf32> to vector<8x32xf32>
    %611 = vector.extract_strided_slice %608 {offsets = [0, 32], sizes = [8, 32], strides = [1, 1]} : vector<8x128xf32> to vector<8x32xf32>
    %612 = vector.extract_strided_slice %609 {offsets = [0, 64], sizes = [8, 32], strides = [1, 1]} : vector<8x128xf32> to vector<8x32xf32>
    %613 = vector.extract_strided_slice %608 {offsets = [0, 96], sizes = [8, 32], strides = [1, 1]} : vector<8x128xf32> to vector<8x32xf32>
    %614 = arith.mulf %611, %598 : vector<8x32xf32>
    %615 = arith.mulf %610, %612 : vector<8x32xf32>
    %616 = arith.addf %614, %615 : vector<8x32xf32>
    %617 = math.tanh %616 : vector<8x32xf32>
    %618 = arith.mulf %613, %617 : vector<8x32xf32>
    %619 = vector.extract_strided_slice %506 {offsets = [48, 0], sizes = [8, 128], strides = [1, 1]} : vector<64x128xf32> to vector<8x128xf32>
    %cst_144 = arith.constant dense<0.000000e+00> : vector<8x128xf32>
    %620 = tpu.matmul %618, %501, %cst_144 {dimension_numbers = #tpu.dot_dimension_numbers<[1], [0], [0], [1], [0, 0, 1, 1], [], []>} : vector<8x32xf32>, vector<32x128xf32>, vector<8x128xf32> -> vector<8x128xf32>
    %621 = arith.addf %619, %620 : vector<8x128xf32>
    %622 = arith.negf %621 : vector<8x128xf32>
    %623 = math.exp %622 : vector<8x128xf32>
    %cst_145 = arith.constant 1.000000e+00 : f32
    %624 = vector.broadcast %cst_145 : f32 to vector<8x128xf32>
    %625 = arith.addf %624, %623 : vector<8x128xf32>
    %626 = arith.divf %624, %625 : vector<8x128xf32>
    %627 = math.tanh %621 : vector<8x128xf32>
    %628 = vector.extract_strided_slice %626 {offsets = [0, 0], sizes = [8, 32], strides = [1, 1]} : vector<8x128xf32> to vector<8x32xf32>
    %629 = vector.extract_strided_slice %626 {offsets = [0, 32], sizes = [8, 32], strides = [1, 1]} : vector<8x128xf32> to vector<8x32xf32>
    %630 = vector.extract_strided_slice %627 {offsets = [0, 64], sizes = [8, 32], strides = [1, 1]} : vector<8x128xf32> to vector<8x32xf32>
    %631 = vector.extract_strided_slice %626 {offsets = [0, 96], sizes = [8, 32], strides = [1, 1]} : vector<8x128xf32> to vector<8x32xf32>
    %632 = arith.mulf %629, %616 : vector<8x32xf32>
    %633 = arith.mulf %628, %630 : vector<8x32xf32>
    %634 = arith.addf %632, %633 : vector<8x32xf32>
    %635 = math.tanh %634 : vector<8x32xf32>
    %636 = arith.mulf %631, %635 : vector<8x32xf32>
    %637 = vector.extract_strided_slice %506 {offsets = [56, 0], sizes = [8, 128], strides = [1, 1]} : vector<64x128xf32> to vector<8x128xf32>
    %cst_146 = arith.constant dense<0.000000e+00> : vector<8x128xf32>
    %638 = tpu.matmul %636, %501, %cst_146 {dimension_numbers = #tpu.dot_dimension_numbers<[1], [0], [0], [1], [0, 0, 1, 1], [], []>} : vector<8x32xf32>, vector<32x128xf32>, vector<8x128xf32> -> vector<8x128xf32>
    %639 = arith.addf %637, %638 : vector<8x128xf32>
    %640 = arith.negf %639 : vector<8x128xf32>
    %641 = math.exp %640 : vector<8x128xf32>
    %cst_147 = arith.constant 1.000000e+00 : f32
    %642 = vector.broadcast %cst_147 : f32 to vector<8x128xf32>
    %643 = arith.addf %642, %641 : vector<8x128xf32>
    %644 = arith.divf %642, %643 : vector<8x128xf32>
    %645 = math.tanh %639 : vector<8x128xf32>
    %646 = vector.extract_strided_slice %644 {offsets = [0, 0], sizes = [8, 32], strides = [1, 1]} : vector<8x128xf32> to vector<8x32xf32>
    %647 = vector.extract_strided_slice %644 {offsets = [0, 32], sizes = [8, 32], strides = [1, 1]} : vector<8x128xf32> to vector<8x32xf32>
    %648 = vector.extract_strided_slice %645 {offsets = [0, 64], sizes = [8, 32], strides = [1, 1]} : vector<8x128xf32> to vector<8x32xf32>
    %649 = vector.extract_strided_slice %644 {offsets = [0, 96], sizes = [8, 32], strides = [1, 1]} : vector<8x128xf32> to vector<8x32xf32>
    %650 = arith.mulf %647, %634 : vector<8x32xf32>
    %651 = arith.mulf %646, %648 : vector<8x32xf32>
    %652 = arith.addf %650, %651 : vector<8x32xf32>
    %653 = math.tanh %652 : vector<8x32xf32>
    %654 = arith.mulf %649, %653 : vector<8x32xf32>
    %c3_148 = arith.constant 3 : index
    %c0_149 = arith.constant 0 : index
    %c0_150 = arith.constant 0 : index
    %655 = vector.load %arg11[%c3_148, %c0_149, %c0_150] : memref<4x8x32xf32, #tpu.memory_space<vmem>>, vector<1x8x32xf32>
    %656 = vector.shape_cast %655 : vector<1x8x32xf32> to vector<8x32xf32>
    %657 = vector.shape_cast %654 : vector<8x32xf32> to vector<1x8x32xf32>
    tpu.vector_store %arg11[%c3_148, %c0_149, %c0_150], %657 {strides = array<i32>} : memref<4x8x32xf32, #tpu.memory_space<vmem>>, vector<1x8x32xf32>,
    %c3_151 = arith.constant 3 : index
    %c0_152 = arith.constant 0 : index
    %c0_153 = arith.constant 0 : index
    %658 = vector.load %arg12[%c3_151, %c0_152, %c0_153] : memref<4x8x32xf32, #tpu.memory_space<vmem>>, vector<1x8x32xf32>
    %659 = vector.shape_cast %658 : vector<1x8x32xf32> to vector<8x32xf32>
    %660 = vector.shape_cast %652 : vector<8x32xf32> to vector<1x8x32xf32>
    tpu.vector_store %arg12[%c3_151, %c0_152, %c0_153], %660 {strides = array<i32>} : memref<4x8x32xf32, #tpu.memory_space<vmem>>, vector<1x8x32xf32>,
    %661 = tpu.concatenate %528, %546, %564, %582, %600, %618, %636, %654 in 0 : vector<8x32xf32>, vector<8x32xf32>, vector<8x32xf32>, vector<8x32xf32>, vector<8x32xf32>, vector<8x32xf32>, vector<8x32xf32>, vector<8x32xf32> -> vector<64x32xf32>
    %c0_154 = arith.constant 0 : index
    %c0_155 = arith.constant 0 : index
    %662 = vector.load %arg8[%c0_154, %c0_155] : memref<32x16xf32, #tpu.memory_space<vmem>>, vector<32x16xf32>
    %cst_156 = arith.constant dense<0.000000e+00> : vector<64x16xf32>
    %663 = tpu.matmul %661, %662, %cst_156 {dimension_numbers = #tpu.dot_dimension_numbers<[1], [0], [0], [1], [0, 0, 1, 1], [], []>} : vector<64x32xf32>, vector<32x16xf32>, vector<64x16xf32> -> vector<64x16xf32>
    %c0_157 = arith.constant 0 : index
    %c0_158 = arith.constant 0 : index
    %664 = vector.load %arg9[%c0_157, %c0_158] : memref<1x16xf32, #tpu.memory_space<vmem>>, vector<1x16xf32>
    %665 = vector.broadcast %664 : vector<1x16xf32> to vector<64x16xf32>
    %666 = arith.addf %663, %665 : vector<64x16xf32>
    %c0_159 = arith.constant 0 : index
    %c0_160 = arith.constant 0 : index
    %667 = vector.load %arg10[%c0_159, %c0_160] : memref<64x16xf32, #tpu.memory_space<vmem>>, vector<64x16xf32>
    tpu.vector_store %arg10[%c0_159, %c0_160], %666 {strides = array<i32>} : memref<64x16xf32, #tpu.memory_space<vmem>>, vector<64x16xf32>,
    return
  }
}

</mosaic_0001>

<llo_original>
// kernel: rnn_forward.1
$region0: #{rnn_forward.1}
  #allocation0 [shape = 'u32[]', space=smem, size = 0x4, offset = 0x4, fixed_abs, tag = 'smem constant byte address 0x4 - core index']
  #allocation1 [shape = 'u32[144,128]{1,0:T(1,128)}', space=vmem, size = 0x12000, scoped, tag = 'internal scratch']
  %s0 = inlined_call_operand.vmem [shape: f32[64,16], index: 0, kind: input, shape index: {}]
  %s1 = inlined_call_operand.vmem [shape: f32[16,32], index: 1, kind: input, shape index: {}]
  %s2 = inlined_call_operand.vmem [shape: f32[1,32], index: 2, kind: input, shape index: {}]
  %s3 = inlined_call_operand.vmem [shape: f32[4,32,128], index: 3, kind: input, shape index: {}]
  %s4 = inlined_call_operand.vmem [shape: f32[4,32,128], index: 4, kind: input, shape index: {}]
  %s5 = inlined_call_operand.vmem [shape: f32[4,1,128], index: 5, kind: input, shape index: {}]
  %s6 = inlined_call_operand.vmem [shape: f32[4,8,32], index: 6, kind: input, shape index: {}, may-alias: {6,7}]
  %s7 = inlined_call_operand.vmem [shape: f32[4,8,32], index: 7, kind: input, shape index: {}, may-alias: {6,7}]
  %s8 = inlined_call_operand.vmem [shape: f32[32,16], index: 8, kind: input, shape index: {}]
  %s9 = inlined_call_operand.vmem [shape: f32[1,16], index: 9, kind: input, shape index: {}]
  %s10 = inlined_call_operand.vmem [shape: f32[64,16], index: 10, kind: output, shape index: {0}]
  %s11 = inlined_call_operand.vmem [shape: f32[4,8,32], index: 11, kind: output, shape index: {1}]
  %s12 = inlined_call_operand.vmem [shape: f32[4,8,32], index: 12, kind: output, shape index: {2}]
  %13 = xla_tuple %s10, %s11, %s12
  %s14 = sld [smem:[#allocation0]]
  $region66: #{rnn_forward.1} parent=0
    _
  %s16 = ssub.s32 1, %s14
  %s17 = scalar_select 0, %s16, %s14
  // Predicated region
  $region2: #{rnn_forward.1} parent=0 // pred_check
    _
  $region3: #{rnn_forward.1} parent=0 // pred_check_branch
    %19 = sbr.rel (0) target = $region5
  $region4: #{rnn_forward.1} parent=0 // pred_region
    _
  $region5: #{rnn_forward.1} parent=0 // pred_fallthru
    _
  // Predicated region
  $region6: #{rnn_forward.1} parent=0 // pred_check
    _
  $region7: #{rnn_forward.1} parent=0 // pred_check_branch
    %21 = sbr.rel (0) target = $region9
  $region8: #{rnn_forward.1} parent=0 // pred_region
    _
  $region9: #{rnn_forward.1} parent=0 // pred_fallthru
    _
  // Predicated region
  $region10: #{rnn_forward.1} parent=0 // pred_check
    _
  $region11: #{rnn_forward.1} parent=0 // pred_check_branch
    %23 = sbr.rel (0) target = $region13
  $region12: #{rnn_forward.1} parent=0 // pred_region
    _
  $region13: #{rnn_forward.1} parent=0 // pred_fallthru
    _
  // Predicated region
  $region14: #{rnn_forward.1} parent=0 // pred_check
    _
  $region15: #{rnn_forward.1} parent=0 // pred_check_branch
    %25 = sbr.rel (0) target = $region17
  $region16: #{rnn_forward.1} parent=0 // pred_region
    _
  $region17: #{rnn_forward.1} parent=0 // pred_fallthru
    _
  // Predicated region
  $region18: #{rnn_forward.1} parent=0 // pred_check
    _
  $region19: #{rnn_forward.1} parent=0 // pred_check_branch
    %27 = sbr.rel (0) target = $region21
  $region20: #{rnn_forward.1} parent=0 // pred_region
    _
  $region21: #{rnn_forward.1} parent=0 // pred_fallthru
    _
  // Predicated region
  $region22: #{rnn_forward.1} parent=0 // pred_check
    _
  $region23: #{rnn_forward.1} parent=0 // pred_check_branch
    %29 = sbr.rel (0) target = $region25
  $region24: #{rnn_forward.1} parent=0 // pred_region
    _
  $region25: #{rnn_forward.1} parent=0 // pred_fallthru
    _
  // Predicated region
  $region26: #{rnn_forward.1} parent=0 // pred_check
    _
  $region27: #{rnn_forward.1} parent=0 // pred_check_branch
    %31 = sbr.rel (0) target = $region29
  $region28: #{rnn_forward.1} parent=0 // pred_region
    _
  $region29: #{rnn_forward.1} parent=0 // pred_fallthru
    _
  // Predicated region
  $region30: #{rnn_forward.1} parent=0 // pred_check
    _
  $region31: #{rnn_forward.1} parent=0 // pred_check_branch
    %33 = sbr.rel (0) target = $region33
  $region32: #{rnn_forward.1} parent=0 // pred_region
    _
  $region33: #{rnn_forward.1} parent=0 // pred_fallthru
    _
  // Predicated region
  $region34: #{rnn_forward.1} parent=0 // pred_check
    _
  $region35: #{rnn_forward.1} parent=0 // pred_check_branch
    %35 = sbr.rel (0) target = $region37
  $region36: #{rnn_forward.1} parent=0 // pred_region
    _
  $region37: #{rnn_forward.1} parent=0 // pred_fallthru
    _
  // Predicated region
  $region38: #{rnn_forward.1} parent=0 // pred_check
    _
  $region39: #{rnn_forward.1} parent=0 // pred_check_branch
    %37 = sbr.rel (0) target = $region41
  $region40: #{rnn_forward.1} parent=0 // pred_region
    _
  $region41: #{rnn_forward.1} parent=0 // pred_fallthru
    _
  %v38 = vld [vmem:[%s0] sm:$0xff]
  %v39 = vld [vmem:[%s0 + $0x8] sm:$0xff]
  %v40 = vld [vmem:[%s0 + $0x10] sm:$0xff]
  %v41 = vld [vmem:[%s0 + $0x18] sm:$0xff]
  %v42 = vld [vmem:[%s0 + $0x20] sm:$0xff]
  %v43 = vld [vmem:[%s0 + $0x28] sm:$0xff]
  %v44 = vld [vmem:[%s0 + $0x30] sm:$0xff]
  %v45 = vld [vmem:[%s0 + $0x38] sm:$0xff]
  %v46 = vld [vmem:[%s1] sm:$0xff]
  %v47 = vld [vmem:[%s1 + $0x8] sm:$0xff]
  %v48 = vld [vmem:[%s2] sm:$0x1]
  %v50 = vlaneseq
  %v51 = vshrl.u32 %v50, 7
  %v52 = vsub.s32 0, %v51
  %v53 = vrot.slane %v48, %v52
  %vm55 = vcmask 130048
  %v57 = vsel %vm55, %v38, 0
  %v60 = vsel %vm55, %v39, 0
  %v63 = vsel %vm55, %v40, 0
  %v66 = vsel %vm55, %v41, 0
  %v69 = vsel %vm55, %v42, 0
  %v72 = vsel %vm55, %v43, 0
  %v75 = vsel %vm55, %v44, 0
  %v78 = vsel %vm55, %v45, 0
  %80 = vmatprep.subr.mxu0 0.0
  %81 = vmatpush1.msra.mxu0 0.0
  %82 = vmatprep.subr.mxu0 0.0
  %83 = vmatpush1.msra.mxu0 0.0
  %84 = vmatprep.subr.mxu0 0.0
  %85 = vmatpush1.msra.mxu0 0.0
  %86 = vmatprep.subr.mxu0 0.0
  %87 = vmatpush1.msra.mxu0 0.0
  %88 = vmatprep.subr.mxu0 0.0
  %89 = vmatpush1.msra.mxu0 0.0
  %90 = vmatprep.subr.mxu0 0.0
  %91 = vmatpush1.msra.mxu0 0.0
  %92 = vmatprep.subr.mxu0 0.0
  %93 = vmatpush1.msra.mxu0 0.0
  %94 = vmatprep.subr.mxu0 0.0
  %95 = vmatpush1.msra.mxu0 0.0
  %96 = vmatprep.subr.mxu0 0.0
  %97 = vmatpush1.msra.mxu0 0.0
  %98 = vmatprep.subr.mxu0 0.0
  %99 = vmatpush1.msra.mxu0 0.0
  %100 = vmatprep.subr.mxu0 0.0
  %101 = vmatpush1.msra.mxu0 0.0
  %102 = vmatprep.subr.mxu0 0.0
  %103 = vmatpush1.msra.mxu0 0.0
  %104 = vmatprep.subr.mxu0 0.0
  %105 = vmatpush1.msra.mxu0 0.0
  %106 = vmatprep.subr.mxu0 0.0
  %107 = vmatpush1.msra.mxu0 0.0
  %108 = vmatprep.subr.mxu0 0.0
  %109 = vmatpush1.msra.mxu0 %v47
  %110 = vmatprep.subr.mxu0 0.0
  %111 = vmatpush1.msra.mxu0 %v46
  %112 = vmatprep.subr.mxu0 0.0
  %113 = vmatpush2.msra.mxu0 0.0
  %114 = vmatprep.subr.mxu0 0.0
  %115 = vmatpush2.msra.mxu0 0.0
  %116 = vmatprep.subr.mxu0 0.0
  %117 = vmatpush2.msra.mxu0 0.0
  %118 = vmatprep.subr.mxu0 0.0
  %119 = vmatpush2.msra.mxu0 0.0
  %120 = vmatprep.subr.mxu0 0.0
  %121 = vmatpush2.msra.mxu0 0.0
  %122 = vmatprep.subr.mxu0 0.0
  %123 = vmatpush2.msra.mxu0 0.0
  %124 = vmatprep.subr.mxu0 0.0
  %125 = vmatpush2.msra.mxu0 0.0
  %126 = vmatprep.subr.mxu0 0.0
  %127 = vmatpush2.msra.mxu0 0.0
  %128 = vmatprep.subr.mxu0 0.0
  %129 = vmatpush2.msra.mxu0 0.0
  %130 = vmatprep.subr.mxu0 0.0
  %131 = vmatpush2.msra.mxu0 0.0
  %132 = vmatprep.subr.mxu0 0.0
  %133 = vmatpush2.msra.mxu0 0.0
  %134 = vmatprep.subr.mxu0 0.0
  %135 = vmatpush2.msra.mxu0 0.0
  %136 = vmatprep.subr.mxu0 0.0
  %137 = vmatpush2.msra.mxu0 0.0
  %138 = vmatprep.subr.mxu0 0.0
  %139 = vmatpush2.msra.mxu0 0.0
  %140 = vmatprep.subr.mxu0 0.0
  %141 = vmatpush2.msra.mxu0 0.0
  %142 = vmatprep.subr.mxu0 0.0
  %143 = vmatpush2.msra.mxu0 0.0
  %144 = vmatprep.mubr.f32.mxu0 0.0
  %145 = vmatmul.mubr.f32.gmra.mxu0 %v57
  %v146 = vpop.f32.mrf.mxu0
  %v147 = vadd.f32 %v53, %v146
  %v148 = vpop.f32.mrf.mxu0
  %149 = vmatprep.mubr.f32.mxu0 0.0
  %150 = vmatmul.mubr.f32.gmra.mxu0 %v60
  %v151 = vpop.f32.mrf.mxu0
  %v152 = vadd.f32 %v53, %v151
  %v153 = vpop.f32.mrf.mxu0
  %154 = vmatprep.mubr.f32.mxu0 0.0
  %155 = vmatmul.mubr.f32.gmra.mxu0 %v63
  %v156 = vpop.f32.mrf.mxu0
  %v157 = vadd.f32 %v53, %v156
  %v158 = vpop.f32.mrf.mxu0
  %159 = vmatprep.mubr.f32.mxu0 0.0
  %160 = vmatmul.mubr.f32.gmra.mxu0 %v66
  %v161 = vpop.f32.mrf.mxu0
  %v162 = vadd.f32 %v53, %v161
  %v163 = vpop.f32.mrf.mxu0
  %164 = vmatprep.mubr.f32.mxu0 0.0
  %165 = vmatmul.mubr.f32.gmra.mxu0 %v69
  %v166 = vpop.f32.mrf.mxu0
  %v167 = vadd.f32 %v53, %v166
  %v168 = vpop.f32.mrf.mxu0
  %169 = vmatprep.mubr.f32.mxu0 0.0
  %170 = vmatmul.mubr.f32.gmra.mxu0 %v72
  %v171 = vpop.f32.mrf.mxu0
  %v172 = vadd.f32 %v53, %v171
  %v173 = vpop.f32.mrf.mxu0
  %174 = vmatprep.mubr.f32.mxu0 0.0
  %175 = vmatmul.mubr.f32.gmra.mxu0 %v75
  %v176 = vpop.f32.mrf.mxu0
  %v177 = vadd.f32 %v53, %v176
  %v178 = vpop.f32.mrf.mxu0
  %179 = vmatprep.mubr.f32.mxu0 0.0
  %180 = vmatmul.mubr.f32.gmra.mxu0 %v78
  %v181 = vpop.f32.mrf.mxu0
  %v182 = vadd.f32 %v53, %v181
  %v183 = vpop.f32.mrf.mxu0
  %184 = vdwg.mxu0
  %v185 = vld [vmem:[%s3] sm:$0xff]
  %v186 = vld [vmem:[%s3 + $0x8] sm:$0xff]
  %v187 = vld [vmem:[%s3 + $0x10] sm:$0xff]
  %v188 = vld [vmem:[%s3 + $0x18] sm:$0xff]
  %v189 = vld [vmem:[%s4] sm:$0xff]
  %v190 = vld [vmem:[%s4 + $0x8] sm:$0xff]
  %v191 = vld [vmem:[%s4 + $0x10] sm:$0xff]
  %v192 = vld [vmem:[%s4 + $0x18] sm:$0xff]
  %v193 = vld [vmem:[%s5] sm:$0x1]
  %v195 = vlaneseq
  %v196 = vshrl.u32 %v195, 7
  %v197 = vsub.s32 0, %v196
  %v198 = vrot.slane %v193, %v197
  %vm200 = vcmask 261120
  %v202 = vsel %vm200, %v147, 0
  %v205 = vsel %vm200, %v152, 0
  %v208 = vsel %vm200, %v157, 0
  %v211 = vsel %vm200, %v162, 0
  %v214 = vsel %vm200, %v167, 0
  %v217 = vsel %vm200, %v172, 0
  %v220 = vsel %vm200, %v177, 0
  %v223 = vsel %vm200, %v182, 0
  %225 = vmatprep.subr.mxu0 0.0
  %226 = vmatpush1.msra.mxu0 0.0
  %227 = vmatprep.subr.mxu0 0.0
  %228 = vmatpush1.msra.mxu0 0.0
  %229 = vmatprep.subr.mxu0 0.0
  %230 = vmatpush1.msra.mxu0 0.0
  %231 = vmatprep.subr.mxu0 0.0
  %232 = vmatpush1.msra.mxu0 0.0
  %233 = vmatprep.subr.mxu0 0.0
  %234 = vmatpush1.msra.mxu0 0.0
  %235 = vmatprep.subr.mxu0 0.0
  %236 = vmatpush1.msra.mxu0 0.0
  %237 = vmatprep.subr.mxu0 0.0
  %238 = vmatpush1.msra.mxu0 0.0
  %239 = vmatprep.subr.mxu0 0.0
  %240 = vmatpush1.msra.mxu0 0.0
  %241 = vmatprep.subr.mxu0 0.0
  %242 = vmatpush1.msra.mxu0 0.0
  %243 = vmatprep.subr.mxu0 0.0
  %244 = vmatpush1.msra.mxu0 0.0
  %245 = vmatprep.subr.mxu0 0.0
  %246 = vmatpush1.msra.mxu0 0.0
  %247 = vmatprep.subr.mxu0 0.0
  %248 = vmatpush1.msra.mxu0 0.0
  %249 = vmatprep.subr.mxu0 0.0
  %250 = vmatpush1.msra.mxu0 %v188
  %251 = vmatprep.subr.mxu0 0.0
  %252 = vmatpush1.msra.mxu0 %v187
  %253 = vmatprep.subr.mxu0 0.0
  %254 = vmatpush1.msra.mxu0 %v186
  %255 = vmatprep.subr.mxu0 0.0
  %256 = vmatpush1.msra.mxu0 %v185
  %257 = vmatprep.subr.mxu0 0.0
  %258 = vmatpush2.msra.mxu0 0.0
  %259 = vmatprep.subr.mxu0 0.0
  %260 = vmatpush2.msra.mxu0 0.0
  %261 = vmatprep.subr.mxu0 0.0
  %262 = vmatpush2.msra.mxu0 0.0
  %263 = vmatprep.subr.mxu0 0.0
  %264 = vmatpush2.msra.mxu0 0.0
  %265 = vmatprep.subr.mxu0 0.0
  %266 = vmatpush2.msra.mxu0 0.0
  %267 = vmatprep.subr.mxu0 0.0
  %268 = vmatpush2.msra.mxu0 0.0
  %269 = vmatprep.subr.mxu0 0.0
  %270 = vmatpush2.msra.mxu0 0.0
  %271 = vmatprep.subr.mxu0 0.0
  %272 = vmatpush2.msra.mxu0 0.0
  %273 = vmatprep.subr.mxu0 0.0
  %274 = vmatpush2.msra.mxu0 0.0
  %275 = vmatprep.subr.mxu0 0.0
  %276 = vmatpush2.msra.mxu0 0.0
  %277 = vmatprep.subr.mxu0 0.0
  %278 = vmatpush2.msra.mxu0 0.0
  %279 = vmatprep.subr.mxu0 0.0
  %280 = vmatpush2.msra.mxu0 0.0
  %281 = vmatprep.subr.mxu0 0.0
  %282 = vmatpush2.msra.mxu0 0.0
  %283 = vmatprep.subr.mxu0 0.0
  %284 = vmatpush2.msra.mxu0 0.0
  %285 = vmatprep.subr.mxu0 0.0
  %286 = vmatpush2.msra.mxu0 0.0
  %287 = vmatprep.subr.mxu0 0.0
  %288 = vmatpush2.msra.mxu0 0.0
  %289 = vmatprep.mubr.f32.mxu0 0.0
  %290 = vmatmul.mubr.f32.gmra.mxu0 %v202
  %v291 = vpop.f32.mrf.mxu0
  %v292 = vadd.f32 %v198, %v291
  %v293 = vpop.f32.mrf.mxu0
  %294 = vmatprep.mubr.f32.mxu0 0.0
  %295 = vmatmul.mubr.f32.gmra.mxu0 %v205
  %v296 = vpop.f32.mrf.mxu0
  %v297 = vadd.f32 %v198, %v296
  %v298 = vpop.f32.mrf.mxu0
  %299 = vmatprep.mubr.f32.mxu0 0.0
  %300 = vmatmul.mubr.f32.gmra.mxu0 %v208
  %v301 = vpop.f32.mrf.mxu0
  %v302 = vadd.f32 %v198, %v301
  %v303 = vpop.f32.mrf.mxu0
  %304 = vmatprep.mubr.f32.mxu0 0.0
  %305 = vmatmul.mubr.f32.gmra.mxu0 %v211
  %v306 = vpop.f32.mrf.mxu0
  %v307 = vadd.f32 %v198, %v306
  %v308 = vpop.f32.mrf.mxu0
  %309 = vmatprep.mubr.f32.mxu0 0.0
  %310 = vmatmul.mubr.f32.gmra.mxu0 %v214
  %v311 = vpop.f32.mrf.mxu0
  %v312 = vadd.f32 %v198, %v311
  %v313 = vpop.f32.mrf.mxu0
  %314 = vmatprep.mubr.f32.mxu0 0.0
  %315 = vmatmul.mubr.f32.gmra.mxu0 %v217
  %v316 = vpop.f32.mrf.mxu0
  %v317 = vadd.f32 %v198, %v316
  %v318 = vpop.f32.mrf.mxu0
  %319 = vmatprep.mubr.f32.mxu0 0.0
  %320 = vmatmul.mubr.f32.gmra.mxu0 %v220
  %v321 = vpop.f32.mrf.mxu0
  %v322 = vadd.f32 %v198, %v321
  %v323 = vpop.f32.mrf.mxu0
  %324 = vmatprep.mubr.f32.mxu0 0.0
  %325 = vmatmul.mubr.f32.gmra.mxu0 %v223
  %v326 = vpop.f32.mrf.mxu0
  %v327 = vadd.f32 %v198, %v326
  %v328 = vpop.f32.mrf.mxu0
  %329 = vdwg.mxu0
  %v330 = vld [vmem:[%s6] sm:$0xff]
  %v331 = vld [vmem:[%s7] sm:$0xff]
  %v333 = vsel %vm200, %v330, 0
  %335 = vmatprep.subr.mxu0 0.0
  %336 = vmatpush1.msra.mxu0 0.0
  %337 = vmatprep.subr.mxu0 0.0
  %338 = vmatpush1.msra.mxu0 0.0
  %339 = vmatprep.subr.mxu0 0.0
  %340 = vmatpush1.msra.mxu0 0.0
  %341 = vmatprep.subr.mxu0 0.0
  %342 = vmatpush1.msra.mxu0 0.0
  %343 = vmatprep.subr.mxu0 0.0
  %344 = vmatpush1.msra.mxu0 0.0
  %345 = vmatprep.subr.mxu0 0.0
  %346 = vmatpush1.msra.mxu0 0.0
  %347 = vmatprep.subr.mxu0 0.0
  %348 = vmatpush1.msra.mxu0 0.0
  %349 = vmatprep.subr.mxu0 0.0
  %350 = vmatpush1.msra.mxu0 0.0
  %351 = vmatprep.subr.mxu0 0.0
  %352 = vmatpush1.msra.mxu0 0.0
  %353 = vmatprep.subr.mxu0 0.0
  %354 = vmatpush1.msra.mxu0 0.0
  %355 = vmatprep.subr.mxu0 0.0
  %356 = vmatpush1.msra.mxu0 0.0
  %357 = vmatprep.subr.mxu0 0.0
  %358 = vmatpush1.msra.mxu0 0.0
  %359 = vmatprep.subr.mxu0 0.0
  %360 = vmatpush1.msra.mxu0 %v192
  %361 = vmatprep.subr.mxu0 0.0
  %362 = vmatpush1.msra.mxu0 %v191
  %363 = vmatprep.subr.mxu0 0.0
  %364 = vmatpush1.msra.mxu0 %v190
  %365 = vmatprep.subr.mxu0 0.0
  %366 = vmatpush1.msra.mxu0 %v189
  %367 = vmatprep.subr.mxu0 0.0
  %368 = vmatpush2.msra.mxu0 0.0
  %369 = vmatprep.subr.mxu0 0.0
  %370 = vmatpush2.msra.mxu0 0.0
  %371 = vmatprep.subr.mxu0 0.0
  %372 = vmatpush2.msra.mxu0 0.0
  %373 = vmatprep.subr.mxu0 0.0
  %374 = vmatpush2.msra.mxu0 0.0
  %375 = vmatprep.subr.mxu0 0.0
  %376 = vmatpush2.msra.mxu0 0.0
  %377 = vmatprep.subr.mxu0 0.0
  %378 = vmatpush2.msra.mxu0 0.0
  %379 = vmatprep.subr.mxu0 0.0
  %380 = vmatpush2.msra.mxu0 0.0
  %381 = vmatprep.subr.mxu0 0.0
  %382 = vmatpush2.msra.mxu0 0.0
  %383 = vmatprep.subr.mxu0 0.0
  %384 = vmatpush2.msra.mxu0 0.0
  %385 = vmatprep.subr.mxu0 0.0
  %386 = vmatpush2.msra.mxu0 0.0
  %387 = vmatprep.subr.mxu0 0.0
  %388 = vmatpush2.msra.mxu0 0.0
  %389 = vmatprep.subr.mxu0 0.0
  %390 = vmatpush2.msra.mxu0 0.0
  %391 = vmatprep.subr.mxu0 0.0
  %392 = vmatpush2.msra.mxu0 0.0
  %393 = vmatprep.subr.mxu0 0.0
  %394 = vmatpush2.msra.mxu0 0.0
  %395 = vmatprep.subr.mxu0 0.0
  %396 = vmatpush2.msra.mxu0 0.0
  %397 = vmatprep.subr.mxu0 0.0
  %398 = vmatpush2.msra.mxu0 0.0
  %399 = vmatprep.mubr.f32.mxu0 0.0
  %400 = vmatmul.mubr.f32.gmra.mxu0 %v333
  %v401 = vpop.f32.mrf.mxu0
  %v402 = vadd.f32 0.0, %v401
  %v403 = vpop.f32.mrf.mxu0
  %404 = vdwg.mxu0
  %v405 = vadd.f32 %v292, %v402
  %v406 = vxor.u32 %v405, 2147483648
  %v407 = vmul.f32 %v406, 1.442695
  %v408 = vpow.pop %v407
  %v409 = vadd.f32 %v408, 1.0
  %v410 = vrcp.pop %v409
  %v411 = vmul.f32 1.0, %v410
  %v412 = vtanh.pop %v405
  %414 = vrot.lane.b32.xlu0 %v331, 32
  %v415 = vpop.permute.xlu0 %414
  %v417 = vmul.f32 %v411, %v415
  %419 = vrot.lane.b32.xlu0 %v412, 64
  %v420 = vpop.permute.xlu0 %419
  %v422 = vmul.f32 %v411, %v420
  %424 = vrot.lane.b32.xlu0 %v422, 32
  %v425 = vpop.permute.xlu0 %424
  %v427 = vadd.f32 %v417, %v425
  %v428 = vtanh.pop %v427
  %430 = vrot.lane.b32.xlu0 %v428, 64
  %v431 = vpop.permute.xlu0 %430
  %v433 = vmul.f32 %v411, %v431
  %435 = vrot.lane.b32.xlu0 %v433, 32
  %v436 = vpop.permute.xlu0 %435
  %v437 = vsel %vm200, %v436, 0
  %439 = vmatprep.subr.mxu0 0.0
  %440 = vmatpush1.msra.mxu0 0.0
  %441 = vmatprep.subr.mxu0 0.0
  %442 = vmatpush1.msra.mxu0 0.0
  %443 = vmatprep.subr.mxu0 0.0
  %444 = vmatpush1.msra.mxu0 0.0
  %445 = vmatprep.subr.mxu0 0.0
  %446 = vmatpush1.msra.mxu0 0.0
  %447 = vmatprep.subr.mxu0 0.0
  %448 = vmatpush1.msra.mxu0 0.0
  %449 = vmatprep.subr.mxu0 0.0
  %450 = vmatpush1.msra.mxu0 0.0
  %451 = vmatprep.subr.mxu0 0.0
  %452 = vmatpush1.msra.mxu0 0.0
  %453 = vmatprep.subr.mxu0 0.0
  %454 = vmatpush1.msra.mxu0 0.0
  %455 = vmatprep.subr.mxu0 0.0
  %456 = vmatpush1.msra.mxu0 0.0
  %457 = vmatprep.subr.mxu0 0.0
  %458 = vmatpush1.msra.mxu0 0.0
  %459 = vmatprep.subr.mxu0 0.0
  %460 = vmatpush1.msra.mxu0 0.0
  %461 = vmatprep.subr.mxu0 0.0
  %462 = vmatpush1.msra.mxu0 0.0
  %463 = vmatprep.subr.mxu0 0.0
  %464 = vmatpush1.msra.mxu0 %v192
  %465 = vmatprep.subr.mxu0 0.0
  %466 = vmatpush1.msra.mxu0 %v191
  %467 = vmatprep.subr.mxu0 0.0
  %468 = vmatpush1.msra.mxu0 %v190
  %469 = vmatprep.subr.mxu0 0.0
  %470 = vmatpush1.msra.mxu0 %v189
  %471 = vmatprep.subr.mxu0 0.0
  %472 = vmatpush2.msra.mxu0 0.0
  %473 = vmatprep.subr.mxu0 0.0
  %474 = vmatpush2.msra.mxu0 0.0
  %475 = vmatprep.subr.mxu0 0.0
  %476 = vmatpush2.msra.mxu0 0.0
  %477 = vmatprep.subr.mxu0 0.0
  %478 = vmatpush2.msra.mxu0 0.0
  %479 = vmatprep.subr.mxu0 0.0
  %480 = vmatpush2.msra.mxu0 0.0
  %481 = vmatprep.subr.mxu0 0.0
  %482 = vmatpush2.msra.mxu0 0.0
  %483 = vmatprep.subr.mxu0 0.0
  %484 = vmatpush2.msra.mxu0 0.0
  %485 = vmatprep.subr.mxu0 0.0
  %486 = vmatpush2.msra.mxu0 0.0
  %487 = vmatprep.subr.mxu0 0.0
  %488 = vmatpush2.msra.mxu0 0.0
  %489 = vmatprep.subr.mxu0 0.0
  %490 = vmatpush2.msra.mxu0 0.0
  %491 = vmatprep.subr.mxu0 0.0
  %492 = vmatpush2.msra.mxu0 0.0
  %493 = vmatprep.subr.mxu0 0.0
  %494 = vmatpush2.msra.mxu0 0.0
  %495 = vmatprep.subr.mxu0 0.0
  %496 = vmatpush2.msra.mxu0 0.0
  %497 = vmatprep.subr.mxu0 0.0
  %498 = vmatpush2.msra.mxu0 0.0
  %499 = vmatprep.subr.mxu0 0.0
  %500 = vmatpush2.msra.mxu0 0.0
  %501 = vmatprep.subr.mxu0 0.0
  %502 = vmatpush2.msra.mxu0 0.0
  %503 = vmatprep.mubr.f32.mxu0 0.0
  %504 = vmatmul.mubr.f32.gmra.mxu0 %v437
  %v505 = vpop.f32.mrf.mxu0
  %v506 = vadd.f32 0.0, %v505
  %v507 = vpop.f32.mrf.mxu0
  %508 = vdwg.mxu0
  %v509 = vadd.f32 %v297, %v506
  %v510 = vxor.u32 %v509, 2147483648
  %v511 = vmul.f32 %v510, 1.442695
  %v512 = vpow.pop %v511
  %v513 = vadd.f32 %v512, 1.0
  %v514 = vrcp.pop %v513
  %v515 = vmul.f32 1.0, %v514
  %v516 = vtanh.pop %v509
  %v517 = vmul.f32 %v515, %v427
  %519 = vrot.lane.b32.xlu0 %v516, 64
  %v520 = vpop.permute.xlu0 %519
  %v522 = vmul.f32 %v515, %v520
  %524 = vrot.lane.b32.xlu0 %v522, 32
  %v525 = vpop.permute.xlu0 %524
  %v527 = vadd.f32 %v517, %v525
  %v528 = vtanh.pop %v527
  %530 = vrot.lane.b32.xlu0 %v528, 64
  %v531 = vpop.permute.xlu0 %530
  %v533 = vmul.f32 %v515, %v531
  %535 = vrot.lane.b32.xlu0 %v533, 32
  %v536 = vpop.permute.xlu0 %535
  %v537 = vsel %vm200, %v536, 0
  %539 = vmatprep.subr.mxu0 0.0
  %540 = vmatpush1.msra.mxu0 0.0
  %541 = vmatprep.subr.mxu0 0.0
  %542 = vmatpush1.msra.mxu0 0.0
  %543 = vmatprep.subr.mxu0 0.0
  %544 = vmatpush1.msra.mxu0 0.0
  %545 = vmatprep.subr.mxu0 0.0
  %546 = vmatpush1.msra.mxu0 0.0
  %547 = vmatprep.subr.mxu0 0.0
  %548 = vmatpush1.msra.mxu0 0.0
  %549 = vmatprep.subr.mxu0 0.0
  %550 = vmatpush1.msra.mxu0 0.0
  %551 = vmatprep.subr.mxu0 0.0
  %552 = vmatpush1.msra.mxu0 0.0
  %553 = vmatprep.subr.mxu0 0.0
  %554 = vmatpush1.msra.mxu0 0.0
  %555 = vmatprep.subr.mxu0 0.0
  %556 = vmatpush1.msra.mxu0 0.0
  %557 = vmatprep.subr.mxu0 0.0
  %558 = vmatpush1.msra.mxu0 0.0
  %559 = vmatprep.subr.mxu0 0.0
  %560 = vmatpush1.msra.mxu0 0.0
  %561 = vmatprep.subr.mxu0 0.0
  %562 = vmatpush1.msra.mxu0 0.0
  %563 = vmatprep.subr.mxu0 0.0
  %564 = vmatpush1.msra.mxu0 %v192
  %565 = vmatprep.subr.mxu0 0.0
  %566 = vmatpush1.msra.mxu0 %v191
  %567 = vmatprep.subr.mxu0 0.0
  %568 = vmatpush1.msra.mxu0 %v190
  %569 = vmatprep.subr.mxu0 0.0
  %570 = vmatpush1.msra.mxu0 %v189
  %571 = vmatprep.subr.mxu0 0.0
  %572 = vmatpush2.msra.mxu0 0.0
  %573 = vmatprep.subr.mxu0 0.0
  %574 = vmatpush2.msra.mxu0 0.0
  %575 = vmatprep.subr.mxu0 0.0
  %576 = vmatpush2.msra.mxu0 0.0
  %577 = vmatprep.subr.mxu0 0.0
  %578 = vmatpush2.msra.mxu0 0.0
  %579 = vmatprep.subr.mxu0 0.0
  %580 = vmatpush2.msra.mxu0 0.0
  %581 = vmatprep.subr.mxu0 0.0
  %582 = vmatpush2.msra.mxu0 0.0
  %583 = vmatprep.subr.mxu0 0.0
  %584 = vmatpush2.msra.mxu0 0.0
  %585 = vmatprep.subr.mxu0 0.0
  %586 = vmatpush2.msra.mxu0 0.0
  %587 = vmatprep.subr.mxu0 0.0
  %588 = vmatpush2.msra.mxu0 0.0
  %589 = vmatprep.subr.mxu0 0.0
  %590 = vmatpush2.msra.mxu0 0.0
  %591 = vmatprep.subr.mxu0 0.0
  %592 = vmatpush2.msra.mxu0 0.0
  %593 = vmatprep.subr.mxu0 0.0
  %594 = vmatpush2.msra.mxu0 0.0
  %595 = vmatprep.subr.mxu0 0.0
  %596 = vmatpush2.msra.mxu0 0.0
  %597 = vmatprep.subr.mxu0 0.0
  %598 = vmatpush2.msra.mxu0 0.0
  %599 = vmatprep.subr.mxu0 0.0
  %600 = vmatpush2.msra.mxu0 0.0
  %601 = vmatprep.subr.mxu0 0.0
  %602 = vmatpush2.msra.mxu0 0.0
  %603 = vmatprep.mubr.f32.mxu0 0.0
  %604 = vmatmul.mubr.f32.gmra.mxu0 %v537
  %v605 = vpop.f32.mrf.mxu0
  %v606 = vadd.f32 0.0, %v605
  %v607 = vpop.f32.mrf.mxu0
  %608 = vdwg.mxu0
  %v609 = vadd.f32 %v302, %v606
  %v610 = vxor.u32 %v609, 2147483648
  %v611 = vmul.f32 %v610, 1.442695
  %v612 = vpow.pop %v611
  %v613 = vadd.f32 %v612, 1.0
  %v614 = vrcp.pop %v613
  %v615 = vmul.f32 1.0, %v614
  %v616 = vtanh.pop %v609
  %v617 = vmul.f32 %v615, %v527
  %619 = vrot.lane.b32.xlu0 %v616, 64
  %v620 = vpop.permute.xlu0 %619
  %v622 = vmul.f32 %v615, %v620
  %624 = vrot.lane.b32.xlu0 %v622, 32
  %v625 = vpop.permute.xlu0 %624
  %v627 = vadd.f32 %v617, %v625
  %v628 = vtanh.pop %v627
  %630 = vrot.lane.b32.xlu0 %v628, 64
  %v631 = vpop.permute.xlu0 %630
  %v633 = vmul.f32 %v615, %v631
  %635 = vrot.lane.b32.xlu0 %v633, 32
  %v636 = vpop.permute.xlu0 %635
  %v637 = vsel %vm200, %v636, 0
  %639 = vmatprep.subr.mxu0 0.0
  %640 = vmatpush1.msra.mxu0 0.0
  %641 = vmatprep.subr.mxu0 0.0
  %642 = vmatpush1.msra.mxu0 0.0
  %643 = vmatprep.subr.mxu0 0.0
  %644 = vmatpush1.msra.mxu0 0.0
  %645 = vmatprep.subr.mxu0 0.0
  %646 = vmatpush1.msra.mxu0 0.0
  %647 = vmatprep.subr.mxu0 0.0
  %648 = vmatpush1.msra.mxu0 0.0
  %649 = vmatprep.subr.mxu0 0.0
  %650 = vmatpush1.msra.mxu0 0.0
  %651 = vmatprep.subr.mxu0 0.0
  %652 = vmatpush1.msra.mxu0 0.0
  %653 = vmatprep.subr.mxu0 0.0
  %654 = vmatpush1.msra.mxu0 0.0
  %655 = vmatprep.subr.mxu0 0.0
  %656 = vmatpush1.msra.mxu0 0.0
  %657 = vmatprep.subr.mxu0 0.0
  %658 = vmatpush1.msra.mxu0 0.0
  %659 = vmatprep.subr.mxu0 0.0
  %660 = vmatpush1.msra.mxu0 0.0
  %661 = vmatprep.subr.mxu0 0.0
  %662 = vmatpush1.msra.mxu0 0.0
  %663 = vmatprep.subr.mxu0 0.0
  %664 = vmatpush1.msra.mxu0 %v192
  %665 = vmatprep.subr.mxu0 0.0
  %666 = vmatpush1.msra.mxu0 %v191
  %667 = vmatprep.subr.mxu0 0.0
  %668 = vmatpush1.msra.mxu0 %v190
  %669 = vmatprep.subr.mxu0 0.0
  %670 = vmatpush1.msra.mxu0 %v189
  %671 = vmatprep.subr.mxu0 0.0
  %672 = vmatpush2.msra.mxu0 0.0
  %673 = vmatprep.subr.mxu0 0.0
  %674 = vmatpush2.msra.mxu0 0.0
  %675 = vmatprep.subr.mxu0 0.0
  %676 = vmatpush2.msra.mxu0 0.0
  %677 = vmatprep.subr.mxu0 0.0
  %678 = vmatpush2.msra.mxu0 0.0
  %679 = vmatprep.subr.mxu0 0.0
  %680 = vmatpush2.msra.mxu0 0.0
  %681 = vmatprep.subr.mxu0 0.0
  %682 = vmatpush2.msra.mxu0 0.0
  %683 = vmatprep.subr.mxu0 0.0
  %684 = vmatpush2.msra.mxu0 0.0
  %685 = vmatprep.subr.mxu0 0.0
  %686 = vmatpush2.msra.mxu0 0.0
  %687 = vmatprep.subr.mxu0 0.0
  %688 = vmatpush2.msra.mxu0 0.0
  %689 = vmatprep.subr.mxu0 0.0
  %690 = vmatpush2.msra.mxu0 0.0
  %691 = vmatprep.subr.mxu0 0.0
  %692 = vmatpush2.msra.mxu0 0.0
  %693 = vmatprep.subr.mxu0 0.0
  %694 = vmatpush2.msra.mxu0 0.0
  %695 = vmatprep.subr.mxu0 0.0
  %696 = vmatpush2.msra.mxu0 0.0
  %697 = vmatprep.subr.mxu0 0.0
  %698 = vmatpush2.msra.mxu0 0.0
  %699 = vmatprep.subr.mxu0 0.0
  %700 = vmatpush2.msra.mxu0 0.0
  %701 = vmatprep.subr.mxu0 0.0
  %702 = vmatpush2.msra.mxu0 0.0
  %703 = vmatprep.mubr.f32.mxu0 0.0
  %704 = vmatmul.mubr.f32.gmra.mxu0 %v637
  %v705 = vpop.f32.mrf.mxu0
  %v706 = vadd.f32 0.0, %v705
  %v707 = vpop.f32.mrf.mxu0
  %708 = vdwg.mxu0
  %v709 = vadd.f32 %v307, %v706
  %v710 = vxor.u32 %v709, 2147483648
  %v711 = vmul.f32 %v710, 1.442695
  %v712 = vpow.pop %v711
  %v713 = vadd.f32 %v712, 1.0
  %v714 = vrcp.pop %v713
  %v715 = vmul.f32 1.0, %v714
  %v716 = vtanh.pop %v709
  %v717 = vmul.f32 %v715, %v627
  %719 = vrot.lane.b32.xlu0 %v716, 64
  %v720 = vpop.permute.xlu0 %719
  %v722 = vmul.f32 %v715, %v720
  %724 = vrot.lane.b32.xlu0 %v722, 32
  %v725 = vpop.permute.xlu0 %724
  %v727 = vadd.f32 %v717, %v725
  %v728 = vtanh.pop %v727
  %730 = vrot.lane.b32.xlu0 %v728, 64
  %v731 = vpop.permute.xlu0 %730
  %v733 = vmul.f32 %v715, %v731
  %735 = vrot.lane.b32.xlu0 %v733, 32
  %v736 = vpop.permute.xlu0 %735
  %v737 = vsel %vm200, %v736, 0
  %739 = vmatprep.subr.mxu0 0.0
  %740 = vmatpush1.msra.mxu0 0.0
  %741 = vmatprep.subr.mxu0 0.0
  %742 = vmatpush1.msra.mxu0 0.0
  %743 = vmatprep.subr.mxu0 0.0
  %744 = vmatpush1.msra.mxu0 0.0
  %745 = vmatprep.subr.mxu0 0.0
  %746 = vmatpush1.msra.mxu0 0.0
  %747 = vmatprep.subr.mxu0 0.0
  %748 = vmatpush1.msra.mxu0 0.0
  %749 = vmatprep.subr.mxu0 0.0
  %750 = vmatpush1.msra.mxu0 0.0
  %751 = vmatprep.subr.mxu0 0.0
  %752 = vmatpush1.msra.mxu0 0.0
  %753 = vmatprep.subr.mxu0 0.0
  %754 = vmatpush1.msra.mxu0 0.0
  %755 = vmatprep.subr.mxu0 0.0
  %756 = vmatpush1.msra.mxu0 0.0
  %757 = vmatprep.subr.mxu0 0.0
  %758 = vmatpush1.msra.mxu0 0.0
  %759 = vmatprep.subr.mxu0 0.0
  %760 = vmatpush1.msra.mxu0 0.0
  %761 = vmatprep.subr.mxu0 0.0
  %762 = vmatpush1.msra.mxu0 0.0
  %763 = vmatprep.subr.mxu0 0.0
  %764 = vmatpush1.msra.mxu0 %v192
  %765 = vmatprep.subr.mxu0 0.0
  %766 = vmatpush1.msra.mxu0 %v191
  %767 = vmatprep.subr.mxu0 0.0
  %768 = vmatpush1.msra.mxu0 %v190
  %769 = vmatprep.subr.mxu0 0.0
  %770 = vmatpush1.msra.mxu0 %v189
  %771 = vmatprep.subr.mxu0 0.0
  %772 = vmatpush2.msra.mxu0 0.0
  %773 = vmatprep.subr.mxu0 0.0
  %774 = vmatpush2.msra.mxu0 0.0
  %775 = vmatprep.subr.mxu0 0.0
  %776 = vmatpush2.msra.mxu0 0.0
  %777 = vmatprep.subr.mxu0 0.0
  %778 = vmatpush2.msra.mxu0 0.0
  %779 = vmatprep.subr.mxu0 0.0
  %780 = vmatpush2.msra.mxu0 0.0
  %781 = vmatprep.subr.mxu0 0.0
  %782 = vmatpush2.msra.mxu0 0.0
  %783 = vmatprep.subr.mxu0 0.0
  %784 = vmatpush2.msra.mxu0 0.0
  %785 = vmatprep.subr.mxu0 0.0
  %786 = vmatpush2.msra.mxu0 0.0
  %787 = vmatprep.subr.mxu0 0.0
  %788 = vmatpush2.msra.mxu0 0.0
  %789 = vmatprep.subr.mxu0 0.0
  %790 = vmatpush2.msra.mxu0 0.0
  %791 = vmatprep.subr.mxu0 0.0
  %792 = vmatpush2.msra.mxu0 0.0
  %793 = vmatprep.subr.mxu0 0.0
  %794 = vmatpush2.msra.mxu0 0.0
  %795 = vmatprep.subr.mxu0 0.0
  %796 = vmatpush2.msra.mxu0 0.0
  %797 = vmatprep.subr.mxu0 0.0
  %798 = vmatpush2.msra.mxu0 0.0
  %799 = vmatprep.subr.mxu0 0.0
  %800 = vmatpush2.msra.mxu0 0.0
  %801 = vmatprep.subr.mxu0 0.0
  %802 = vmatpush2.msra.mxu0 0.0
  %803 = vmatprep.mubr.f32.mxu0 0.0
  %804 = vmatmul.mubr.f32.gmra.mxu0 %v737
  %v805 = vpop.f32.mrf.mxu0
  %v806 = vadd.f32 0.0, %v805
  %v807 = vpop.f32.mrf.mxu0
  %808 = vdwg.mxu0
  %v809 = vadd.f32 %v312, %v806
  %v810 = vxor.u32 %v809, 2147483648
  %v811 = vmul.f32 %v810, 1.442695
  %v812 = vpow.pop %v811
  %v813 = vadd.f32 %v812, 1.0
  %v814 = vrcp.pop %v813
  %v815 = vmul.f32 1.0, %v814
  %v816 = vtanh.pop %v809
  %v817 = vmul.f32 %v815, %v727
  %819 = vrot.lane.b32.xlu0 %v816, 64
  %v820 = vpop.permute.xlu0 %819
  %v822 = vmul.f32 %v815, %v820
  %824 = vrot.lane.b32.xlu0 %v822, 32
  %v825 = vpop.permute.xlu0 %824
  %v827 = vadd.f32 %v817, %v825
  %v828 = vtanh.pop %v827
  %830 = vrot.lane.b32.xlu0 %v828, 64
  %v831 = vpop.permute.xlu0 %830
  %v833 = vmul.f32 %v815, %v831
  %835 = vrot.lane.b32.xlu0 %v833, 32
  %v836 = vpop.permute.xlu0 %835
  %v837 = vsel %vm200, %v836, 0
  %839 = vmatprep.subr.mxu0 0.0
  %840 = vmatpush1.msra.mxu0 0.0
  %841 = vmatprep.subr.mxu0 0.0
  %842 = vmatpush1.msra.mxu0 0.0
  %843 = vmatprep.subr.mxu0 0.0
  %844 = vmatpush1.msra.mxu0 0.0
  %845 = vmatprep.subr.mxu0 0.0
  %846 = vmatpush1.msra.mxu0 0.0
  %847 = vmatprep.subr.mxu0 0.0
  %848 = vmatpush1.msra.mxu0 0.0
  %849 = vmatprep.subr.mxu0 0.0
  %850 = vmatpush1.msra.mxu0 0.0
  %851 = vmatprep.subr.mxu0 0.0
  %852 = vmatpush1.msra.mxu0 0.0
  %853 = vmatprep.subr.mxu0 0.0
  %854 = vmatpush1.msra.mxu0 0.0
  %855 = vmatprep.subr.mxu0 0.0
  %856 = vmatpush1.msra.mxu0 0.0
  %857 = vmatprep.subr.mxu0 0.0
  %858 = vmatpush1.msra.mxu0 0.0
  %859 = vmatprep.subr.mxu0 0.0
  %860 = vmatpush1.msra.mxu0 0.0
  %861 = vmatprep.subr.mxu0 0.0
  %862 = vmatpush1.msra.mxu0 0.0
  %863 = vmatprep.subr.mxu0 0.0
  %864 = vmatpush1.msra.mxu0 %v192
  %865 = vmatprep.subr.mxu0 0.0
  %866 = vmatpush1.msra.mxu0 %v191
  %867 = vmatprep.subr.mxu0 0.0
  %868 = vmatpush1.msra.mxu0 %v190
  %869 = vmatprep.subr.mxu0 0.0
  %870 = vmatpush1.msra.mxu0 %v189
  %871 = vmatprep.subr.mxu0 0.0
  %872 = vmatpush2.msra.mxu0 0.0
  %873 = vmatprep.subr.mxu0 0.0
  %874 = vmatpush2.msra.mxu0 0.0
  %875 = vmatprep.subr.mxu0 0.0
  %876 = vmatpush2.msra.mxu0 0.0
  %877 = vmatprep.subr.mxu0 0.0
  %878 = vmatpush2.msra.mxu0 0.0
  %879 = vmatprep.subr.mxu0 0.0
  %880 = vmatpush2.msra.mxu0 0.0
  %881 = vmatprep.subr.mxu0 0.0
  %882 = vmatpush2.msra.mxu0 0.0
  %883 = vmatprep.subr.mxu0 0.0
  %884 = vmatpush2.msra.mxu0 0.0
  %885 = vmatprep.subr.mxu0 0.0
  %886 = vmatpush2.msra.mxu0 0.0
  %887 = vmatprep.subr.mxu0 0.0
  %888 = vmatpush2.msra.mxu0 0.0
  %889 = vmatprep.subr.mxu0 0.0
  %890 = vmatpush2.msra.mxu0 0.0
  %891 = vmatprep.subr.mxu0 0.0
  %892 = vmatpush2.msra.mxu0 0.0
  %893 = vmatprep.subr.mxu0 0.0
  %894 = vmatpush2.msra.mxu0 0.0
  %895 = vmatprep.subr.mxu0 0.0
  %896 = vmatpush2.msra.mxu0 0.0
  %897 = vmatprep.subr.mxu0 0.0
  %898 = vmatpush2.msra.mxu0 0.0
  %899 = vmatprep.subr.mxu0 0.0
  %900 = vmatpush2.msra.mxu0 0.0
  %901 = vmatprep.subr.mxu0 0.0
  %902 = vmatpush2.msra.mxu0 0.0
  %903 = vmatprep.mubr.f32.mxu0 0.0
  %904 = vmatmul.mubr.f32.gmra.mxu0 %v837
  %v905 = vpop.f32.mrf.mxu0
  %v906 = vadd.f32 0.0, %v905
  %v907 = vpop.f32.mrf.mxu0
  %908 = vdwg.mxu0
  %v909 = vadd.f32 %v317, %v906
  %v910 = vxor.u32 %v909, 2147483648
  %v911 = vmul.f32 %v910, 1.442695
  %v912 = vpow.pop %v911
  %v913 = vadd.f32 %v912, 1.0
  %v914 = vrcp.pop %v913
  %v915 = vmul.f32 1.0, %v914
  %v916 = vtanh.pop %v909
  %v917 = vmul.f32 %v915, %v827
  %919 = vrot.lane.b32.xlu0 %v916, 64
  %v920 = vpop.permute.xlu0 %919
  %v922 = vmul.f32 %v915, %v920
  %924 = vrot.lane.b32.xlu0 %v922, 32
  %v925 = vpop.permute.xlu0 %924
  %v927 = vadd.f32 %v917, %v925
  %v928 = vtanh.pop %v927
  %930 = vrot.lane.b32.xlu0 %v928, 64
  %v931 = vpop.permute.xlu0 %930
  %v933 = vmul.f32 %v915, %v931
  %935 = vrot.lane.b32.xlu0 %v933, 32
  %v936 = vpop.permute.xlu0 %935
  %v937 = vsel %vm200, %v936, 0
  %939 = vmatprep.subr.mxu0 0.0
  %940 = vmatpush1.msra.mxu0 0.0
  %941 = vmatprep.subr.mxu0 0.0
  %942 = vmatpush1.msra.mxu0 0.0
  %943 = vmatprep.subr.mxu0 0.0
  %944 = vmatpush1.msra.mxu0 0.0
  %945 = vmatprep.subr.mxu0 0.0
  %946 = vmatpush1.msra.mxu0 0.0
  %947 = vmatprep.subr.mxu0 0.0
  %948 = vmatpush1.msra.mxu0 0.0
  %949 = vmatprep.subr.mxu0 0.0
  %950 = vmatpush1.msra.mxu0 0.0
  %951 = vmatprep.subr.mxu0 0.0
  %952 = vmatpush1.msra.mxu0 0.0
  %953 = vmatprep.subr.mxu0 0.0
  %954 = vmatpush1.msra.mxu0 0.0
  %955 = vmatprep.subr.mxu0 0.0
  %956 = vmatpush1.msra.mxu0 0.0
  %957 = vmatprep.subr.mxu0 0.0
  %958 = vmatpush1.msra.mxu0 0.0
  %959 = vmatprep.subr.mxu0 0.0
  %960 = vmatpush1.msra.mxu0 0.0
  %961 = vmatprep.subr.mxu0 0.0
  %962 = vmatpush1.msra.mxu0 0.0
  %963 = vmatprep.subr.mxu0 0.0
  %964 = vmatpush1.msra.mxu0 %v192
  %965 = vmatprep.subr.mxu0 0.0
  %966 = vmatpush1.msra.mxu0 %v191
  %967 = vmatprep.subr.mxu0 0.0
  %968 = vmatpush1.msra.mxu0 %v190
  %969 = vmatprep.subr.mxu0 0.0
  %970 = vmatpush1.msra.mxu0 %v189
  %971 = vmatprep.subr.mxu0 0.0
  %972 = vmatpush2.msra.mxu0 0.0
  %973 = vmatprep.subr.mxu0 0.0
  %974 = vmatpush2.msra.mxu0 0.0
  %975 = vmatprep.subr.mxu0 0.0
  %976 = vmatpush2.msra.mxu0 0.0
  %977 = vmatprep.subr.mxu0 0.0
  %978 = vmatpush2.msra.mxu0 0.0
  %979 = vmatprep.subr.mxu0 0.0
  %980 = vmatpush2.msra.mxu0 0.0
  %981 = vmatprep.subr.mxu0 0.0
  %982 = vmatpush2.msra.mxu0 0.0
  %983 = vmatprep.subr.mxu0 0.0
  %984 = vmatpush2.msra.mxu0 0.0
  %985 = vmatprep.subr.mxu0 0.0
  %986 = vmatpush2.msra.mxu0 0.0
  %987 = vmatprep.subr.mxu0 0.0
  %988 = vmatpush2.msra.mxu0 0.0
  %989 = vmatprep.subr.mxu0 0.0
  %990 = vmatpush2.msra.mxu0 0.0
  %991 = vmatprep.subr.mxu0 0.0
  %992 = vmatpush2.msra.mxu0 0.0
  %993 = vmatprep.subr.mxu0 0.0
  %994 = vmatpush2.msra.mxu0 0.0
  %995 = vmatprep.subr.mxu0 0.0
  %996 = vmatpush2.msra.mxu0 0.0
  %997 = vmatprep.subr.mxu0 0.0
  %998 = vmatpush2.msra.mxu0 0.0
  %999 = vmatprep.subr.mxu0 0.0
  %1000 = vmatpush2.msra.mxu0 0.0
  %1001 = vmatprep.subr.mxu0 0.0
  %1002 = vmatpush2.msra.mxu0 0.0
  %1003 = vmatprep.mubr.f32.mxu0 0.0
  %1004 = vmatmul.mubr.f32.gmra.mxu0 %v937
  %v1005 = vpop.f32.mrf.mxu0
  %v1006 = vadd.f32 0.0, %v1005
  %v1007 = vpop.f32.mrf.mxu0
  %1008 = vdwg.mxu0
  %v1009 = vadd.f32 %v322, %v1006
  %v1010 = vxor.u32 %v1009, 2147483648
  %v1011 = vmul.f32 %v1010, 1.442695
  %v1012 = vpow.pop %v1011
  %v1013 = vadd.f32 %v1012, 1.0
  %v1014 = vrcp.pop %v1013
  %v1015 = vmul.f32 1.0, %v1014
  %v1016 = vtanh.pop %v1009
  %v1017 = vmul.f32 %v1015, %v927
  %1019 = vrot.lane.b32.xlu0 %v1016, 64
  %v1020 = vpop.permute.xlu0 %1019
  %v1022 = vmul.f32 %v1015, %v1020
  %1024 = vrot.lane.b32.xlu0 %v1022, 32
  %v1025 = vpop.permute.xlu0 %1024
  %v1027 = vadd.f32 %v1017, %v1025
  %v1028 = vtanh.pop %v1027
  %1030 = vrot.lane.b32.xlu0 %v1028, 64
  %v1031 = vpop.permute.xlu0 %1030
  %v1033 = vmul.f32 %v1015, %v1031
  %1035 = vrot.lane.b32.xlu0 %v1033, 32
  %v1036 = vpop.permute.xlu0 %1035
  %v1037 = vsel %vm200, %v1036, 0
  %1039 = vmatprep.subr.mxu0 0.0
  %1040 = vmatpush1.msra.mxu0 0.0
  %1041 = vmatprep.subr.mxu0 0.0
  %1042 = vmatpush1.msra.mxu0 0.0
  %1043 = vmatprep.subr.mxu0 0.0
  %1044 = vmatpush1.msra.mxu0 0.0
  %1045 = vmatprep.subr.mxu0 0.0
  %1046 = vmatpush1.msra.mxu0 0.0
  %1047 = vmatprep.subr.mxu0 0.0
  %1048 = vmatpush1.msra.mxu0 0.0
  %1049 = vmatprep.subr.mxu0 0.0
  %1050 = vmatpush1.msra.mxu0 0.0
  %1051 = vmatprep.subr.mxu0 0.0
  %1052 = vmatpush1.msra.mxu0 0.0
  %1053 = vmatprep.subr.mxu0 0.0
  %1054 = vmatpush1.msra.mxu0 0.0
  %1055 = vmatprep.subr.mxu0 0.0
  %1056 = vmatpush1.msra.mxu0 0.0
  %1057 = vmatprep.subr.mxu0 0.0
  %1058 = vmatpush1.msra.mxu0 0.0
  %1059 = vmatprep.subr.mxu0 0.0
  %1060 = vmatpush1.msra.mxu0 0.0
  %1061 = vmatprep.subr.mxu0 0.0
  %1062 = vmatpush1.msra.mxu0 0.0
  %1063 = vmatprep.subr.mxu0 0.0
  %1064 = vmatpush1.msra.mxu0 %v192
  %1065 = vmatprep.subr.mxu0 0.0
  %1066 = vmatpush1.msra.mxu0 %v191
  %1067 = vmatprep.subr.mxu0 0.0
  %1068 = vmatpush1.msra.mxu0 %v190
  %1069 = vmatprep.subr.mxu0 0.0
  %1070 = vmatpush1.msra.mxu0 %v189
  %1071 = vmatprep.subr.mxu0 0.0
  %1072 = vmatpush2.msra.mxu0 0.0
  %1073 = vmatprep.subr.mxu0 0.0
  %1074 = vmatpush2.msra.mxu0 0.0
  %1075 = vmatprep.subr.mxu0 0.0
  %1076 = vmatpush2.msra.mxu0 0.0
  %1077 = vmatprep.subr.mxu0 0.0
  %1078 = vmatpush2.msra.mxu0 0.0
  %1079 = vmatprep.subr.mxu0 0.0
  %1080 = vmatpush2.msra.mxu0 0.0
  %1081 = vmatprep.subr.mxu0 0.0
  %1082 = vmatpush2.msra.mxu0 0.0
  %1083 = vmatprep.subr.mxu0 0.0
  %1084 = vmatpush2.msra.mxu0 0.0
  %1085 = vmatprep.subr.mxu0 0.0
  %1086 = vmatpush2.msra.mxu0 0.0
  %1087 = vmatprep.subr.mxu0 0.0
  %1088 = vmatpush2.msra.mxu0 0.0
  %1089 = vmatprep.subr.mxu0 0.0
  %1090 = vmatpush2.msra.mxu0 0.0
  %1091 = vmatprep.subr.mxu0 0.0
  %1092 = vmatpush2.msra.mxu0 0.0
  %1093 = vmatprep.subr.mxu0 0.0
  %1094 = vmatpush2.msra.mxu0 0.0
  %1095 = vmatprep.subr.mxu0 0.0
  %1096 = vmatpush2.msra.mxu0 0.0
  %1097 = vmatprep.subr.mxu0 0.0
  %1098 = vmatpush2.msra.mxu0 0.0
  %1099 = vmatprep.subr.mxu0 0.0
  %1100 = vmatpush2.msra.mxu0 0.0
  %1101 = vmatprep.subr.mxu0 0.0
  %1102 = vmatpush2.msra.mxu0 0.0
  %1103 = vmatprep.mubr.f32.mxu0 0.0
  %1104 = vmatmul.mubr.f32.gmra.mxu0 %v1037
  %v1105 = vpop.f32.mrf.mxu0
  %v1106 = vadd.f32 0.0, %v1105
  %v1107 = vpop.f32.mrf.mxu0
  %1108 = vdwg.mxu0
  %v1109 = vadd.f32 %v327, %v1106
  %v1110 = vxor.u32 %v1109, 2147483648
  %v1111 = vmul.f32 %v1110, 1.442695
  %v1112 = vpow.pop %v1111
  %v1113 = vadd.f32 %v1112, 1.0
  %v1114 = vrcp.pop %v1113
  %v1115 = vmul.f32 1.0, %v1114
  %v1116 = vtanh.pop %v1109
  %v1117 = vmul.f32 %v1115, %v1027
  %1119 = vrot.lane.b32.xlu0 %v1116, 64
  %v1120 = vpop.permute.xlu0 %1119
  %v1122 = vmul.f32 %v1115, %v1120
  %1124 = vrot.lane.b32.xlu0 %v1122, 32
  %v1125 = vpop.permute.xlu0 %1124
  %v1127 = vadd.f32 %v1117, %v1125
  %v1128 = vtanh.pop %v1127
  %1130 = vrot.lane.b32.xlu0 %v1128, 64
  %v1131 = vpop.permute.xlu0 %1130
  %v1133 = vmul.f32 %v1115, %v1131
  %1135 = vrot.lane.b32.xlu0 %v1133, 32
  %v1136 = vpop.permute.xlu0 %1135
  %1138 = vst.msk [vmem:[%s11] sm:$0xff] %vm200, %v1136
  %1140 = vrot.lane.b32.xlu0 %v1127, 96
  %v1141 = vpop.permute.xlu0 %1140
  %1143 = vst.msk [vmem:[%s12] sm:$0xff] %vm200, %v1141
  %s1144 = scalar_lea.vmem %s3, 32
  %v1145 = vld [vmem:[%s1144] sm:$0xff]
  %v1146 = vld [vmem:[%s1144 + $0x8] sm:$0xff]
  %v1147 = vld [vmem:[%s1144 + $0x10] sm:$0xff]
  %v1148 = vld [vmem:[%s1144 + $0x18] sm:$0xff]
  %s1149 = scalar_lea.vmem %s4, 32
  %v1150 = vld [vmem:[%s1149] sm:$0xff]
  %v1151 = vld [vmem:[%s1149 + $0x8] sm:$0xff]
  %v1152 = vld [vmem:[%s1149 + $0x10] sm:$0xff]
  %v1153 = vld [vmem:[%s1149 + $0x18] sm:$0xff]
  %s1154 = scalar_lea.vmem %s5, 1
  %v1155 = vld [vmem:[%s1154] sm:$0x1]
  %v1157 = vlaneseq
  %v1158 = vshrl.u32 %v1157, 7
  %v1159 = vsub.s32 0, %v1158
  %v1160 = vrot.slane %v1155, %v1159
  %v1162 = vsel %vm200, %v1136, 0
  %1164 = vmatprep.subr.mxu0 0.0
  %1165 = vmatpush1.msra.mxu0 0.0
  %1166 = vmatprep.subr.mxu0 0.0
  %1167 = vmatpush1.msra.mxu0 0.0
  %1168 = vmatprep.subr.mxu0 0.0
  %1169 = vmatpush1.msra.mxu0 0.0
  %1170 = vmatprep.subr.mxu0 0.0
  %1171 = vmatpush1.msra.mxu0 0.0
  %1172 = vmatprep.subr.mxu0 0.0
  %1173 = vmatpush1.msra.mxu0 0.0
  %1174 = vmatprep.subr.mxu0 0.0
  %1175 = vmatpush1.msra.mxu0 0.0
  %1176 = vmatprep.subr.mxu0 0.0
  %1177 = vmatpush1.msra.mxu0 0.0
  %1178 = vmatprep.subr.mxu0 0.0
  %1179 = vmatpush1.msra.mxu0 0.0
  %1180 = vmatprep.subr.mxu0 0.0
  %1181 = vmatpush1.msra.mxu0 0.0
  %1182 = vmatprep.subr.mxu0 0.0
  %1183 = vmatpush1.msra.mxu0 0.0
  %1184 = vmatprep.subr.mxu0 0.0
  %1185 = vmatpush1.msra.mxu0 0.0
  %1186 = vmatprep.subr.mxu0 0.0
  %1187 = vmatpush1.msra.mxu0 0.0
  %1188 = vmatprep.subr.mxu0 0.0
  %1189 = vmatpush1.msra.mxu0 %v1148
  %1190 = vmatprep.subr.mxu0 0.0
  %1191 = vmatpush1.msra.mxu0 %v1147
  %1192 = vmatprep.subr.mxu0 0.0
  %1193 = vmatpush1.msra.mxu0 %v1146
  %1194 = vmatprep.subr.mxu0 0.0
  %1195 = vmatpush1.msra.mxu0 %v1145
  %1196 = vmatprep.subr.mxu0 0.0
  %1197 = vmatpush2.msra.mxu0 0.0
  %1198 = vmatprep.subr.mxu0 0.0
  %1199 = vmatpush2.msra.mxu0 0.0
  %1200 = vmatprep.subr.mxu0 0.0
  %1201 = vmatpush2.msra.mxu0 0.0
  %1202 = vmatprep.subr.mxu0 0.0
  %1203 = vmatpush2.msra.mxu0 0.0
  %1204 = vmatprep.subr.mxu0 0.0
  %1205 = vmatpush2.msra.mxu0 0.0
  %1206 = vmatprep.subr.mxu0 0.0
  %1207 = vmatpush2.msra.mxu0 0.0
  %1208 = vmatprep.subr.mxu0 0.0
  %1209 = vmatpush2.msra.mxu0 0.0
  %1210 = vmatprep.subr.mxu0 0.0
  %1211 = vmatpush2.msra.mxu0 0.0
  %1212 = vmatprep.subr.mxu0 0.0
  %1213 = vmatpush2.msra.mxu0 0.0
  %1214 = vmatprep.subr.mxu0 0.0
  %1215 = vmatpush2.msra.mxu0 0.0
  %1216 = vmatprep.subr.mxu0 0.0
  %1217 = vmatpush2.msra.mxu0 0.0
  %1218 = vmatprep.subr.mxu0 0.0
  %1219 = vmatpush2.msra.mxu0 0.0
  %1220 = vmatprep.subr.mxu0 0.0
  %1221 = vmatpush2.msra.mxu0 0.0
  %1222 = vmatprep.subr.mxu0 0.0
  %1223 = vmatpush2.msra.mxu0 0.0
  %1224 = vmatprep.subr.mxu0 0.0
  %1225 = vmatpush2.msra.mxu0 0.0
  %1226 = vmatprep.subr.mxu0 0.0
  %1227 = vmatpush2.msra.mxu0 0.0
  %1228 = vmatprep.mubr.f32.mxu0 0.0
  %1229 = vmatmul.mubr.f32.gmra.mxu0 %v437
  %v1230 = vpop.f32.mrf.mxu0
  %v1231 = vadd.f32 %v1160, %v1230
  %v1232 = vpop.f32.mrf.mxu0
  %1233 = vmatprep.mubr.f32.mxu0 0.0
  %1234 = vmatmul.mubr.f32.gmra.mxu0 %v537
  %v1235 = vpop.f32.mrf.mxu0
  %v1236 = vadd.f32 %v1160, %v1235
  %v1237 = vpop.f32.mrf.mxu0
  %1238 = vmatprep.mubr.f32.mxu0 0.0
  %1239 = vmatmul.mubr.f32.gmra.mxu0 %v637
  %v1240 = vpop.f32.mrf.mxu0
  %v1241 = vadd.f32 %v1160, %v1240
  %v1242 = vpop.f32.mrf.mxu0
  %1243 = vmatprep.mubr.f32.mxu0 0.0
  %1244 = vmatmul.mubr.f32.gmra.mxu0 %v737
  %v1245 = vpop.f32.mrf.mxu0
  %v1246 = vadd.f32 %v1160, %v1245
  %v1247 = vpop.f32.mrf.mxu0
  %1248 = vmatprep.mubr.f32.mxu0 0.0
  %1249 = vmatmul.mubr.f32.gmra.mxu0 %v837
  %v1250 = vpop.f32.mrf.mxu0
  %v1251 = vadd.f32 %v1160, %v1250
  %v1252 = vpop.f32.mrf.mxu0
  %1253 = vmatprep.mubr.f32.mxu0 0.0
  %1254 = vmatmul.mubr.f32.gmra.mxu0 %v937
  %v1255 = vpop.f32.mrf.mxu0
  %v1256 = vadd.f32 %v1160, %v1255
  %v1257 = vpop.f32.mrf.mxu0
  %1258 = vmatprep.mubr.f32.mxu0 0.0
  %1259 = vmatmul.mubr.f32.gmra.mxu0 %v1037
  %v1260 = vpop.f32.mrf.mxu0
  %v1261 = vadd.f32 %v1160, %v1260
  %v1262 = vpop.f32.mrf.mxu0
  %1263 = vmatprep.mubr.f32.mxu0 0.0
  %1264 = vmatmul.mubr.f32.gmra.mxu0 %v1162
  %v1265 = vpop.f32.mrf.mxu0
  %v1266 = vadd.f32 %v1160, %v1265
  %v1267 = vpop.f32.mrf.mxu0
  %1268 = vdwg.mxu0
  %s1269 = scalar_lea.vmem %s6, 8
  %v1270 = vld [vmem:[%s1269] sm:$0xff]
  %s1271 = scalar_lea.vmem %s7, 8
  %v1272 = vld [vmem:[%s1271] sm:$0xff]
  %v1274 = vsel %vm200, %v1270, 0
  %1276 = vmatprep.subr.mxu0 0.0
  %1277 = vmatpush1.msra.mxu0 0.0
  %1278 = vmatprep.subr.mxu0 0.0
  %1279 = vmatpush1.msra.mxu0 0.0
  %1280 = vmatprep.subr.mxu0 0.0
  %1281 = vmatpush1.msra.mxu0 0.0
  %1282 = vmatprep.subr.mxu0 0.0
  %1283 = vmatpush1.msra.mxu0 0.0
  %1284 = vmatprep.subr.mxu0 0.0
  %1285 = vmatpush1.msra.mxu0 0.0
  %1286 = vmatprep.subr.mxu0 0.0
  %1287 = vmatpush1.msra.mxu0 0.0
  %1288 = vmatprep.subr.mxu0 0.0
  %1289 = vmatpush1.msra.mxu0 0.0
  %1290 = vmatprep.subr.mxu0 0.0
  %1291 = vmatpush1.msra.mxu0 0.0
  %1292 = vmatprep.subr.mxu0 0.0
  %1293 = vmatpush1.msra.mxu0 0.0
  %1294 = vmatprep.subr.mxu0 0.0
  %1295 = vmatpush1.msra.mxu0 0.0
  %1296 = vmatprep.subr.mxu0 0.0
  %1297 = vmatpush1.msra.mxu0 0.0
  %1298 = vmatprep.subr.mxu0 0.0
  %1299 = vmatpush1.msra.mxu0 0.0
  %1300 = vmatprep.subr.mxu0 0.0
  %1301 = vmatpush1.msra.mxu0 %v1153
  %1302 = vmatprep.subr.mxu0 0.0
  %1303 = vmatpush1.msra.mxu0 %v1152
  %1304 = vmatprep.subr.mxu0 0.0
  %1305 = vmatpush1.msra.mxu0 %v1151
  %1306 = vmatprep.subr.mxu0 0.0
  %1307 = vmatpush1.msra.mxu0 %v1150
  %1308 = vmatprep.subr.mxu0 0.0
  %1309 = vmatpush2.msra.mxu0 0.0
  %1310 = vmatprep.subr.mxu0 0.0
  %1311 = vmatpush2.msra.mxu0 0.0
  %1312 = vmatprep.subr.mxu0 0.0
  %1313 = vmatpush2.msra.mxu0 0.0
  %1314 = vmatprep.subr.mxu0 0.0
  %1315 = vmatpush2.msra.mxu0 0.0
  %1316 = vmatprep.subr.mxu0 0.0
  %1317 = vmatpush2.msra.mxu0 0.0
  %1318 = vmatprep.subr.mxu0 0.0
  %1319 = vmatpush2.msra.mxu0 0.0
  %1320 = vmatprep.subr.mxu0 0.0
  %1321 = vmatpush2.msra.mxu0 0.0
  %1322 = vmatprep.subr.mxu0 0.0
  %1323 = vmatpush2.msra.mxu0 0.0
  %1324 = vmatprep.subr.mxu0 0.0
  %1325 = vmatpush2.msra.mxu0 0.0
  %1326 = vmatprep.subr.mxu0 0.0
  %1327 = vmatpush2.msra.mxu0 0.0
  %1328 = vmatprep.subr.mxu0 0.0
  %1329 = vmatpush2.msra.mxu0 0.0
  %1330 = vmatprep.subr.mxu0 0.0
  %1331 = vmatpush2.msra.mxu0 0.0
  %1332 = vmatprep.subr.mxu0 0.0
  %1333 = vmatpush2.msra.mxu0 0.0
  %1334 = vmatprep.subr.mxu0 0.0
  %1335 = vmatpush2.msra.mxu0 0.0
  %1336 = vmatprep.subr.mxu0 0.0
  %1337 = vmatpush2.msra.mxu0 0.0
  %1338 = vmatprep.subr.mxu0 0.0
  %1339 = vmatpush2.msra.mxu0 0.0
  %1340 = vmatprep.mubr.f32.mxu0 0.0
  %1341 = vmatmul.mubr.f32.gmra.mxu0 %v1274
  %v1342 = vpop.f32.mrf.mxu0
  %v1343 = vadd.f32 0.0, %v1342
  %v1344 = vpop.f32.mrf.mxu0
  %1345 = vdwg.mxu0
  %v1346 = vadd.f32 %v1231, %v1343
  %v1347 = vxor.u32 %v1346, 2147483648
  %v1348 = vmul.f32 %v1347, 1.442695
  %v1349 = vpow.pop %v1348
  %v1350 = vadd.f32 %v1349, 1.0
  %v1351 = vrcp.pop %v1350
  %v1352 = vmul.f32 1.0, %v1351
  %v1353 = vtanh.pop %v1346
  %1355 = vrot.lane.b32.xlu0 %v1272, 32
  %v1356 = vpop.permute.xlu0 %1355
  %v1358 = vmul.f32 %v1352, %v1356
  %1360 = vrot.lane.b32.xlu0 %v1353, 64
  %v1361 = vpop.permute.xlu0 %1360
  %v1363 = vmul.f32 %v1352, %v1361
  %1365 = vrot.lane.b32.xlu0 %v1363, 32
  %v1366 = vpop.permute.xlu0 %1365
  %v1368 = vadd.f32 %v1358, %v1366
  %v1369 = vtanh.pop %v1368
  %1371 = vrot.lane.b32.xlu0 %v1369, 64
  %v1372 = vpop.permute.xlu0 %1371
  %v1374 = vmul.f32 %v1352, %v1372
  %1376 = vrot.lane.b32.xlu0 %v1374, 32
  %v1377 = vpop.permute.xlu0 %1376
  %v1378 = vsel %vm200, %v1377, 0
  %1380 = vmatprep.subr.mxu0 0.0
  %1381 = vmatpush1.msra.mxu0 0.0
  %1382 = vmatprep.subr.mxu0 0.0
  %1383 = vmatpush1.msra.mxu0 0.0
  %1384 = vmatprep.subr.mxu0 0.0
  %1385 = vmatpush1.msra.mxu0 0.0
  %1386 = vmatprep.subr.mxu0 0.0
  %1387 = vmatpush1.msra.mxu0 0.0
  %1388 = vmatprep.subr.mxu0 0.0
  %1389 = vmatpush1.msra.mxu0 0.0
  %1390 = vmatprep.subr.mxu0 0.0
  %1391 = vmatpush1.msra.mxu0 0.0
  %1392 = vmatprep.subr.mxu0 0.0
  %1393 = vmatpush1.msra.mxu0 0.0
  %1394 = vmatprep.subr.mxu0 0.0
  %1395 = vmatpush1.msra.mxu0 0.0
  %1396 = vmatprep.subr.mxu0 0.0
  %1397 = vmatpush1.msra.mxu0 0.0
  %1398 = vmatprep.subr.mxu0 0.0
  %1399 = vmatpush1.msra.mxu0 0.0
  %1400 = vmatprep.subr.mxu0 0.0
  %1401 = vmatpush1.msra.mxu0 0.0
  %1402 = vmatprep.subr.mxu0 0.0
  %1403 = vmatpush1.msra.mxu0 0.0
  %1404 = vmatprep.subr.mxu0 0.0
  %1405 = vmatpush1.msra.mxu0 %v1153
  %1406 = vmatprep.subr.mxu0 0.0
  %1407 = vmatpush1.msra.mxu0 %v1152
  %1408 = vmatprep.subr.mxu0 0.0
  %1409 = vmatpush1.msra.mxu0 %v1151
  %1410 = vmatprep.subr.mxu0 0.0
  %1411 = vmatpush1.msra.mxu0 %v1150
  %1412 = vmatprep.subr.mxu0 0.0
  %1413 = vmatpush2.msra.mxu0 0.0
  %1414 = vmatprep.subr.mxu0 0.0
  %1415 = vmatpush2.msra.mxu0 0.0
  %1416 = vmatprep.subr.mxu0 0.0
  %1417 = vmatpush2.msra.mxu0 0.0
  %1418 = vmatprep.subr.mxu0 0.0
  %1419 = vmatpush2.msra.mxu0 0.0
  %1420 = vmatprep.subr.mxu0 0.0
  %1421 = vmatpush2.msra.mxu0 0.0
  %1422 = vmatprep.subr.mxu0 0.0
  %1423 = vmatpush2.msra.mxu0 0.0
  %1424 = vmatprep.subr.mxu0 0.0
  %1425 = vmatpush2.msra.mxu0 0.0
  %1426 = vmatprep.subr.mxu0 0.0
  %1427 = vmatpush2.msra.mxu0 0.0
  %1428 = vmatprep.subr.mxu0 0.0
  %1429 = vmatpush2.msra.mxu0 0.0
  %1430 = vmatprep.subr.mxu0 0.0
  %1431 = vmatpush2.msra.mxu0 0.0
  %1432 = vmatprep.subr.mxu0 0.0
  %1433 = vmatpush2.msra.mxu0 0.0
  %1434 = vmatprep.subr.mxu0 0.0
  %1435 = vmatpush2.msra.mxu0 0.0
  %1436 = vmatprep.subr.mxu0 0.0
  %1437 = vmatpush2.msra.mxu0 0.0
  %1438 = vmatprep.subr.mxu0 0.0
  %1439 = vmatpush2.msra.mxu0 0.0
  %1440 = vmatprep.subr.mxu0 0.0
  %1441 = vmatpush2.msra.mxu0 0.0
  %1442 = vmatprep.subr.mxu0 0.0
  %1443 = vmatpush2.msra.mxu0 0.0
  %1444 = vmatprep.mubr.f32.mxu0 0.0
  %1445 = vmatmul.mubr.f32.gmra.mxu0 %v1378
  %v1446 = vpop.f32.mrf.mxu0
  %v1447 = vadd.f32 0.0, %v1446
  %v1448 = vpop.f32.mrf.mxu0
  %1449 = vdwg.mxu0
  %v1450 = vadd.f32 %v1236, %v1447
  %v1451 = vxor.u32 %v1450, 2147483648
  %v1452 = vmul.f32 %v1451, 1.442695
  %v1453 = vpow.pop %v1452
  %v1454 = vadd.f32 %v1453, 1.0
  %v1455 = vrcp.pop %v1454
  %v1456 = vmul.f32 1.0, %v1455
  %v1457 = vtanh.pop %v1450
  %v1458 = vmul.f32 %v1456, %v1368
  %1460 = vrot.lane.b32.xlu0 %v1457, 64
  %v1461 = vpop.permute.xlu0 %1460
  %v1463 = vmul.f32 %v1456, %v1461
  %1465 = vrot.lane.b32.xlu0 %v1463, 32
  %v1466 = vpop.permute.xlu0 %1465
  %v1468 = vadd.f32 %v1458, %v1466
  %v1469 = vtanh.pop %v1468
  %1471 = vrot.lane.b32.xlu0 %v1469, 64
  %v1472 = vpop.permute.xlu0 %1471
  %v1474 = vmul.f32 %v1456, %v1472
  %1476 = vrot.lane.b32.xlu0 %v1474, 32
  %v1477 = vpop.permute.xlu0 %1476
  %v1478 = vsel %vm200, %v1477, 0
  %1480 = vmatprep.subr.mxu0 0.0
  %1481 = vmatpush1.msra.mxu0 0.0
  %1482 = vmatprep.subr.mxu0 0.0
  %1483 = vmatpush1.msra.mxu0 0.0
  %1484 = vmatprep.subr.mxu0 0.0
  %1485 = vmatpush1.msra.mxu0 0.0
  %1486 = vmatprep.subr.mxu0 0.0
  %1487 = vmatpush1.msra.mxu0 0.0
  %1488 = vmatprep.subr.mxu0 0.0
  %1489 = vmatpush1.msra.mxu0 0.0
  %1490 = vmatprep.subr.mxu0 0.0
  %1491 = vmatpush1.msra.mxu0 0.0
  %1492 = vmatprep.subr.mxu0 0.0
  %1493 = vmatpush1.msra.mxu0 0.0
  %1494 = vmatprep.subr.mxu0 0.0
  %1495 = vmatpush1.msra.mxu0 0.0
  %1496 = vmatprep.subr.mxu0 0.0
  %1497 = vmatpush1.msra.mxu0 0.0
  %1498 = vmatprep.subr.mxu0 0.0
  %1499 = vmatpush1.msra.mxu0 0.0
  %1500 = vmatprep.subr.mxu0 0.0
  %1501 = vmatpush1.msra.mxu0 0.0
  %1502 = vmatprep.subr.mxu0 0.0
  %1503 = vmatpush1.msra.mxu0 0.0
  %1504 = vmatprep.subr.mxu0 0.0
  %1505 = vmatpush1.msra.mxu0 %v1153
  %1506 = vmatprep.subr.mxu0 0.0
  %1507 = vmatpush1.msra.mxu0 %v1152
  %1508 = vmatprep.subr.mxu0 0.0
  %1509 = vmatpush1.msra.mxu0 %v1151
  %1510 = vmatprep.subr.mxu0 0.0
  %1511 = vmatpush1.msra.mxu0 %v1150
  %1512 = vmatprep.subr.mxu0 0.0
  %1513 = vmatpush2.msra.mxu0 0.0
  %1514 = vmatprep.subr.mxu0 0.0
  %1515 = vmatpush2.msra.mxu0 0.0
  %1516 = vmatprep.subr.mxu0 0.0
  %1517 = vmatpush2.msra.mxu0 0.0
  %1518 = vmatprep.subr.mxu0 0.0
  %1519 = vmatpush2.msra.mxu0 0.0
  %1520 = vmatprep.subr.mxu0 0.0
  %1521 = vmatpush2.msra.mxu0 0.0
  %1522 = vmatprep.subr.mxu0 0.0
  %1523 = vmatpush2.msra.mxu0 0.0
  %1524 = vmatprep.subr.mxu0 0.0
  %1525 = vmatpush2.msra.mxu0 0.0
  %1526 = vmatprep.subr.mxu0 0.0
  %1527 = vmatpush2.msra.mxu0 0.0
  %1528 = vmatprep.subr.mxu0 0.0
  %1529 = vmatpush2.msra.mxu0 0.0
  %1530 = vmatprep.subr.mxu0 0.0
  %1531 = vmatpush2.msra.mxu0 0.0
  %1532 = vmatprep.subr.mxu0 0.0
  %1533 = vmatpush2.msra.mxu0 0.0
  %1534 = vmatprep.subr.mxu0 0.0
  %1535 = vmatpush2.msra.mxu0 0.0
  %1536 = vmatprep.subr.mxu0 0.0
  %1537 = vmatpush2.msra.mxu0 0.0
  %1538 = vmatprep.subr.mxu0 0.0
  %1539 = vmatpush2.msra.mxu0 0.0
  %1540 = vmatprep.subr.mxu0 0.0
  %1541 = vmatpush2.msra.mxu0 0.0
  %1542 = vmatprep.subr.mxu0 0.0
  %1543 = vmatpush2.msra.mxu0 0.0
  %1544 = vmatprep.mubr.f32.mxu0 0.0
  %1545 = vmatmul.mubr.f32.gmra.mxu0 %v1478
  %v1546 = vpop.f32.mrf.mxu0
  %v1547 = vadd.f32 0.0, %v1546
  %v1548 = vpop.f32.mrf.mxu0
  %1549 = vdwg.mxu0
  %v1550 = vadd.f32 %v1241, %v1547
  %v1551 = vxor.u32 %v1550, 2147483648
  %v1552 = vmul.f32 %v1551, 1.442695
  %v1553 = vpow.pop %v1552
  %v1554 = vadd.f32 %v1553, 1.0
  %v1555 = vrcp.pop %v1554
  %v1556 = vmul.f32 1.0, %v1555
  %v1557 = vtanh.pop %v1550
  %v1558 = vmul.f32 %v1556, %v1468
  %1560 = vrot.lane.b32.xlu0 %v1557, 64
  %v1561 = vpop.permute.xlu0 %1560
  %v1563 = vmul.f32 %v1556, %v1561
  %1565 = vrot.lane.b32.xlu0 %v1563, 32
  %v1566 = vpop.permute.xlu0 %1565
  %v1568 = vadd.f32 %v1558, %v1566
  %v1569 = vtanh.pop %v1568
  %1571 = vrot.lane.b32.xlu0 %v1569, 64
  %v1572 = vpop.permute.xlu0 %1571
  %v1574 = vmul.f32 %v1556, %v1572
  %1576 = vrot.lane.b32.xlu0 %v1574, 32
  %v1577 = vpop.permute.xlu0 %1576
  %v1578 = vsel %vm200, %v1577, 0
  %1580 = vmatprep.subr.mxu0 0.0
  %1581 = vmatpush1.msra.mxu0 0.0
  %1582 = vmatprep.subr.mxu0 0.0
  %1583 = vmatpush1.msra.mxu0 0.0
  %1584 = vmatprep.subr.mxu0 0.0
  %1585 = vmatpush1.msra.mxu0 0.0
  %1586 = vmatprep.subr.mxu0 0.0
  %1587 = vmatpush1.msra.mxu0 0.0
  %1588 = vmatprep.subr.mxu0 0.0
  %1589 = vmatpush1.msra.mxu0 0.0
  %1590 = vmatprep.subr.mxu0 0.0
  %1591 = vmatpush1.msra.mxu0 0.0
  %1592 = vmatprep.subr.mxu0 0.0
  %1593 = vmatpush1.msra.mxu0 0.0
  %1594 = vmatprep.subr.mxu0 0.0
  %1595 = vmatpush1.msra.mxu0 0.0
  %1596 = vmatprep.subr.mxu0 0.0
  %1597 = vmatpush1.msra.mxu0 0.0
  %1598 = vmatprep.subr.mxu0 0.0
  %1599 = vmatpush1.msra.mxu0 0.0
  %1600 = vmatprep.subr.mxu0 0.0
  %1601 = vmatpush1.msra.mxu0 0.0
  %1602 = vmatprep.subr.mxu0 0.0
  %1603 = vmatpush1.msra.mxu0 0.0
  %1604 = vmatprep.subr.mxu0 0.0
  %1605 = vmatpush1.msra.mxu0 %v1153
  %1606 = vmatprep.subr.mxu0 0.0
  %1607 = vmatpush1.msra.mxu0 %v1152
  %1608 = vmatprep.subr.mxu0 0.0
  %1609 = vmatpush1.msra.mxu0 %v1151
  %1610 = vmatprep.subr.mxu0 0.0
  %1611 = vmatpush1.msra.mxu0 %v1150
  %1612 = vmatprep.subr.mxu0 0.0
  %1613 = vmatpush2.msra.mxu0 0.0
  %1614 = vmatprep.subr.mxu0 0.0
  %1615 = vmatpush2.msra.mxu0 0.0
  %1616 = vmatprep.subr.mxu0 0.0
  %1617 = vmatpush2.msra.mxu0 0.0
  %1618 = vmatprep.subr.mxu0 0.0
  %1619 = vmatpush2.msra.mxu0 0.0
  %1620 = vmatprep.subr.mxu0 0.0
  %1621 = vmatpush2.msra.mxu0 0.0
  %1622 = vmatprep.subr.mxu0 0.0
  %1623 = vmatpush2.msra.mxu0 0.0
  %1624 = vmatprep.subr.mxu0 0.0
  %1625 = vmatpush2.msra.mxu0 0.0
  %1626 = vmatprep.subr.mxu0 0.0
  %1627 = vmatpush2.msra.mxu0 0.0
  %1628 = vmatprep.subr.mxu0 0.0
  %1629 = vmatpush2.msra.mxu0 0.0
  %1630 = vmatprep.subr.mxu0 0.0
  %1631 = vmatpush2.msra.mxu0 0.0
  %1632 = vmatprep.subr.mxu0 0.0
  %1633 = vmatpush2.msra.mxu0 0.0
  %1634 = vmatprep.subr.mxu0 0.0
  %1635 = vmatpush2.msra.mxu0 0.0
  %1636 = vmatprep.subr.mxu0 0.0
  %1637 = vmatpush2.msra.mxu0 0.0
  %1638 = vmatprep.subr.mxu0 0.0
  %1639 = vmatpush2.msra.mxu0 0.0
  %1640 = vmatprep.subr.mxu0 0.0
  %1641 = vmatpush2.msra.mxu0 0.0
  %1642 = vmatprep.subr.mxu0 0.0
  %1643 = vmatpush2.msra.mxu0 0.0
  %1644 = vmatprep.mubr.f32.mxu0 0.0
  %1645 = vmatmul.mubr.f32.gmra.mxu0 %v1578
  %v1646 = vpop.f32.mrf.mxu0
  %v1647 = vadd.f32 0.0, %v1646
  %v1648 = vpop.f32.mrf.mxu0
  %1649 = vdwg.mxu0
  %v1650 = vadd.f32 %v1246, %v1647
  %v1651 = vxor.u32 %v1650, 2147483648
  %v1652 = vmul.f32 %v1651, 1.442695
  %v1653 = vpow.pop %v1652
  %v1654 = vadd.f32 %v1653, 1.0
  %v1655 = vrcp.pop %v1654
  %v1656 = vmul.f32 1.0, %v1655
  %v1657 = vtanh.pop %v1650
  %v1658 = vmul.f32 %v1656, %v1568
  %1660 = vrot.lane.b32.xlu0 %v1657, 64
  %v1661 = vpop.permute.xlu0 %1660
  %v1663 = vmul.f32 %v1656, %v1661
  %1665 = vrot.lane.b32.xlu0 %v1663, 32
  %v1666 = vpop.permute.xlu0 %1665
  %v1668 = vadd.f32 %v1658, %v1666
  %v1669 = vtanh.pop %v1668
  %1671 = vrot.lane.b32.xlu0 %v1669, 64
  %v1672 = vpop.permute.xlu0 %1671
  %v1674 = vmul.f32 %v1656, %v1672
  %1676 = vrot.lane.b32.xlu0 %v1674, 32
  %v1677 = vpop.permute.xlu0 %1676
  %v1678 = vsel %vm200, %v1677, 0
  %1680 = vmatprep.subr.mxu0 0.0
  %1681 = vmatpush1.msra.mxu0 0.0
  %1682 = vmatprep.subr.mxu0 0.0
  %1683 = vmatpush1.msra.mxu0 0.0
  %1684 = vmatprep.subr.mxu0 0.0
  %1685 = vmatpush1.msra.mxu0 0.0
  %1686 = vmatprep.subr.mxu0 0.0
  %1687 = vmatpush1.msra.mxu0 0.0
  %1688 = vmatprep.subr.mxu0 0.0
  %1689 = vmatpush1.msra.mxu0 0.0
  %1690 = vmatprep.subr.mxu0 0.0
  %1691 = vmatpush1.msra.mxu0 0.0
  %1692 = vmatprep.subr.mxu0 0.0
  %1693 = vmatpush1.msra.mxu0 0.0
  %1694 = vmatprep.subr.mxu0 0.0
  %1695 = vmatpush1.msra.mxu0 0.0
  %1696 = vmatprep.subr.mxu0 0.0
  %1697 = vmatpush1.msra.mxu0 0.0
  %1698 = vmatprep.subr.mxu0 0.0
  %1699 = vmatpush1.msra.mxu0 0.0
  %1700 = vmatprep.subr.mxu0 0.0
  %1701 = vmatpush1.msra.mxu0 0.0
  %1702 = vmatprep.subr.mxu0 0.0
  %1703 = vmatpush1.msra.mxu0 0.0
  %1704 = vmatprep.subr.mxu0 0.0
  %1705 = vmatpush1.msra.mxu0 %v1153
  %1706 = vmatprep.subr.mxu0 0.0
  %1707 = vmatpush1.msra.mxu0 %v1152
  %1708 = vmatprep.subr.mxu0 0.0
  %1709 = vmatpush1.msra.mxu0 %v1151
  %1710 = vmatprep.subr.mxu0 0.0
  %1711 = vmatpush1.msra.mxu0 %v1150
  %1712 = vmatprep.subr.mxu0 0.0
  %1713 = vmatpush2.msra.mxu0 0.0
  %1714 = vmatprep.subr.mxu0 0.0
  %1715 = vmatpush2.msra.mxu0 0.0
  %1716 = vmatprep.subr.mxu0 0.0
  %1717 = vmatpush2.msra.mxu0 0.0
  %1718 = vmatprep.subr.mxu0 0.0
  %1719 = vmatpush2.msra.mxu0 0.0
  %1720 = vmatprep.subr.mxu0 0.0
  %1721 = vmatpush2.msra.mxu0 0.0
  %1722 = vmatprep.subr.mxu0 0.0
  %1723 = vmatpush2.msra.mxu0 0.0
  %1724 = vmatprep.subr.mxu0 0.0
  %1725 = vmatpush2.msra.mxu0 0.0
  %1726 = vmatprep.subr.mxu0 0.0
  %1727 = vmatpush2.msra.mxu0 0.0
  %1728 = vmatprep.subr.mxu0 0.0
  %1729 = vmatpush2.msra.mxu0 0.0
  %1730 = vmatprep.subr.mxu0 0.0
  %1731 = vmatpush2.msra.mxu0 0.0
  %1732 = vmatprep.subr.mxu0 0.0
  %1733 = vmatpush2.msra.mxu0 0.0
  %1734 = vmatprep.subr.mxu0 0.0
  %1735 = vmatpush2.msra.mxu0 0.0
  %1736 = vmatprep.subr.mxu0 0.0
  %1737 = vmatpush2.msra.mxu0 0.0
  %1738 = vmatprep.subr.mxu0 0.0
  %1739 = vmatpush2.msra.mxu0 0.0
  %1740 = vmatprep.subr.mxu0 0.0
  %1741 = vmatpush2.msra.mxu0 0.0
  %1742 = vmatprep.subr.mxu0 0.0
  %1743 = vmatpush2.msra.mxu0 0.0
  %1744 = vmatprep.mubr.f32.mxu0 0.0
  %1745 = vmatmul.mubr.f32.gmra.mxu0 %v1678
  %v1746 = vpop.f32.mrf.mxu0
  %v1747 = vadd.f32 0.0, %v1746
  %v1748 = vpop.f32.mrf.mxu0
  %1749 = vdwg.mxu0
  %v1750 = vadd.f32 %v1251, %v1747
  %v1751 = vxor.u32 %v1750, 2147483648
  %v1752 = vmul.f32 %v1751, 1.442695
  %v1753 = vpow.pop %v1752
  %v1754 = vadd.f32 %v1753, 1.0
  %v1755 = vrcp.pop %v1754
  %v1756 = vmul.f32 1.0, %v1755
  %v1757 = vtanh.pop %v1750
  %v1758 = vmul.f32 %v1756, %v1668
  %1760 = vrot.lane.b32.xlu0 %v1757, 64
  %v1761 = vpop.permute.xlu0 %1760
  %v1763 = vmul.f32 %v1756, %v1761
  %1765 = vrot.lane.b32.xlu0 %v1763, 32
  %v1766 = vpop.permute.xlu0 %1765
  %v1768 = vadd.f32 %v1758, %v1766
  %v1769 = vtanh.pop %v1768
  %1771 = vrot.lane.b32.xlu0 %v1769, 64
  %v1772 = vpop.permute.xlu0 %1771
  %v1774 = vmul.f32 %v1756, %v1772
  %1776 = vrot.lane.b32.xlu0 %v1774, 32
  %v1777 = vpop.permute.xlu0 %1776
  %v1778 = vsel %vm200, %v1777, 0
  %1780 = vmatprep.subr.mxu0 0.0
  %1781 = vmatpush1.msra.mxu0 0.0
  %1782 = vmatprep.subr.mxu0 0.0
  %1783 = vmatpush1.msra.mxu0 0.0
  %1784 = vmatprep.subr.mxu0 0.0
  %1785 = vmatpush1.msra.mxu0 0.0
  %1786 = vmatprep.subr.mxu0 0.0
  %1787 = vmatpush1.msra.mxu0 0.0
  %1788 = vmatprep.subr.mxu0 0.0
  %1789 = vmatpush1.msra.mxu0 0.0
  %1790 = vmatprep.subr.mxu0 0.0
  %1791 = vmatpush1.msra.mxu0 0.0
  %1792 = vmatprep.subr.mxu0 0.0
  %1793 = vmatpush1.msra.mxu0 0.0
  %1794 = vmatprep.subr.mxu0 0.0
  %1795 = vmatpush1.msra.mxu0 0.0
  %1796 = vmatprep.subr.mxu0 0.0
  %1797 = vmatpush1.msra.mxu0 0.0
  %1798 = vmatprep.subr.mxu0 0.0
  %1799 = vmatpush1.msra.mxu0 0.0
  %1800 = vmatprep.subr.mxu0 0.0
  %1801 = vmatpush1.msra.mxu0 0.0
  %1802 = vmatprep.subr.mxu0 0.0
  %1803 = vmatpush1.msra.mxu0 0.0
  %1804 = vmatprep.subr.mxu0 0.0
  %1805 = vmatpush1.msra.mxu0 %v1153
  %1806 = vmatprep.subr.mxu0 0.0
  %1807 = vmatpush1.msra.mxu0 %v1152
  %1808 = vmatprep.subr.mxu0 0.0
  %1809 = vmatpush1.msra.mxu0 %v1151
  %1810 = vmatprep.subr.mxu0 0.0
  %1811 = vmatpush1.msra.mxu0 %v1150
  %1812 = vmatprep.subr.mxu0 0.0
  %1813 = vmatpush2.msra.mxu0 0.0
  %1814 = vmatprep.subr.mxu0 0.0
  %1815 = vmatpush2.msra.mxu0 0.0
  %1816 = vmatprep.subr.mxu0 0.0
  %1817 = vmatpush2.msra.mxu0 0.0
  %1818 = vmatprep.subr.mxu0 0.0
  %1819 = vmatpush2.msra.mxu0 0.0
  %1820 = vmatprep.subr.mxu0 0.0
  %1821 = vmatpush2.msra.mxu0 0.0
  %1822 = vmatprep.subr.mxu0 0.0
  %1823 = vmatpush2.msra.mxu0 0.0
  %1824 = vmatprep.subr.mxu0 0.0
  %1825 = vmatpush2.msra.mxu0 0.0
  %1826 = vmatprep.subr.mxu0 0.0
  %1827 = vmatpush2.msra.mxu0 0.0
  %1828 = vmatprep.subr.mxu0 0.0
  %1829 = vmatpush2.msra.mxu0 0.0
  %1830 = vmatprep.subr.mxu0 0.0
  %1831 = vmatpush2.msra.mxu0 0.0
  %1832 = vmatprep.subr.mxu0 0.0
  %1833 = vmatpush2.msra.mxu0 0.0
  %1834 = vmatprep.subr.mxu0 0.0
  %1835 = vmatpush2.msra.mxu0 0.0
  %1836 = vmatprep.subr.mxu0 0.0
  %1837 = vmatpush2.msra.mxu0 0.0
  %1838 = vmatprep.subr.mxu0 0.0
  %1839 = vmatpush2.msra.mxu0 0.0
  %1840 = vmatprep.subr.mxu0 0.0
  %1841 = vmatpush2.msra.mxu0 0.0
  %1842 = vmatprep.subr.mxu0 0.0
  %1843 = vmatpush2.msra.mxu0 0.0
  %1844 = vmatprep.mubr.f32.mxu0 0.0
  %1845 = vmatmul.mubr.f32.gmra.mxu0 %v1778
  %v1846 = vpop.f32.mrf.mxu0
  %v1847 = vadd.f32 0.0, %v1846
  %v1848 = vpop.f32.mrf.mxu0
  %1849 = vdwg.mxu0
  %v1850 = vadd.f32 %v1256, %v1847
  %v1851 = vxor.u32 %v1850, 2147483648
  %v1852 = vmul.f32 %v1851, 1.442695
  %v1853 = vpow.pop %v1852
  %v1854 = vadd.f32 %v1853, 1.0
  %v1855 = vrcp.pop %v1854
  %v1856 = vmul.f32 1.0, %v1855
  %v1857 = vtanh.pop %v1850
  %v1858 = vmul.f32 %v1856, %v1768
  %1860 = vrot.lane.b32.xlu0 %v1857, 64
  %v1861 = vpop.permute.xlu0 %1860
  %v1863 = vmul.f32 %v1856, %v1861
  %1865 = vrot.lane.b32.xlu0 %v1863, 32
  %v1866 = vpop.permute.xlu0 %1865
  %v1868 = vadd.f32 %v1858, %v1866
  %v1869 = vtanh.pop %v1868
  %1871 = vrot.lane.b32.xlu0 %v1869, 64
  %v1872 = vpop.permute.xlu0 %1871
  %v1874 = vmul.f32 %v1856, %v1872
  %1876 = vrot.lane.b32.xlu0 %v1874, 32
  %v1877 = vpop.permute.xlu0 %1876
  %v1878 = vsel %vm200, %v1877, 0
  %1880 = vmatprep.subr.mxu0 0.0
  %1881 = vmatpush1.msra.mxu0 0.0
  %1882 = vmatprep.subr.mxu0 0.0
  %1883 = vmatpush1.msra.mxu0 0.0
  %1884 = vmatprep.subr.mxu0 0.0
  %1885 = vmatpush1.msra.mxu0 0.0
  %1886 = vmatprep.subr.mxu0 0.0
  %1887 = vmatpush1.msra.mxu0 0.0
  %1888 = vmatprep.subr.mxu0 0.0
  %1889 = vmatpush1.msra.mxu0 0.0
  %1890 = vmatprep.subr.mxu0 0.0
  %1891 = vmatpush1.msra.mxu0 0.0
  %1892 = vmatprep.subr.mxu0 0.0
  %1893 = vmatpush1.msra.mxu0 0.0
  %1894 = vmatprep.subr.mxu0 0.0
  %1895 = vmatpush1.msra.mxu0 0.0
  %1896 = vmatprep.subr.mxu0 0.0
  %1897 = vmatpush1.msra.mxu0 0.0
  %1898 = vmatprep.subr.mxu0 0.0
  %1899 = vmatpush1.msra.mxu0 0.0
  %1900 = vmatprep.subr.mxu0 0.0
  %1901 = vmatpush1.msra.mxu0 0.0
  %1902 = vmatprep.subr.mxu0 0.0
  %1903 = vmatpush1.msra.mxu0 0.0
  %1904 = vmatprep.subr.mxu0 0.0
  %1905 = vmatpush1.msra.mxu0 %v1153
  %1906 = vmatprep.subr.mxu0 0.0
  %1907 = vmatpush1.msra.mxu0 %v1152
  %1908 = vmatprep.subr.mxu0 0.0
  %1909 = vmatpush1.msra.mxu0 %v1151
  %1910 = vmatprep.subr.mxu0 0.0
  %1911 = vmatpush1.msra.mxu0 %v1150
  %1912 = vmatprep.subr.mxu0 0.0
  %1913 = vmatpush2.msra.mxu0 0.0
  %1914 = vmatprep.subr.mxu0 0.0
  %1915 = vmatpush2.msra.mxu0 0.0
  %1916 = vmatprep.subr.mxu0 0.0
  %1917 = vmatpush2.msra.mxu0 0.0
  %1918 = vmatprep.subr.mxu0 0.0
  %1919 = vmatpush2.msra.mxu0 0.0
  %1920 = vmatprep.subr.mxu0 0.0
  %1921 = vmatpush2.msra.mxu0 0.0
  %1922 = vmatprep.subr.mxu0 0.0
  %1923 = vmatpush2.msra.mxu0 0.0
  %1924 = vmatprep.subr.mxu0 0.0
  %1925 = vmatpush2.msra.mxu0 0.0
  %1926 = vmatprep.subr.mxu0 0.0
  %1927 = vmatpush2.msra.mxu0 0.0
  %1928 = vmatprep.subr.mxu0 0.0
  %1929 = vmatpush2.msra.mxu0 0.0
  %1930 = vmatprep.subr.mxu0 0.0
  %1931 = vmatpush2.msra.mxu0 0.0
  %1932 = vmatprep.subr.mxu0 0.0
  %1933 = vmatpush2.msra.mxu0 0.0
  %1934 = vmatprep.subr.mxu0 0.0
  %1935 = vmatpush2.msra.mxu0 0.0
  %1936 = vmatprep.subr.mxu0 0.0
  %1937 = vmatpush2.msra.mxu0 0.0
  %1938 = vmatprep.subr.mxu0 0.0
  %1939 = vmatpush2.msra.mxu0 0.0
  %1940 = vmatprep.subr.mxu0 0.0
  %1941 = vmatpush2.msra.mxu0 0.0
  %1942 = vmatprep.subr.mxu0 0.0
  %1943 = vmatpush2.msra.mxu0 0.0
  %1944 = vmatprep.mubr.f32.mxu0 0.0
  %1945 = vmatmul.mubr.f32.gmra.mxu0 %v1878
  %v1946 = vpop.f32.mrf.mxu0
  %v1947 = vadd.f32 0.0, %v1946
  %v1948 = vpop.f32.mrf.mxu0
  %1949 = vdwg.mxu0
  %v1950 = vadd.f32 %v1261, %v1947
  %v1951 = vxor.u32 %v1950, 2147483648
  %v1952 = vmul.f32 %v1951, 1.442695
  %v1953 = vpow.pop %v1952
  %v1954 = vadd.f32 %v1953, 1.0
  %v1955 = vrcp.pop %v1954
  %v1956 = vmul.f32 1.0, %v1955
  %v1957 = vtanh.pop %v1950
  %v1958 = vmul.f32 %v1956, %v1868
  %1960 = vrot.lane.b32.xlu0 %v1957, 64
  %v1961 = vpop.permute.xlu0 %1960
  %v1963 = vmul.f32 %v1956, %v1961
  %1965 = vrot.lane.b32.xlu0 %v1963, 32
  %v1966 = vpop.permute.xlu0 %1965
  %v1968 = vadd.f32 %v1958, %v1966
  %v1969 = vtanh.pop %v1968
  %1971 = vrot.lane.b32.xlu0 %v1969, 64
  %v1972 = vpop.permute.xlu0 %1971
  %v1974 = vmul.f32 %v1956, %v1972
  %1976 = vrot.lane.b32.xlu0 %v1974, 32
  %v1977 = vpop.permute.xlu0 %1976
  %v1978 = vsel %vm200, %v1977, 0
  %1980 = vmatprep.subr.mxu0 0.0
  %1981 = vmatpush1.msra.mxu0 0.0
  %1982 = vmatprep.subr.mxu0 0.0
  %1983 = vmatpush1.msra.mxu0 0.0
  %1984 = vmatprep.subr.mxu0 0.0
  %1985 = vmatpush1.msra.mxu0 0.0
  %1986 = vmatprep.subr.mxu0 0.0
  %1987 = vmatpush1.msra.mxu0 0.0
  %1988 = vmatprep.subr.mxu0 0.0
  %1989 = vmatpush1.msra.mxu0 0.0
  %1990 = vmatprep.subr.mxu0 0.0
  %1991 = vmatpush1.msra.mxu0 0.0
  %1992 = vmatprep.subr.mxu0 0.0
  %1993 = vmatpush1.msra.mxu0 0.0
  %1994 = vmatprep.subr.mxu0 0.0
  %1995 = vmatpush1.msra.mxu0 0.0
  %1996 = vmatprep.subr.mxu0 0.0
  %1997 = vmatpush1.msra.mxu0 0.0
  %1998 = vmatprep.subr.mxu0 0.0
  %1999 = vmatpush1.msra.mxu0 0.0
  %2000 = vmatprep.subr.mxu0 0.0
  %2001 = vmatpush1.msra.mxu0 0.0
  %2002 = vmatprep.subr.mxu0 0.0
  %2003 = vmatpush1.msra.mxu0 0.0
  %2004 = vmatprep.subr.mxu0 0.0
  %2005 = vmatpush1.msra.mxu0 %v1153
  %2006 = vmatprep.subr.mxu0 0.0
  %2007 = vmatpush1.msra.mxu0 %v1152
  %2008 = vmatprep.subr.mxu0 0.0
  %2009 = vmatpush1.msra.mxu0 %v1151
  %2010 = vmatprep.subr.mxu0 0.0
  %2011 = vmatpush1.msra.mxu0 %v1150
  %2012 = vmatprep.subr.mxu0 0.0
  %2013 = vmatpush2.msra.mxu0 0.0
  %2014 = vmatprep.subr.mxu0 0.0
  %2015 = vmatpush2.msra.mxu0 0.0
  %2016 = vmatprep.subr.mxu0 0.0
  %2017 = vmatpush2.msra.mxu0 0.0
  %2018 = vmatprep.subr.mxu0 0.0
  %2019 = vmatpush2.msra.mxu0 0.0
  %2020 = vmatprep.subr.mxu0 0.0
  %2021 = vmatpush2.msra.mxu0 0.0
  %2022 = vmatprep.subr.mxu0 0.0
  %2023 = vmatpush2.msra.mxu0 0.0
  %2024 = vmatprep.subr.mxu0 0.0
  %2025 = vmatpush2.msra.mxu0 0.0
  %2026 = vmatprep.subr.mxu0 0.0
  %2027 = vmatpush2.msra.mxu0 0.0
  %2028 = vmatprep.subr.mxu0 0.0
  %2029 = vmatpush2.msra.mxu0 0.0
  %2030 = vmatprep.subr.mxu0 0.0
  %2031 = vmatpush2.msra.mxu0 0.0
  %2032 = vmatprep.subr.mxu0 0.0
  %2033 = vmatpush2.msra.mxu0 0.0
  %2034 = vmatprep.subr.mxu0 0.0
  %2035 = vmatpush2.msra.mxu0 0.0
  %2036 = vmatprep.subr.mxu0 0.0
  %2037 = vmatpush2.msra.mxu0 0.0
  %2038 = vmatprep.subr.mxu0 0.0
  %2039 = vmatpush2.msra.mxu0 0.0
  %2040 = vmatprep.subr.mxu0 0.0
  %2041 = vmatpush2.msra.mxu0 0.0
  %2042 = vmatprep.subr.mxu0 0.0
  %2043 = vmatpush2.msra.mxu0 0.0
  %2044 = vmatprep.mubr.f32.mxu0 0.0
  %2045 = vmatmul.mubr.f32.gmra.mxu0 %v1978
  %v2046 = vpop.f32.mrf.mxu0
  %v2047 = vadd.f32 0.0, %v2046
  %v2048 = vpop.f32.mrf.mxu0
  %2049 = vdwg.mxu0
  %v2050 = vadd.f32 %v1266, %v2047
  %v2051 = vxor.u32 %v2050, 2147483648
  %v2052 = vmul.f32 %v2051, 1.442695
  %v2053 = vpow.pop %v2052
  %v2054 = vadd.f32 %v2053, 1.0
  %v2055 = vrcp.pop %v2054
  %v2056 = vmul.f32 1.0, %v2055
  %v2057 = vtanh.pop %v2050
  %v2058 = vmul.f32 %v2056, %v1968
  %2060 = vrot.lane.b32.xlu0 %v2057, 64
  %v2061 = vpop.permute.xlu0 %2060
  %v2063 = vmul.f32 %v2056, %v2061
  %2065 = vrot.lane.b32.xlu0 %v2063, 32
  %v2066 = vpop.permute.xlu0 %2065
  %v2068 = vadd.f32 %v2058, %v2066
  %v2069 = vtanh.pop %v2068
  %2071 = vrot.lane.b32.xlu0 %v2069, 64
  %v2072 = vpop.permute.xlu0 %2071
  %v2074 = vmul.f32 %v2056, %v2072
  %2076 = vrot.lane.b32.xlu0 %v2074, 32
  %v2077 = vpop.permute.xlu0 %2076
  %s2079 = scalar_lea.vmem %s11, 8
  %2080 = vst.msk [vmem:[%s2079] sm:$0xff] %vm200, %v2077
  %2082 = vrot.lane.b32.xlu0 %v2068, 96
  %v2083 = vpop.permute.xlu0 %2082
  %s2085 = scalar_lea.vmem %s12, 8
  %2086 = vst.msk [vmem:[%s2085] sm:$0xff] %vm200, %v2083
  %s2087 = scalar_lea.vmem %s3, 64
  %v2088 = vld [vmem:[%s2087] sm:$0xff]
  %v2089 = vld [vmem:[%s2087 + $0x8] sm:$0xff]
  %v2090 = vld [vmem:[%s2087 + $0x10] sm:$0xff]
  %v2091 = vld [vmem:[%s2087 + $0x18] sm:$0xff]
  %s2092 = scalar_lea.vmem %s4, 64
  %v2093 = vld [vmem:[%s2092] sm:$0xff]
  %v2094 = vld [vmem:[%s2092 + $0x8] sm:$0xff]
  %v2095 = vld [vmem:[%s2092 + $0x10] sm:$0xff]
  %v2096 = vld [vmem:[%s2092 + $0x18] sm:$0xff]
  %s2097 = scalar_lea.vmem %s5, 2
  %v2098 = vld [vmem:[%s2097] sm:$0x1]
  %v2100 = vlaneseq
  %v2101 = vshrl.u32 %v2100, 7
  %v2102 = vsub.s32 0, %v2101
  %v2103 = vrot.slane %v2098, %v2102
  %v2105 = vsel %vm200, %v2077, 0
  %2107 = vmatprep.subr.mxu0 0.0
  %2108 = vmatpush1.msra.mxu0 0.0
  %2109 = vmatprep.subr.mxu0 0.0
  %2110 = vmatpush1.msra.mxu0 0.0
  %2111 = vmatprep.subr.mxu0 0.0
  %2112 = vmatpush1.msra.mxu0 0.0
  %2113 = vmatprep.subr.mxu0 0.0
  %2114 = vmatpush1.msra.mxu0 0.0
  %2115 = vmatprep.subr.mxu0 0.0
  %2116 = vmatpush1.msra.mxu0 0.0
  %2117 = vmatprep.subr.mxu0 0.0
  %2118 = vmatpush1.msra.mxu0 0.0
  %2119 = vmatprep.subr.mxu0 0.0
  %2120 = vmatpush1.msra.mxu0 0.0
  %2121 = vmatprep.subr.mxu0 0.0
  %2122 = vmatpush1.msra.mxu0 0.0
  %2123 = vmatprep.subr.mxu0 0.0
  %2124 = vmatpush1.msra.mxu0 0.0
  %2125 = vmatprep.subr.mxu0 0.0
  %2126 = vmatpush1.msra.mxu0 0.0
  %2127 = vmatprep.subr.mxu0 0.0
  %2128 = vmatpush1.msra.mxu0 0.0
  %2129 = vmatprep.subr.mxu0 0.0
  %2130 = vmatpush1.msra.mxu0 0.0
  %2131 = vmatprep.subr.mxu0 0.0
  %2132 = vmatpush1.msra.mxu0 %v2091
  %2133 = vmatprep.subr.mxu0 0.0
  %2134 = vmatpush1.msra.mxu0 %v2090
  %2135 = vmatprep.subr.mxu0 0.0
  %2136 = vmatpush1.msra.mxu0 %v2089
  %2137 = vmatprep.subr.mxu0 0.0
  %2138 = vmatpush1.msra.mxu0 %v2088
  %2139 = vmatprep.subr.mxu0 0.0
  %2140 = vmatpush2.msra.mxu0 0.0
  %2141 = vmatprep.subr.mxu0 0.0
  %2142 = vmatpush2.msra.mxu0 0.0
  %2143 = vmatprep.subr.mxu0 0.0
  %2144 = vmatpush2.msra.mxu0 0.0
  %2145 = vmatprep.subr.mxu0 0.0
  %2146 = vmatpush2.msra.mxu0 0.0
  %2147 = vmatprep.subr.mxu0 0.0
  %2148 = vmatpush2.msra.mxu0 0.0
  %2149 = vmatprep.subr.mxu0 0.0
  %2150 = vmatpush2.msra.mxu0 0.0
  %2151 = vmatprep.subr.mxu0 0.0
  %2152 = vmatpush2.msra.mxu0 0.0
  %2153 = vmatprep.subr.mxu0 0.0
  %2154 = vmatpush2.msra.mxu0 0.0
  %2155 = vmatprep.subr.mxu0 0.0
  %2156 = vmatpush2.msra.mxu0 0.0
  %2157 = vmatprep.subr.mxu0 0.0
  %2158 = vmatpush2.msra.mxu0 0.0
  %2159 = vmatprep.subr.mxu0 0.0
  %2160 = vmatpush2.msra.mxu0 0.0
  %2161 = vmatprep.subr.mxu0 0.0
  %2162 = vmatpush2.msra.mxu0 0.0
  %2163 = vmatprep.subr.mxu0 0.0
  %2164 = vmatpush2.msra.mxu0 0.0
  %2165 = vmatprep.subr.mxu0 0.0
  %2166 = vmatpush2.msra.mxu0 0.0
  %2167 = vmatprep.subr.mxu0 0.0
  %2168 = vmatpush2.msra.mxu0 0.0
  %2169 = vmatprep.subr.mxu0 0.0
  %2170 = vmatpush2.msra.mxu0 0.0
  %2171 = vmatprep.mubr.f32.mxu0 0.0
  %2172 = vmatmul.mubr.f32.gmra.mxu0 %v1378
  %v2173 = vpop.f32.mrf.mxu0
  %v2174 = vadd.f32 %v2103, %v2173
  %v2175 = vpop.f32.mrf.mxu0
  %2176 = vmatprep.mubr.f32.mxu0 0.0
  %2177 = vmatmul.mubr.f32.gmra.mxu0 %v1478
  %v2178 = vpop.f32.mrf.mxu0
  %v2179 = vadd.f32 %v2103, %v2178
  %v2180 = vpop.f32.mrf.mxu0
  %2181 = vmatprep.mubr.f32.mxu0 0.0
  %2182 = vmatmul.mubr.f32.gmra.mxu0 %v1578
  %v2183 = vpop.f32.mrf.mxu0
  %v2184 = vadd.f32 %v2103, %v2183
  %v2185 = vpop.f32.mrf.mxu0
  %2186 = vmatprep.mubr.f32.mxu0 0.0
  %2187 = vmatmul.mubr.f32.gmra.mxu0 %v1678
  %v2188 = vpop.f32.mrf.mxu0
  %v2189 = vadd.f32 %v2103, %v2188
  %v2190 = vpop.f32.mrf.mxu0
  %2191 = vmatprep.mubr.f32.mxu0 0.0
  %2192 = vmatmul.mubr.f32.gmra.mxu0 %v1778
  %v2193 = vpop.f32.mrf.mxu0
  %v2194 = vadd.f32 %v2103, %v2193
  %v2195 = vpop.f32.mrf.mxu0
  %2196 = vmatprep.mubr.f32.mxu0 0.0
  %2197 = vmatmul.mubr.f32.gmra.mxu0 %v1878
  %v2198 = vpop.f32.mrf.mxu0
  %v2199 = vadd.f32 %v2103, %v2198
  %v2200 = vpop.f32.mrf.mxu0
  %2201 = vmatprep.mubr.f32.mxu0 0.0
  %2202 = vmatmul.mubr.f32.gmra.mxu0 %v1978
  %v2203 = vpop.f32.mrf.mxu0
  %v2204 = vadd.f32 %v2103, %v2203
  %v2205 = vpop.f32.mrf.mxu0
  %2206 = vmatprep.mubr.f32.mxu0 0.0
  %2207 = vmatmul.mubr.f32.gmra.mxu0 %v2105
  %v2208 = vpop.f32.mrf.mxu0
  %v2209 = vadd.f32 %v2103, %v2208
  %v2210 = vpop.f32.mrf.mxu0
  %2211 = vdwg.mxu0
  %s2212 = scalar_lea.vmem %s6, 16
  %v2213 = vld [vmem:[%s2212] sm:$0xff]
  %s2214 = scalar_lea.vmem %s7, 16
  %v2215 = vld [vmem:[%s2214] sm:$0xff]
  %v2217 = vsel %vm200, %v2213, 0
  %2219 = vmatprep.subr.mxu0 0.0
  %2220 = vmatpush1.msra.mxu0 0.0
  %2221 = vmatprep.subr.mxu0 0.0
  %2222 = vmatpush1.msra.mxu0 0.0
  %2223 = vmatprep.subr.mxu0 0.0
  %2224 = vmatpush1.msra.mxu0 0.0
  %2225 = vmatprep.subr.mxu0 0.0
  %2226 = vmatpush1.msra.mxu0 0.0
  %2227 = vmatprep.subr.mxu0 0.0
  %2228 = vmatpush1.msra.mxu0 0.0
  %2229 = vmatprep.subr.mxu0 0.0
  %2230 = vmatpush1.msra.mxu0 0.0
  %2231 = vmatprep.subr.mxu0 0.0
  %2232 = vmatpush1.msra.mxu0 0.0
  %2233 = vmatprep.subr.mxu0 0.0
  %2234 = vmatpush1.msra.mxu0 0.0
  %2235 = vmatprep.subr.mxu0 0.0
  %2236 = vmatpush1.msra.mxu0 0.0
  %2237 = vmatprep.subr.mxu0 0.0
  %2238 = vmatpush1.msra.mxu0 0.0
  %2239 = vmatprep.subr.mxu0 0.0
  %2240 = vmatpush1.msra.mxu0 0.0
  %2241 = vmatprep.subr.mxu0 0.0
  %2242 = vmatpush1.msra.mxu0 0.0
  %2243 = vmatprep.subr.mxu0 0.0
  %2244 = vmatpush1.msra.mxu0 %v2096
  %2245 = vmatprep.subr.mxu0 0.0
  %2246 = vmatpush1.msra.mxu0 %v2095
  %2247 = vmatprep.subr.mxu0 0.0
  %2248 = vmatpush1.msra.mxu0 %v2094
  %2249 = vmatprep.subr.mxu0 0.0
  %2250 = vmatpush1.msra.mxu0 %v2093
  %2251 = vmatprep.subr.mxu0 0.0
  %2252 = vmatpush2.msra.mxu0 0.0
  %2253 = vmatprep.subr.mxu0 0.0
  %2254 = vmatpush2.msra.mxu0 0.0
  %2255 = vmatprep.subr.mxu0 0.0
  %2256 = vmatpush2.msra.mxu0 0.0
  %2257 = vmatprep.subr.mxu0 0.0
  %2258 = vmatpush2.msra.mxu0 0.0
  %2259 = vmatprep.subr.mxu0 0.0
  %2260 = vmatpush2.msra.mxu0 0.0
  %2261 = vmatprep.subr.mxu0 0.0
  %2262 = vmatpush2.msra.mxu0 0.0
  %2263 = vmatprep.subr.mxu0 0.0
  %2264 = vmatpush2.msra.mxu0 0.0
  %2265 = vmatprep.subr.mxu0 0.0
  %2266 = vmatpush2.msra.mxu0 0.0
  %2267 = vmatprep.subr.mxu0 0.0
  %2268 = vmatpush2.msra.mxu0 0.0
  %2269 = vmatprep.subr.mxu0 0.0
  %2270 = vmatpush2.msra.mxu0 0.0
  %2271 = vmatprep.subr.mxu0 0.0
  %2272 = vmatpush2.msra.mxu0 0.0
  %2273 = vmatprep.subr.mxu0 0.0
  %2274 = vmatpush2.msra.mxu0 0.0
  %2275 = vmatprep.subr.mxu0 0.0
  %2276 = vmatpush2.msra.mxu0 0.0
  %2277 = vmatprep.subr.mxu0 0.0
  %2278 = vmatpush2.msra.mxu0 0.0
  %2279 = vmatprep.subr.mxu0 0.0
  %2280 = vmatpush2.msra.mxu0 0.0
  %2281 = vmatprep.subr.mxu0 0.0
  %2282 = vmatpush2.msra.mxu0 0.0
  %2283 = vmatprep.mubr.f32.mxu0 0.0
  %2284 = vmatmul.mubr.f32.gmra.mxu0 %v2217
  %v2285 = vpop.f32.mrf.mxu0
  %v2286 = vadd.f32 0.0, %v2285
  %v2287 = vpop.f32.mrf.mxu0
  %2288 = vdwg.mxu0
  %v2289 = vadd.f32 %v2174, %v2286
  %v2290 = vxor.u32 %v2289, 2147483648
  %v2291 = vmul.f32 %v2290, 1.442695
  %v2292 = vpow.pop %v2291
  %v2293 = vadd.f32 %v2292, 1.0
  %v2294 = vrcp.pop %v2293
  %v2295 = vmul.f32 1.0, %v2294
  %v2296 = vtanh.pop %v2289
  %2298 = vrot.lane.b32.xlu0 %v2215, 32
  %v2299 = vpop.permute.xlu0 %2298
  %v2301 = vmul.f32 %v2295, %v2299
  %2303 = vrot.lane.b32.xlu0 %v2296, 64
  %v2304 = vpop.permute.xlu0 %2303
  %v2306 = vmul.f32 %v2295, %v2304
  %2308 = vrot.lane.b32.xlu0 %v2306, 32
  %v2309 = vpop.permute.xlu0 %2308
  %v2311 = vadd.f32 %v2301, %v2309
  %v2312 = vtanh.pop %v2311
  %2314 = vrot.lane.b32.xlu0 %v2312, 64
  %v2315 = vpop.permute.xlu0 %2314
  %v2317 = vmul.f32 %v2295, %v2315
  %2319 = vrot.lane.b32.xlu0 %v2317, 32
  %v2320 = vpop.permute.xlu0 %2319
  %v2321 = vsel %vm200, %v2320, 0
  %2323 = vmatprep.subr.mxu0 0.0
  %2324 = vmatpush1.msra.mxu0 0.0
  %2325 = vmatprep.subr.mxu0 0.0
  %2326 = vmatpush1.msra.mxu0 0.0
  %2327 = vmatprep.subr.mxu0 0.0
  %2328 = vmatpush1.msra.mxu0 0.0
  %2329 = vmatprep.subr.mxu0 0.0
  %2330 = vmatpush1.msra.mxu0 0.0
  %2331 = vmatprep.subr.mxu0 0.0
  %2332 = vmatpush1.msra.mxu0 0.0
  %2333 = vmatprep.subr.mxu0 0.0
  %2334 = vmatpush1.msra.mxu0 0.0
  %2335 = vmatprep.subr.mxu0 0.0
  %2336 = vmatpush1.msra.mxu0 0.0
  %2337 = vmatprep.subr.mxu0 0.0
  %2338 = vmatpush1.msra.mxu0 0.0
  %2339 = vmatprep.subr.mxu0 0.0
  %2340 = vmatpush1.msra.mxu0 0.0
  %2341 = vmatprep.subr.mxu0 0.0
  %2342 = vmatpush1.msra.mxu0 0.0
  %2343 = vmatprep.subr.mxu0 0.0
  %2344 = vmatpush1.msra.mxu0 0.0
  %2345 = vmatprep.subr.mxu0 0.0
  %2346 = vmatpush1.msra.mxu0 0.0
  %2347 = vmatprep.subr.mxu0 0.0
  %2348 = vmatpush1.msra.mxu0 %v2096
  %2349 = vmatprep.subr.mxu0 0.0
  %2350 = vmatpush1.msra.mxu0 %v2095
  %2351 = vmatprep.subr.mxu0 0.0
  %2352 = vmatpush1.msra.mxu0 %v2094
  %2353 = vmatprep.subr.mxu0 0.0
  %2354 = vmatpush1.msra.mxu0 %v2093
  %2355 = vmatprep.subr.mxu0 0.0
  %2356 = vmatpush2.msra.mxu0 0.0
  %2357 = vmatprep.subr.mxu0 0.0
  %2358 = vmatpush2.msra.mxu0 0.0
  %2359 = vmatprep.subr.mxu0 0.0
  %2360 = vmatpush2.msra.mxu0 0.0
  %2361 = vmatprep.subr.mxu0 0.0
  %2362 = vmatpush2.msra.mxu0 0.0
  %2363 = vmatprep.subr.mxu0 0.0
  %2364 = vmatpush2.msra.mxu0 0.0
  %2365 = vmatprep.subr.mxu0 0.0
  %2366 = vmatpush2.msra.mxu0 0.0
  %2367 = vmatprep.subr.mxu0 0.0
  %2368 = vmatpush2.msra.mxu0 0.0
  %2369 = vmatprep.subr.mxu0 0.0
  %2370 = vmatpush2.msra.mxu0 0.0
  %2371 = vmatprep.subr.mxu0 0.0
  %2372 = vmatpush2.msra.mxu0 0.0
  %2373 = vmatprep.subr.mxu0 0.0
  %2374 = vmatpush2.msra.mxu0 0.0
  %2375 = vmatprep.subr.mxu0 0.0
  %2376 = vmatpush2.msra.mxu0 0.0
  %2377 = vmatprep.subr.mxu0 0.0
  %2378 = vmatpush2.msra.mxu0 0.0
  %2379 = vmatprep.subr.mxu0 0.0
  %2380 = vmatpush2.msra.mxu0 0.0
  %2381 = vmatprep.subr.mxu0 0.0
  %2382 = vmatpush2.msra.mxu0 0.0
  %2383 = vmatprep.subr.mxu0 0.0
  %2384 = vmatpush2.msra.mxu0 0.0
  %2385 = vmatprep.subr.mxu0 0.0
  %2386 = vmatpush2.msra.mxu0 0.0
  %2387 = vmatprep.mubr.f32.mxu0 0.0
  %2388 = vmatmul.mubr.f32.gmra.mxu0 %v2321
  %v2389 = vpop.f32.mrf.mxu0
  %v2390 = vadd.f32 0.0, %v2389
  %v2391 = vpop.f32.mrf.mxu0
  %2392 = vdwg.mxu0
  %v2393 = vadd.f32 %v2179, %v2390
  %v2394 = vxor.u32 %v2393, 2147483648
  %v2395 = vmul.f32 %v2394, 1.442695
  %v2396 = vpow.pop %v2395
  %v2397 = vadd.f32 %v2396, 1.0
  %v2398 = vrcp.pop %v2397
  %v2399 = vmul.f32 1.0, %v2398
  %v2400 = vtanh.pop %v2393
  %v2401 = vmul.f32 %v2399, %v2311
  %2403 = vrot.lane.b32.xlu0 %v2400, 64
  %v2404 = vpop.permute.xlu0 %2403
  %v2406 = vmul.f32 %v2399, %v2404
  %2408 = vrot.lane.b32.xlu0 %v2406, 32
  %v2409 = vpop.permute.xlu0 %2408
  %v2411 = vadd.f32 %v2401, %v2409
  %v2412 = vtanh.pop %v2411
  %2414 = vrot.lane.b32.xlu0 %v2412, 64
  %v2415 = vpop.permute.xlu0 %2414
  %v2417 = vmul.f32 %v2399, %v2415
  %2419 = vrot.lane.b32.xlu0 %v2417, 32
  %v2420 = vpop.permute.xlu0 %2419
  %v2421 = vsel %vm200, %v2420, 0
  %2423 = vmatprep.subr.mxu0 0.0
  %2424 = vmatpush1.msra.mxu0 0.0
  %2425 = vmatprep.subr.mxu0 0.0
  %2426 = vmatpush1.msra.mxu0 0.0
  %2427 = vmatprep.subr.mxu0 0.0
  %2428 = vmatpush1.msra.mxu0 0.0
  %2429 = vmatprep.subr.mxu0 0.0
  %2430 = vmatpush1.msra.mxu0 0.0
  %2431 = vmatprep.subr.mxu0 0.0
  %2432 = vmatpush1.msra.mxu0 0.0
  %2433 = vmatprep.subr.mxu0 0.0
  %2434 = vmatpush1.msra.mxu0 0.0
  %2435 = vmatprep.subr.mxu0 0.0
  %2436 = vmatpush1.msra.mxu0 0.0
  %2437 = vmatprep.subr.mxu0 0.0
  %2438 = vmatpush1.msra.mxu0 0.0
  %2439 = vmatprep.subr.mxu0 0.0
  %2440 = vmatpush1.msra.mxu0 0.0
  %2441 = vmatprep.subr.mxu0 0.0
  %2442 = vmatpush1.msra.mxu0 0.0
  %2443 = vmatprep.subr.mxu0 0.0
  %2444 = vmatpush1.msra.mxu0 0.0
  %2445 = vmatprep.subr.mxu0 0.0
  %2446 = vmatpush1.msra.mxu0 0.0
  %2447 = vmatprep.subr.mxu0 0.0
  %2448 = vmatpush1.msra.mxu0 %v2096
  %2449 = vmatprep.subr.mxu0 0.0
  %2450 = vmatpush1.msra.mxu0 %v2095
  %2451 = vmatprep.subr.mxu0 0.0
  %2452 = vmatpush1.msra.mxu0 %v2094
  %2453 = vmatprep.subr.mxu0 0.0
  %2454 = vmatpush1.msra.mxu0 %v2093
  %2455 = vmatprep.subr.mxu0 0.0
  %2456 = vmatpush2.msra.mxu0 0.0
  %2457 = vmatprep.subr.mxu0 0.0
  %2458 = vmatpush2.msra.mxu0 0.0
  %2459 = vmatprep.subr.mxu0 0.0
  %2460 = vmatpush2.msra.mxu0 0.0
  %2461 = vmatprep.subr.mxu0 0.0
  %2462 = vmatpush2.msra.mxu0 0.0
  %2463 = vmatprep.subr.mxu0 0.0
  %2464 = vmatpush2.msra.mxu0 0.0
  %2465 = vmatprep.subr.mxu0 0.0
  %2466 = vmatpush2.msra.mxu0 0.0
  %2467 = vmatprep.subr.mxu0 0.0
  %2468 = vmatpush2.msra.mxu0 0.0
  %2469 = vmatprep.subr.mxu0 0.0
  %2470 = vmatpush2.msra.mxu0 0.0
  %2471 = vmatprep.subr.mxu0 0.0
  %2472 = vmatpush2.msra.mxu0 0.0
  %2473 = vmatprep.subr.mxu0 0.0
  %2474 = vmatpush2.msra.mxu0 0.0
  %2475 = vmatprep.subr.mxu0 0.0
  %2476 = vmatpush2.msra.mxu0 0.0
  %2477 = vmatprep.subr.mxu0 0.0
  %2478 = vmatpush2.msra.mxu0 0.0
  %2479 = vmatprep.subr.mxu0 0.0
  %2480 = vmatpush2.msra.mxu0 0.0
  %2481 = vmatprep.subr.mxu0 0.0
  %2482 = vmatpush2.msra.mxu0 0.0
  %2483 = vmatprep.subr.mxu0 0.0
  %2484 = vmatpush2.msra.mxu0 0.0
  %2485 = vmatprep.subr.mxu0 0.0
  %2486 = vmatpush2.msra.mxu0 0.0
  %2487 = vmatprep.mubr.f32.mxu0 0.0
  %2488 = vmatmul.mubr.f32.gmra.mxu0 %v2421
  %v2489 = vpop.f32.mrf.mxu0
  %v2490 = vadd.f32 0.0, %v2489
  %v2491 = vpop.f32.mrf.mxu0
  %2492 = vdwg.mxu0
  %v2493 = vadd.f32 %v2184, %v2490
  %v2494 = vxor.u32 %v2493, 2147483648
  %v2495 = vmul.f32 %v2494, 1.442695
  %v2496 = vpow.pop %v2495
  %v2497 = vadd.f32 %v2496, 1.0
  %v2498 = vrcp.pop %v2497
  %v2499 = vmul.f32 1.0, %v2498
  %v2500 = vtanh.pop %v2493
  %v2501 = vmul.f32 %v2499, %v2411
  %2503 = vrot.lane.b32.xlu0 %v2500, 64
  %v2504 = vpop.permute.xlu0 %2503
  %v2506 = vmul.f32 %v2499, %v2504
  %2508 = vrot.lane.b32.xlu0 %v2506, 32
  %v2509 = vpop.permute.xlu0 %2508
  %v2511 = vadd.f32 %v2501, %v2509
  %v2512 = vtanh.pop %v2511
  %2514 = vrot.lane.b32.xlu0 %v2512, 64
  %v2515 = vpop.permute.xlu0 %2514
  %v2517 = vmul.f32 %v2499, %v2515
  %2519 = vrot.lane.b32.xlu0 %v2517, 32
  %v2520 = vpop.permute.xlu0 %2519
  %v2521 = vsel %vm200, %v2520, 0
  %2523 = vmatprep.subr.mxu0 0.0
  %2524 = vmatpush1.msra.mxu0 0.0
  %2525 = vmatprep.subr.mxu0 0.0
  %2526 = vmatpush1.msra.mxu0 0.0
  %2527 = vmatprep.subr.mxu0 0.0
  %2528 = vmatpush1.msra.mxu0 0.0
  %2529 = vmatprep.subr.mxu0 0.0
  %2530 = vmatpush1.msra.mxu0 0.0
  %2531 = vmatprep.subr.mxu0 0.0
  %2532 = vmatpush1.msra.mxu0 0.0
  %2533 = vmatprep.subr.mxu0 0.0
  %2534 = vmatpush1.msra.mxu0 0.0
  %2535 = vmatprep.subr.mxu0 0.0
  %2536 = vmatpush1.msra.mxu0 0.0
  %2537 = vmatprep.subr.mxu0 0.0
  %2538 = vmatpush1.msra.mxu0 0.0
  %2539 = vmatprep.subr.mxu0 0.0
  %2540 = vmatpush1.msra.mxu0 0.0
  %2541 = vmatprep.subr.mxu0 0.0
  %2542 = vmatpush1.msra.mxu0 0.0
  %2543 = vmatprep.subr.mxu0 0.0
  %2544 = vmatpush1.msra.mxu0 0.0
  %2545 = vmatprep.subr.mxu0 0.0
  %2546 = vmatpush1.msra.mxu0 0.0
  %2547 = vmatprep.subr.mxu0 0.0
  %2548 = vmatpush1.msra.mxu0 %v2096
  %2549 = vmatprep.subr.mxu0 0.0
  %2550 = vmatpush1.msra.mxu0 %v2095
  %2551 = vmatprep.subr.mxu0 0.0
  %2552 = vmatpush1.msra.mxu0 %v2094
  %2553 = vmatprep.subr.mxu0 0.0
  %2554 = vmatpush1.msra.mxu0 %v2093
  %2555 = vmatprep.subr.mxu0 0.0
  %2556 = vmatpush2.msra.mxu0 0.0
  %2557 = vmatprep.subr.mxu0 0.0
  %2558 = vmatpush2.msra.mxu0 0.0
  %2559 = vmatprep.subr.mxu0 0.0
  %2560 = vmatpush2.msra.mxu0 0.0
  %2561 = vmatprep.subr.mxu0 0.0
  %2562 = vmatpush2.msra.mxu0 0.0
  %2563 = vmatprep.subr.mxu0 0.0
  %2564 = vmatpush2.msra.mxu0 0.0
  %2565 = vmatprep.subr.mxu0 0.0
  %2566 = vmatpush2.msra.mxu0 0.0
  %2567 = vmatprep.subr.mxu0 0.0
  %2568 = vmatpush2.msra.mxu0 0.0
  %2569 = vmatprep.subr.mxu0 0.0
  %2570 = vmatpush2.msra.mxu0 0.0
  %2571 = vmatprep.subr.mxu0 0.0
  %2572 = vmatpush2.msra.mxu0 0.0
  %2573 = vmatprep.subr.mxu0 0.0
  %2574 = vmatpush2.msra.mxu0 0.0
  %2575 = vmatprep.subr.mxu0 0.0
  %2576 = vmatpush2.msra.mxu0 0.0
  %2577 = vmatprep.subr.mxu0 0.0
  %2578 = vmatpush2.msra.mxu0 0.0
  %2579 = vmatprep.subr.mxu0 0.0
  %2580 = vmatpush2.msra.mxu0 0.0
  %2581 = vmatprep.subr.mxu0 0.0
  %2582 = vmatpush2.msra.mxu0 0.0
  %2583 = vmatprep.subr.mxu0 0.0
  %2584 = vmatpush2.msra.mxu0 0.0
  %2585 = vmatprep.subr.mxu0 0.0
  %2586 = vmatpush2.msra.mxu0 0.0
  %2587 = vmatprep.mubr.f32.mxu0 0.0
  %2588 = vmatmul.mubr.f32.gmra.mxu0 %v2521
  %v2589 = vpop.f32.mrf.mxu0
  %v2590 = vadd.f32 0.0, %v2589
  %v2591 = vpop.f32.mrf.mxu0
  %2592 = vdwg.mxu0
  %v2593 = vadd.f32 %v2189, %v2590
  %v2594 = vxor.u32 %v2593, 2147483648
  %v2595 = vmul.f32 %v2594, 1.442695
  %v2596 = vpow.pop %v2595
  %v2597 = vadd.f32 %v2596, 1.0
  %v2598 = vrcp.pop %v2597
  %v2599 = vmul.f32 1.0, %v2598
  %v2600 = vtanh.pop %v2593
  %v2601 = vmul.f32 %v2599, %v2511
  %2603 = vrot.lane.b32.xlu0 %v2600, 64
  %v2604 = vpop.permute.xlu0 %2603
  %v2606 = vmul.f32 %v2599, %v2604
  %2608 = vrot.lane.b32.xlu0 %v2606, 32
  %v2609 = vpop.permute.xlu0 %2608
  %v2611 = vadd.f32 %v2601, %v2609
  %v2612 = vtanh.pop %v2611
  %2614 = vrot.lane.b32.xlu0 %v2612, 64
  %v2615 = vpop.permute.xlu0 %2614
  %v2617 = vmul.f32 %v2599, %v2615
  %2619 = vrot.lane.b32.xlu0 %v2617, 32
  %v2620 = vpop.permute.xlu0 %2619
  %v2621 = vsel %vm200, %v2620, 0
  %2623 = vmatprep.subr.mxu0 0.0
  %2624 = vmatpush1.msra.mxu0 0.0
  %2625 = vmatprep.subr.mxu0 0.0
  %2626 = vmatpush1.msra.mxu0 0.0
  %2627 = vmatprep.subr.mxu0 0.0
  %2628 = vmatpush1.msra.mxu0 0.0
  %2629 = vmatprep.subr.mxu0 0.0
  %2630 = vmatpush1.msra.mxu0 0.0
  %2631 = vmatprep.subr.mxu0 0.0
  %2632 = vmatpush1.msra.mxu0 0.0
  %2633 = vmatprep.subr.mxu0 0.0
  %2634 = vmatpush1.msra.mxu0 0.0
  %2635 = vmatprep.subr.mxu0 0.0
  %2636 = vmatpush1.msra.mxu0 0.0
  %2637 = vmatprep.subr.mxu0 0.0
  %2638 = vmatpush1.msra.mxu0 0.0
  %2639 = vmatprep.subr.mxu0 0.0
  %2640 = vmatpush1.msra.mxu0 0.0
  %2641 = vmatprep.subr.mxu0 0.0
  %2642 = vmatpush1.msra.mxu0 0.0
  %2643 = vmatprep.subr.mxu0 0.0
  %2644 = vmatpush1.msra.mxu0 0.0
  %2645 = vmatprep.subr.mxu0 0.0
  %2646 = vmatpush1.msra.mxu0 0.0
  %2647 = vmatprep.subr.mxu0 0.0
  %2648 = vmatpush1.msra.mxu0 %v2096
  %2649 = vmatprep.subr.mxu0 0.0
  %2650 = vmatpush1.msra.mxu0 %v2095
  %2651 = vmatprep.subr.mxu0 0.0
  %2652 = vmatpush1.msra.mxu0 %v2094
  %2653 = vmatprep.subr.mxu0 0.0
  %2654 = vmatpush1.msra.mxu0 %v2093
  %2655 = vmatprep.subr.mxu0 0.0
  %2656 = vmatpush2.msra.mxu0 0.0
  %2657 = vmatprep.subr.mxu0 0.0
  %2658 = vmatpush2.msra.mxu0 0.0
  %2659 = vmatprep.subr.mxu0 0.0
  %2660 = vmatpush2.msra.mxu0 0.0
  %2661 = vmatprep.subr.mxu0 0.0
  %2662 = vmatpush2.msra.mxu0 0.0
  %2663 = vmatprep.subr.mxu0 0.0
  %2664 = vmatpush2.msra.mxu0 0.0
  %2665 = vmatprep.subr.mxu0 0.0
  %2666 = vmatpush2.msra.mxu0 0.0
  %2667 = vmatprep.subr.mxu0 0.0
  %2668 = vmatpush2.msra.mxu0 0.0
  %2669 = vmatprep.subr.mxu0 0.0
  %2670 = vmatpush2.msra.mxu0 0.0
  %2671 = vmatprep.subr.mxu0 0.0
  %2672 = vmatpush2.msra.mxu0 0.0
  %2673 = vmatprep.subr.mxu0 0.0
  %2674 = vmatpush2.msra.mxu0 0.0
  %2675 = vmatprep.subr.mxu0 0.0
  %2676 = vmatpush2.msra.mxu0 0.0
  %2677 = vmatprep.subr.mxu0 0.0
  %2678 = vmatpush2.msra.mxu0 0.0
  %2679 = vmatprep.subr.mxu0 0.0
  %2680 = vmatpush2.msra.mxu0 0.0
  %2681 = vmatprep.subr.mxu0 0.0
  %2682 = vmatpush2.msra.mxu0 0.0
  %2683 = vmatprep.subr.mxu0 0.0
  %2684 = vmatpush2.msra.mxu0 0.0
  %2685 = vmatprep.subr.mxu0 0.0
  %2686 = vmatpush2.msra.mxu0 0.0
  %2687 = vmatprep.mubr.f32.mxu0 0.0
  %2688 = vmatmul.mubr.f32.gmra.mxu0 %v2621
  %v2689 = vpop.f32.mrf.mxu0
  %v2690 = vadd.f32 0.0, %v2689
  %v2691 = vpop.f32.mrf.mxu0
  %2692 = vdwg.mxu0
  %v2693 = vadd.f32 %v2194, %v2690
  %v2694 = vxor.u32 %v2693, 2147483648
  %v2695 = vmul.f32 %v2694, 1.442695
  %v2696 = vpow.pop %v2695
  %v2697 = vadd.f32 %v2696, 1.0
  %v2698 = vrcp.pop %v2697
  %v2699 = vmul.f32 1.0, %v2698
  %v2700 = vtanh.pop %v2693
  %v2701 = vmul.f32 %v2699, %v2611
  %2703 = vrot.lane.b32.xlu0 %v2700, 64
  %v2704 = vpop.permute.xlu0 %2703
  %v2706 = vmul.f32 %v2699, %v2704
  %2708 = vrot.lane.b32.xlu0 %v2706, 32
  %v2709 = vpop.permute.xlu0 %2708
  %v2711 = vadd.f32 %v2701, %v2709
  %v2712 = vtanh.pop %v2711
  %2714 = vrot.lane.b32.xlu0 %v2712, 64
  %v2715 = vpop.permute.xlu0 %2714
  %v2717 = vmul.f32 %v2699, %v2715
  %2719 = vrot.lane.b32.xlu0 %v2717, 32
  %v2720 = vpop.permute.xlu0 %2719
  %v2721 = vsel %vm200, %v2720, 0
  %2723 = vmatprep.subr.mxu0 0.0
  %2724 = vmatpush1.msra.mxu0 0.0
  %2725 = vmatprep.subr.mxu0 0.0
  %2726 = vmatpush1.msra.mxu0 0.0
  %2727 = vmatprep.subr.mxu0 0.0
  %2728 = vmatpush1.msra.mxu0 0.0
  %2729 = vmatprep.subr.mxu0 0.0
  %2730 = vmatpush1.msra.mxu0 0.0
  %2731 = vmatprep.subr.mxu0 0.0
  %2732 = vmatpush1.msra.mxu0 0.0
  %2733 = vmatprep.subr.mxu0 0.0
  %2734 = vmatpush1.msra.mxu0 0.0
  %2735 = vmatprep.subr.mxu0 0.0
  %2736 = vmatpush1.msra.mxu0 0.0
  %2737 = vmatprep.subr.mxu0 0.0
  %2738 = vmatpush1.msra.mxu0 0.0
  %2739 = vmatprep.subr.mxu0 0.0
  %2740 = vmatpush1.msra.mxu0 0.0
  %2741 = vmatprep.subr.mxu0 0.0
  %2742 = vmatpush1.msra.mxu0 0.0
  %2743 = vmatprep.subr.mxu0 0.0
  %2744 = vmatpush1.msra.mxu0 0.0
  %2745 = vmatprep.subr.mxu0 0.0
  %2746 = vmatpush1.msra.mxu0 0.0
  %2747 = vmatprep.subr.mxu0 0.0
  %2748 = vmatpush1.msra.mxu0 %v2096
  %2749 = vmatprep.subr.mxu0 0.0
  %2750 = vmatpush1.msra.mxu0 %v2095
  %2751 = vmatprep.subr.mxu0 0.0
  %2752 = vmatpush1.msra.mxu0 %v2094
  %2753 = vmatprep.subr.mxu0 0.0
  %2754 = vmatpush1.msra.mxu0 %v2093
  %2755 = vmatprep.subr.mxu0 0.0
  %2756 = vmatpush2.msra.mxu0 0.0
  %2757 = vmatprep.subr.mxu0 0.0
  %2758 = vmatpush2.msra.mxu0 0.0
  %2759 = vmatprep.subr.mxu0 0.0
  %2760 = vmatpush2.msra.mxu0 0.0
  %2761 = vmatprep.subr.mxu0 0.0
  %2762 = vmatpush2.msra.mxu0 0.0
  %2763 = vmatprep.subr.mxu0 0.0
  %2764 = vmatpush2.msra.mxu0 0.0
  %2765 = vmatprep.subr.mxu0 0.0
  %2766 = vmatpush2.msra.mxu0 0.0
  %2767 = vmatprep.subr.mxu0 0.0
  %2768 = vmatpush2.msra.mxu0 0.0
  %2769 = vmatprep.subr.mxu0 0.0
  %2770 = vmatpush2.msra.mxu0 0.0
  %2771 = vmatprep.subr.mxu0 0.0
  %2772 = vmatpush2.msra.mxu0 0.0
  %2773 = vmatprep.subr.mxu0 0.0
  %2774 = vmatpush2.msra.mxu0 0.0
  %2775 = vmatprep.subr.mxu0 0.0
  %2776 = vmatpush2.msra.mxu0 0.0
  %2777 = vmatprep.subr.mxu0 0.0
  %2778 = vmatpush2.msra.mxu0 0.0
  %2779 = vmatprep.subr.mxu0 0.0
  %2780 = vmatpush2.msra.mxu0 0.0
  %2781 = vmatprep.subr.mxu0 0.0
  %2782 = vmatpush2.msra.mxu0 0.0
  %2783 = vmatprep.subr.mxu0 0.0
  %2784 = vmatpush2.msra.mxu0 0.0
  %2785 = vmatprep.subr.mxu0 0.0
  %2786 = vmatpush2.msra.mxu0 0.0
  %2787 = vmatprep.mubr.f32.mxu0 0.0
  %2788 = vmatmul.mubr.f32.gmra.mxu0 %v2721
  %v2789 = vpop.f32.mrf.mxu0
  %v2790 = vadd.f32 0.0, %v2789
  %v2791 = vpop.f32.mrf.mxu0
  %2792 = vdwg.mxu0
  %v2793 = vadd.f32 %v2199, %v2790
  %v2794 = vxor.u32 %v2793, 2147483648
  %v2795 = vmul.f32 %v2794, 1.442695
  %v2796 = vpow.pop %v2795
  %v2797 = vadd.f32 %v2796, 1.0
  %v2798 = vrcp.pop %v2797
  %v2799 = vmul.f32 1.0, %v2798
  %v2800 = vtanh.pop %v2793
  %v2801 = vmul.f32 %v2799, %v2711
  %2803 = vrot.lane.b32.xlu0 %v2800, 64
  %v2804 = vpop.permute.xlu0 %2803
  %v2806 = vmul.f32 %v2799, %v2804
  %2808 = vrot.lane.b32.xlu0 %v2806, 32
  %v2809 = vpop.permute.xlu0 %2808
  %v2811 = vadd.f32 %v2801, %v2809
  %v2812 = vtanh.pop %v2811
  %2814 = vrot.lane.b32.xlu0 %v2812, 64
  %v2815 = vpop.permute.xlu0 %2814
  %v2817 = vmul.f32 %v2799, %v2815
  %2819 = vrot.lane.b32.xlu0 %v2817, 32
  %v2820 = vpop.permute.xlu0 %2819
  %v2821 = vsel %vm200, %v2820, 0
  %2823 = vmatprep.subr.mxu0 0.0
  %2824 = vmatpush1.msra.mxu0 0.0
  %2825 = vmatprep.subr.mxu0 0.0
  %2826 = vmatpush1.msra.mxu0 0.0
  %2827 = vmatprep.subr.mxu0 0.0
  %2828 = vmatpush1.msra.mxu0 0.0
  %2829 = vmatprep.subr.mxu0 0.0
  %2830 = vmatpush1.msra.mxu0 0.0
  %2831 = vmatprep.subr.mxu0 0.0
  %2832 = vmatpush1.msra.mxu0 0.0
  %2833 = vmatprep.subr.mxu0 0.0
  %2834 = vmatpush1.msra.mxu0 0.0
  %2835 = vmatprep.subr.mxu0 0.0
  %2836 = vmatpush1.msra.mxu0 0.0
  %2837 = vmatprep.subr.mxu0 0.0
  %2838 = vmatpush1.msra.mxu0 0.0
  %2839 = vmatprep.subr.mxu0 0.0
  %2840 = vmatpush1.msra.mxu0 0.0
  %2841 = vmatprep.subr.mxu0 0.0
  %2842 = vmatpush1.msra.mxu0 0.0
  %2843 = vmatprep.subr.mxu0 0.0
  %2844 = vmatpush1.msra.mxu0 0.0
  %2845 = vmatprep.subr.mxu0 0.0
  %2846 = vmatpush1.msra.mxu0 0.0
  %2847 = vmatprep.subr.mxu0 0.0
  %2848 = vmatpush1.msra.mxu0 %v2096
  %2849 = vmatprep.subr.mxu0 0.0
  %2850 = vmatpush1.msra.mxu0 %v2095
  %2851 = vmatprep.subr.mxu0 0.0
  %2852 = vmatpush1.msra.mxu0 %v2094
  %2853 = vmatprep.subr.mxu0 0.0
  %2854 = vmatpush1.msra.mxu0 %v2093
  %2855 = vmatprep.subr.mxu0 0.0
  %2856 = vmatpush2.msra.mxu0 0.0
  %2857 = vmatprep.subr.mxu0 0.0
  %2858 = vmatpush2.msra.mxu0 0.0
  %2859 = vmatprep.subr.mxu0 0.0
  %2860 = vmatpush2.msra.mxu0 0.0
  %2861 = vmatprep.subr.mxu0 0.0
  %2862 = vmatpush2.msra.mxu0 0.0
  %2863 = vmatprep.subr.mxu0 0.0
  %2864 = vmatpush2.msra.mxu0 0.0
  %2865 = vmatprep.subr.mxu0 0.0
  %2866 = vmatpush2.msra.mxu0 0.0
  %2867 = vmatprep.subr.mxu0 0.0
  %2868 = vmatpush2.msra.mxu0 0.0
  %2869 = vmatprep.subr.mxu0 0.0
  %2870 = vmatpush2.msra.mxu0 0.0
  %2871 = vmatprep.subr.mxu0 0.0
  %2872 = vmatpush2.msra.mxu0 0.0
  %2873 = vmatprep.subr.mxu0 0.0
  %2874 = vmatpush2.msra.mxu0 0.0
  %2875 = vmatprep.subr.mxu0 0.0
  %2876 = vmatpush2.msra.mxu0 0.0
  %2877 = vmatprep.subr.mxu0 0.0
  %2878 = vmatpush2.msra.mxu0 0.0
  %2879 = vmatprep.subr.mxu0 0.0
  %2880 = vmatpush2.msra.mxu0 0.0
  %2881 = vmatprep.subr.mxu0 0.0
  %2882 = vmatpush2.msra.mxu0 0.0
  %2883 = vmatprep.subr.mxu0 0.0
  %2884 = vmatpush2.msra.mxu0 0.0
  %2885 = vmatprep.subr.mxu0 0.0
  %2886 = vmatpush2.msra.mxu0 0.0
  %2887 = vmatprep.mubr.f32.mxu0 0.0
  %2888 = vmatmul.mubr.f32.gmra.mxu0 %v2821
  %v2889 = vpop.f32.mrf.mxu0
  %v2890 = vadd.f32 0.0, %v2889
  %v2891 = vpop.f32.mrf.mxu0
  %2892 = vdwg.mxu0
  %v2893 = vadd.f32 %v2204, %v2890
  %v2894 = vxor.u32 %v2893, 2147483648
  %v2895 = vmul.f32 %v2894, 1.442695
  %v2896 = vpow.pop %v2895
  %v2897 = vadd.f32 %v2896, 1.0
  %v2898 = vrcp.pop %v2897
  %v2899 = vmul.f32 1.0, %v2898
  %v2900 = vtanh.pop %v2893
  %v2901 = vmul.f32 %v2899, %v2811
  %2903 = vrot.lane.b32.xlu0 %v2900, 64
  %v2904 = vpop.permute.xlu0 %2903
  %v2906 = vmul.f32 %v2899, %v2904
  %2908 = vrot.lane.b32.xlu0 %v2906, 32
  %v2909 = vpop.permute.xlu0 %2908
  %v2911 = vadd.f32 %v2901, %v2909
  %v2912 = vtanh.pop %v2911
  %2914 = vrot.lane.b32.xlu0 %v2912, 64
  %v2915 = vpop.permute.xlu0 %2914
  %v2917 = vmul.f32 %v2899, %v2915
  %2919 = vrot.lane.b32.xlu0 %v2917, 32
  %v2920 = vpop.permute.xlu0 %2919
  %v2921 = vsel %vm200, %v2920, 0
  %2923 = vmatprep.subr.mxu0 0.0
  %2924 = vmatpush1.msra.mxu0 0.0
  %2925 = vmatprep.subr.mxu0 0.0
  %2926 = vmatpush1.msra.mxu0 0.0
  %2927 = vmatprep.subr.mxu0 0.0
  %2928 = vmatpush1.msra.mxu0 0.0
  %2929 = vmatprep.subr.mxu0 0.0
  %2930 = vmatpush1.msra.mxu0 0.0
  %2931 = vmatprep.subr.mxu0 0.0
  %2932 = vmatpush1.msra.mxu0 0.0
  %2933 = vmatprep.subr.mxu0 0.0
  %2934 = vmatpush1.msra.mxu0 0.0
  %2935 = vmatprep.subr.mxu0 0.0
  %2936 = vmatpush1.msra.mxu0 0.0
  %2937 = vmatprep.subr.mxu0 0.0
  %2938 = vmatpush1.msra.mxu0 0.0
  %2939 = vmatprep.subr.mxu0 0.0
  %2940 = vmatpush1.msra.mxu0 0.0
  %2941 = vmatprep.subr.mxu0 0.0
  %2942 = vmatpush1.msra.mxu0 0.0
  %2943 = vmatprep.subr.mxu0 0.0
  %2944 = vmatpush1.msra.mxu0 0.0
  %2945 = vmatprep.subr.mxu0 0.0
  %2946 = vmatpush1.msra.mxu0 0.0
  %2947 = vmatprep.subr.mxu0 0.0
  %2948 = vmatpush1.msra.mxu0 %v2096
  %2949 = vmatprep.subr.mxu0 0.0
  %2950 = vmatpush1.msra.mxu0 %v2095
  %2951 = vmatprep.subr.mxu0 0.0
  %2952 = vmatpush1.msra.mxu0 %v2094
  %2953 = vmatprep.subr.mxu0 0.0
  %2954 = vmatpush1.msra.mxu0 %v2093
  %2955 = vmatprep.subr.mxu0 0.0
  %2956 = vmatpush2.msra.mxu0 0.0
  %2957 = vmatprep.subr.mxu0 0.0
  %2958 = vmatpush2.msra.mxu0 0.0
  %2959 = vmatprep.subr.mxu0 0.0
  %2960 = vmatpush2.msra.mxu0 0.0
  %2961 = vmatprep.subr.mxu0 0.0
  %2962 = vmatpush2.msra.mxu0 0.0
  %2963 = vmatprep.subr.mxu0 0.0
  %2964 = vmatpush2.msra.mxu0 0.0
  %2965 = vmatprep.subr.mxu0 0.0
  %2966 = vmatpush2.msra.mxu0 0.0
  %2967 = vmatprep.subr.mxu0 0.0
  %2968 = vmatpush2.msra.mxu0 0.0
  %2969 = vmatprep.subr.mxu0 0.0
  %2970 = vmatpush2.msra.mxu0 0.0
  %2971 = vmatprep.subr.mxu0 0.0
  %2972 = vmatpush2.msra.mxu0 0.0
  %2973 = vmatprep.subr.mxu0 0.0
  %2974 = vmatpush2.msra.mxu0 0.0
  %2975 = vmatprep.subr.mxu0 0.0
  %2976 = vmatpush2.msra.mxu0 0.0
  %2977 = vmatprep.subr.mxu0 0.0
  %2978 = vmatpush2.msra.mxu0 0.0
  %2979 = vmatprep.subr.mxu0 0.0
  %2980 = vmatpush2.msra.mxu0 0.0
  %2981 = vmatprep.subr.mxu0 0.0
  %2982 = vmatpush2.msra.mxu0 0.0
  %2983 = vmatprep.subr.mxu0 0.0
  %2984 = vmatpush2.msra.mxu0 0.0
  %2985 = vmatprep.subr.mxu0 0.0
  %2986 = vmatpush2.msra.mxu0 0.0
  %2987 = vmatprep.mubr.f32.mxu0 0.0
  %2988 = vmatmul.mubr.f32.gmra.mxu0 %v2921
  %v2989 = vpop.f32.mrf.mxu0
  %v2990 = vadd.f32 0.0, %v2989
  %v2991 = vpop.f32.mrf.mxu0
  %2992 = vdwg.mxu0
  %v2993 = vadd.f32 %v2209, %v2990
  %v2994 = vxor.u32 %v2993, 2147483648
  %v2995 = vmul.f32 %v2994, 1.442695
  %v2996 = vpow.pop %v2995
  %v2997 = vadd.f32 %v2996, 1.0
  %v2998 = vrcp.pop %v2997
  %v2999 = vmul.f32 1.0, %v2998
  %v3000 = vtanh.pop %v2993
  %v3001 = vmul.f32 %v2999, %v2911
  %3003 = vrot.lane.b32.xlu0 %v3000, 64
  %v3004 = vpop.permute.xlu0 %3003
  %v3006 = vmul.f32 %v2999, %v3004
  %3008 = vrot.lane.b32.xlu0 %v3006, 32
  %v3009 = vpop.permute.xlu0 %3008
  %v3011 = vadd.f32 %v3001, %v3009
  %v3012 = vtanh.pop %v3011
  %3014 = vrot.lane.b32.xlu0 %v3012, 64
  %v3015 = vpop.permute.xlu0 %3014
  %v3017 = vmul.f32 %v2999, %v3015
  %3019 = vrot.lane.b32.xlu0 %v3017, 32
  %v3020 = vpop.permute.xlu0 %3019
  %s3022 = scalar_lea.vmem %s11, 16
  %3023 = vst.msk [vmem:[%s3022] sm:$0xff] %vm200, %v3020
  %3025 = vrot.lane.b32.xlu0 %v3011, 96
  %v3026 = vpop.permute.xlu0 %3025
  %s3028 = scalar_lea.vmem %s12, 16
  %3029 = vst.msk [vmem:[%s3028] sm:$0xff] %vm200, %v3026
  %s3030 = scalar_lea.vmem %s3, 96
  %v3031 = vld [vmem:[%s3030] sm:$0xff]
  %v3032 = vld [vmem:[%s3030 + $0x8] sm:$0xff]
  %v3033 = vld [vmem:[%s3030 + $0x10] sm:$0xff]
  %v3034 = vld [vmem:[%s3030 + $0x18] sm:$0xff]
  %s3035 = scalar_lea.vmem %s4, 96
  %v3036 = vld [vmem:[%s3035] sm:$0xff]
  %v3037 = vld [vmem:[%s3035 + $0x8] sm:$0xff]
  %v3038 = vld [vmem:[%s3035 + $0x10] sm:$0xff]
  %v3039 = vld [vmem:[%s3035 + $0x18] sm:$0xff]
  %s3040 = scalar_lea.vmem %s5, 3
  %v3041 = vld [vmem:[%s3040] sm:$0x1]
  %v3043 = vlaneseq
  %v3044 = vshrl.u32 %v3043, 7
  %v3045 = vsub.s32 0, %v3044
  %v3046 = vrot.slane %v3041, %v3045
  %v3048 = vsel %vm200, %v3020, 0
  %3050 = vmatprep.subr.mxu0 0.0
  %3051 = vmatpush1.msra.mxu0 0.0
  %3052 = vmatprep.subr.mxu0 0.0
  %3053 = vmatpush1.msra.mxu0 0.0
  %3054 = vmatprep.subr.mxu0 0.0
  %3055 = vmatpush1.msra.mxu0 0.0
  %3056 = vmatprep.subr.mxu0 0.0
  %3057 = vmatpush1.msra.mxu0 0.0
  %3058 = vmatprep.subr.mxu0 0.0
  %3059 = vmatpush1.msra.mxu0 0.0
  %3060 = vmatprep.subr.mxu0 0.0
  %3061 = vmatpush1.msra.mxu0 0.0
  %3062 = vmatprep.subr.mxu0 0.0
  %3063 = vmatpush1.msra.mxu0 0.0
  %3064 = vmatprep.subr.mxu0 0.0
  %3065 = vmatpush1.msra.mxu0 0.0
  %3066 = vmatprep.subr.mxu0 0.0
  %3067 = vmatpush1.msra.mxu0 0.0
  %3068 = vmatprep.subr.mxu0 0.0
  %3069 = vmatpush1.msra.mxu0 0.0
  %3070 = vmatprep.subr.mxu0 0.0
  %3071 = vmatpush1.msra.mxu0 0.0
  %3072 = vmatprep.subr.mxu0 0.0
  %3073 = vmatpush1.msra.mxu0 0.0
  %3074 = vmatprep.subr.mxu0 0.0
  %3075 = vmatpush1.msra.mxu0 %v3034
  %3076 = vmatprep.subr.mxu0 0.0
  %3077 = vmatpush1.msra.mxu0 %v3033
  %3078 = vmatprep.subr.mxu0 0.0
  %3079 = vmatpush1.msra.mxu0 %v3032
  %3080 = vmatprep.subr.mxu0 0.0
  %3081 = vmatpush1.msra.mxu0 %v3031
  %3082 = vmatprep.subr.mxu0 0.0
  %3083 = vmatpush2.msra.mxu0 0.0
  %3084 = vmatprep.subr.mxu0 0.0
  %3085 = vmatpush2.msra.mxu0 0.0
  %3086 = vmatprep.subr.mxu0 0.0
  %3087 = vmatpush2.msra.mxu0 0.0
  %3088 = vmatprep.subr.mxu0 0.0
  %3089 = vmatpush2.msra.mxu0 0.0
  %3090 = vmatprep.subr.mxu0 0.0
  %3091 = vmatpush2.msra.mxu0 0.0
  %3092 = vmatprep.subr.mxu0 0.0
  %3093 = vmatpush2.msra.mxu0 0.0
  %3094 = vmatprep.subr.mxu0 0.0
  %3095 = vmatpush2.msra.mxu0 0.0
  %3096 = vmatprep.subr.mxu0 0.0
  %3097 = vmatpush2.msra.mxu0 0.0
  %3098 = vmatprep.subr.mxu0 0.0
  %3099 = vmatpush2.msra.mxu0 0.0
  %3100 = vmatprep.subr.mxu0 0.0
  %3101 = vmatpush2.msra.mxu0 0.0
  %3102 = vmatprep.subr.mxu0 0.0
  %3103 = vmatpush2.msra.mxu0 0.0
  %3104 = vmatprep.subr.mxu0 0.0
  %3105 = vmatpush2.msra.mxu0 0.0
  %3106 = vmatprep.subr.mxu0 0.0
  %3107 = vmatpush2.msra.mxu0 0.0
  %3108 = vmatprep.subr.mxu0 0.0
  %3109 = vmatpush2.msra.mxu0 0.0
  %3110 = vmatprep.subr.mxu0 0.0
  %3111 = vmatpush2.msra.mxu0 0.0
  %3112 = vmatprep.subr.mxu0 0.0
  %3113 = vmatpush2.msra.mxu0 0.0
  %3114 = vmatprep.mubr.f32.mxu0 0.0
  %3115 = vmatmul.mubr.f32.gmra.mxu0 %v2321
  %v3116 = vpop.f32.mrf.mxu0
  %v3117 = vadd.f32 %v3046, %v3116
  %v3118 = vpop.f32.mrf.mxu0
  %3119 = vmatprep.mubr.f32.mxu0 0.0
  %3120 = vmatmul.mubr.f32.gmra.mxu0 %v2421
  %v3121 = vpop.f32.mrf.mxu0
  %v3122 = vadd.f32 %v3046, %v3121
  %v3123 = vpop.f32.mrf.mxu0
  %3124 = vmatprep.mubr.f32.mxu0 0.0
  %3125 = vmatmul.mubr.f32.gmra.mxu0 %v2521
  %v3126 = vpop.f32.mrf.mxu0
  %v3127 = vadd.f32 %v3046, %v3126
  %v3128 = vpop.f32.mrf.mxu0
  %3129 = vmatprep.mubr.f32.mxu0 0.0
  %3130 = vmatmul.mubr.f32.gmra.mxu0 %v2621
  %v3131 = vpop.f32.mrf.mxu0
  %v3132 = vadd.f32 %v3046, %v3131
  %v3133 = vpop.f32.mrf.mxu0
  %3134 = vmatprep.mubr.f32.mxu0 0.0
  %3135 = vmatmul.mubr.f32.gmra.mxu0 %v2721
  %v3136 = vpop.f32.mrf.mxu0
  %v3137 = vadd.f32 %v3046, %v3136
  %v3138 = vpop.f32.mrf.mxu0
  %3139 = vmatprep.mubr.f32.mxu0 0.0
  %3140 = vmatmul.mubr.f32.gmra.mxu0 %v2821
  %v3141 = vpop.f32.mrf.mxu0
  %v3142 = vadd.f32 %v3046, %v3141
  %v3143 = vpop.f32.mrf.mxu0
  %3144 = vmatprep.mubr.f32.mxu0 0.0
  %3145 = vmatmul.mubr.f32.gmra.mxu0 %v2921
  %v3146 = vpop.f32.mrf.mxu0
  %v3147 = vadd.f32 %v3046, %v3146
  %v3148 = vpop.f32.mrf.mxu0
  %3149 = vmatprep.mubr.f32.mxu0 0.0
  %3150 = vmatmul.mubr.f32.gmra.mxu0 %v3048
  %v3151 = vpop.f32.mrf.mxu0
  %v3152 = vadd.f32 %v3046, %v3151
  %v3153 = vpop.f32.mrf.mxu0
  %3154 = vdwg.mxu0
  %s3155 = scalar_lea.vmem %s6, 24
  %v3156 = vld [vmem:[%s3155] sm:$0xff]
  %s3157 = scalar_lea.vmem %s7, 24
  %v3158 = vld [vmem:[%s3157] sm:$0xff]
  %v3160 = vsel %vm200, %v3156, 0
  %3162 = vmatprep.subr.mxu0 0.0
  %3163 = vmatpush1.msra.mxu0 0.0
  %3164 = vmatprep.subr.mxu0 0.0
  %3165 = vmatpush1.msra.mxu0 0.0
  %3166 = vmatprep.subr.mxu0 0.0
  %3167 = vmatpush1.msra.mxu0 0.0
  %3168 = vmatprep.subr.mxu0 0.0
  %3169 = vmatpush1.msra.mxu0 0.0
  %3170 = vmatprep.subr.mxu0 0.0
  %3171 = vmatpush1.msra.mxu0 0.0
  %3172 = vmatprep.subr.mxu0 0.0
  %3173 = vmatpush1.msra.mxu0 0.0
  %3174 = vmatprep.subr.mxu0 0.0
  %3175 = vmatpush1.msra.mxu0 0.0
  %3176 = vmatprep.subr.mxu0 0.0
  %3177 = vmatpush1.msra.mxu0 0.0
  %3178 = vmatprep.subr.mxu0 0.0
  %3179 = vmatpush1.msra.mxu0 0.0
  %3180 = vmatprep.subr.mxu0 0.0
  %3181 = vmatpush1.msra.mxu0 0.0
  %3182 = vmatprep.subr.mxu0 0.0
  %3183 = vmatpush1.msra.mxu0 0.0
  %3184 = vmatprep.subr.mxu0 0.0
  %3185 = vmatpush1.msra.mxu0 0.0
  %3186 = vmatprep.subr.mxu0 0.0
  %3187 = vmatpush1.msra.mxu0 %v3039
  %3188 = vmatprep.subr.mxu0 0.0
  %3189 = vmatpush1.msra.mxu0 %v3038
  %3190 = vmatprep.subr.mxu0 0.0
  %3191 = vmatpush1.msra.mxu0 %v3037
  %3192 = vmatprep.subr.mxu0 0.0
  %3193 = vmatpush1.msra.mxu0 %v3036
  %3194 = vmatprep.subr.mxu0 0.0
  %3195 = vmatpush2.msra.mxu0 0.0
  %3196 = vmatprep.subr.mxu0 0.0
  %3197 = vmatpush2.msra.mxu0 0.0
  %3198 = vmatprep.subr.mxu0 0.0
  %3199 = vmatpush2.msra.mxu0 0.0
  %3200 = vmatprep.subr.mxu0 0.0
  %3201 = vmatpush2.msra.mxu0 0.0
  %3202 = vmatprep.subr.mxu0 0.0
  %3203 = vmatpush2.msra.mxu0 0.0
  %3204 = vmatprep.subr.mxu0 0.0
  %3205 = vmatpush2.msra.mxu0 0.0
  %3206 = vmatprep.subr.mxu0 0.0
  %3207 = vmatpush2.msra.mxu0 0.0
  %3208 = vmatprep.subr.mxu0 0.0
  %3209 = vmatpush2.msra.mxu0 0.0
  %3210 = vmatprep.subr.mxu0 0.0
  %3211 = vmatpush2.msra.mxu0 0.0
  %3212 = vmatprep.subr.mxu0 0.0
  %3213 = vmatpush2.msra.mxu0 0.0
  %3214 = vmatprep.subr.mxu0 0.0
  %3215 = vmatpush2.msra.mxu0 0.0
  %3216 = vmatprep.subr.mxu0 0.0
  %3217 = vmatpush2.msra.mxu0 0.0
  %3218 = vmatprep.subr.mxu0 0.0
  %3219 = vmatpush2.msra.mxu0 0.0
  %3220 = vmatprep.subr.mxu0 0.0
  %3221 = vmatpush2.msra.mxu0 0.0
  %3222 = vmatprep.subr.mxu0 0.0
  %3223 = vmatpush2.msra.mxu0 0.0
  %3224 = vmatprep.subr.mxu0 0.0
  %3225 = vmatpush2.msra.mxu0 0.0
  %3226 = vmatprep.mubr.f32.mxu0 0.0
  %3227 = vmatmul.mubr.f32.gmra.mxu0 %v3160
  %v3228 = vpop.f32.mrf.mxu0
  %v3229 = vadd.f32 0.0, %v3228
  %v3230 = vpop.f32.mrf.mxu0
  %3231 = vdwg.mxu0
  %v3232 = vadd.f32 %v3117, %v3229
  %v3233 = vxor.u32 %v3232, 2147483648
  %v3234 = vmul.f32 %v3233, 1.442695
  %v3235 = vpow.pop %v3234
  %v3236 = vadd.f32 %v3235, 1.0
  %v3237 = vrcp.pop %v3236
  %v3238 = vmul.f32 1.0, %v3237
  %v3239 = vtanh.pop %v3232
  %3241 = vrot.lane.b32.xlu0 %v3158, 32
  %v3242 = vpop.permute.xlu0 %3241
  %v3244 = vmul.f32 %v3238, %v3242
  %3246 = vrot.lane.b32.xlu0 %v3239, 64
  %v3247 = vpop.permute.xlu0 %3246
  %v3249 = vmul.f32 %v3238, %v3247
  %3251 = vrot.lane.b32.xlu0 %v3249, 32
  %v3252 = vpop.permute.xlu0 %3251
  %v3254 = vadd.f32 %v3244, %v3252
  %v3255 = vtanh.pop %v3254
  %3257 = vrot.lane.b32.xlu0 %v3255, 64
  %v3258 = vpop.permute.xlu0 %3257
  %v3260 = vmul.f32 %v3238, %v3258
  %3262 = vrot.lane.b32.xlu0 %v3260, 32
  %v3263 = vpop.permute.xlu0 %3262
  %v3264 = vsel %vm200, %v3263, 0
  %3266 = vmatprep.subr.mxu0 0.0
  %3267 = vmatpush1.msra.mxu0 0.0
  %3268 = vmatprep.subr.mxu0 0.0
  %3269 = vmatpush1.msra.mxu0 0.0
  %3270 = vmatprep.subr.mxu0 0.0
  %3271 = vmatpush1.msra.mxu0 0.0
  %3272 = vmatprep.subr.mxu0 0.0
  %3273 = vmatpush1.msra.mxu0 0.0
  %3274 = vmatprep.subr.mxu0 0.0
  %3275 = vmatpush1.msra.mxu0 0.0
  %3276 = vmatprep.subr.mxu0 0.0
  %3277 = vmatpush1.msra.mxu0 0.0
  %3278 = vmatprep.subr.mxu0 0.0
  %3279 = vmatpush1.msra.mxu0 0.0
  %3280 = vmatprep.subr.mxu0 0.0
  %3281 = vmatpush1.msra.mxu0 0.0
  %3282 = vmatprep.subr.mxu0 0.0
  %3283 = vmatpush1.msra.mxu0 0.0
  %3284 = vmatprep.subr.mxu0 0.0
  %3285 = vmatpush1.msra.mxu0 0.0
  %3286 = vmatprep.subr.mxu0 0.0
  %3287 = vmatpush1.msra.mxu0 0.0
  %3288 = vmatprep.subr.mxu0 0.0
  %3289 = vmatpush1.msra.mxu0 0.0
  %3290 = vmatprep.subr.mxu0 0.0
  %3291 = vmatpush1.msra.mxu0 %v3039
  %3292 = vmatprep.subr.mxu0 0.0
  %3293 = vmatpush1.msra.mxu0 %v3038
  %3294 = vmatprep.subr.mxu0 0.0
  %3295 = vmatpush1.msra.mxu0 %v3037
  %3296 = vmatprep.subr.mxu0 0.0
  %3297 = vmatpush1.msra.mxu0 %v3036
  %3298 = vmatprep.subr.mxu0 0.0
  %3299 = vmatpush2.msra.mxu0 0.0
  %3300 = vmatprep.subr.mxu0 0.0
  %3301 = vmatpush2.msra.mxu0 0.0
  %3302 = vmatprep.subr.mxu0 0.0
  %3303 = vmatpush2.msra.mxu0 0.0
  %3304 = vmatprep.subr.mxu0 0.0
  %3305 = vmatpush2.msra.mxu0 0.0
  %3306 = vmatprep.subr.mxu0 0.0
  %3307 = vmatpush2.msra.mxu0 0.0
  %3308 = vmatprep.subr.mxu0 0.0
  %3309 = vmatpush2.msra.mxu0 0.0
  %3310 = vmatprep.subr.mxu0 0.0
  %3311 = vmatpush2.msra.mxu0 0.0
  %3312 = vmatprep.subr.mxu0 0.0
  %3313 = vmatpush2.msra.mxu0 0.0
  %3314 = vmatprep.subr.mxu0 0.0
  %3315 = vmatpush2.msra.mxu0 0.0
  %3316 = vmatprep.subr.mxu0 0.0
  %3317 = vmatpush2.msra.mxu0 0.0
  %3318 = vmatprep.subr.mxu0 0.0
  %3319 = vmatpush2.msra.mxu0 0.0
  %3320 = vmatprep.subr.mxu0 0.0
  %3321 = vmatpush2.msra.mxu0 0.0
  %3322 = vmatprep.subr.mxu0 0.0
  %3323 = vmatpush2.msra.mxu0 0.0
  %3324 = vmatprep.subr.mxu0 0.0
  %3325 = vmatpush2.msra.mxu0 0.0
  %3326 = vmatprep.subr.mxu0 0.0
  %3327 = vmatpush2.msra.mxu0 0.0
  %3328 = vmatprep.subr.mxu0 0.0
  %3329 = vmatpush2.msra.mxu0 0.0
  %3330 = vmatprep.mubr.f32.mxu0 0.0
  %3331 = vmatmul.mubr.f32.gmra.mxu0 %v3264
  %v3332 = vpop.f32.mrf.mxu0
  %v3333 = vadd.f32 0.0, %v3332
  %v3334 = vpop.f32.mrf.mxu0
  %3335 = vdwg.mxu0
  %v3336 = vadd.f32 %v3122, %v3333
  %v3337 = vxor.u32 %v3336, 2147483648
  %v3338 = vmul.f32 %v3337, 1.442695
  %v3339 = vpow.pop %v3338
  %v3340 = vadd.f32 %v3339, 1.0
  %v3341 = vrcp.pop %v3340
  %v3342 = vmul.f32 1.0, %v3341
  %v3343 = vtanh.pop %v3336
  %v3344 = vmul.f32 %v3342, %v3254
  %3346 = vrot.lane.b32.xlu0 %v3343, 64
  %v3347 = vpop.permute.xlu0 %3346
  %v3349 = vmul.f32 %v3342, %v3347
  %3351 = vrot.lane.b32.xlu0 %v3349, 32
  %v3352 = vpop.permute.xlu0 %3351
  %v3354 = vadd.f32 %v3344, %v3352
  %v3355 = vtanh.pop %v3354
  %3357 = vrot.lane.b32.xlu0 %v3355, 64
  %v3358 = vpop.permute.xlu0 %3357
  %v3360 = vmul.f32 %v3342, %v3358
  %3362 = vrot.lane.b32.xlu0 %v3360, 32
  %v3363 = vpop.permute.xlu0 %3362
  %v3364 = vsel %vm200, %v3363, 0
  %3366 = vmatprep.subr.mxu0 0.0
  %3367 = vmatpush1.msra.mxu0 0.0
  %3368 = vmatprep.subr.mxu0 0.0
  %3369 = vmatpush1.msra.mxu0 0.0
  %3370 = vmatprep.subr.mxu0 0.0
  %3371 = vmatpush1.msra.mxu0 0.0
  %3372 = vmatprep.subr.mxu0 0.0
  %3373 = vmatpush1.msra.mxu0 0.0
  %3374 = vmatprep.subr.mxu0 0.0
  %3375 = vmatpush1.msra.mxu0 0.0
  %3376 = vmatprep.subr.mxu0 0.0
  %3377 = vmatpush1.msra.mxu0 0.0
  %3378 = vmatprep.subr.mxu0 0.0
  %3379 = vmatpush1.msra.mxu0 0.0
  %3380 = vmatprep.subr.mxu0 0.0
  %3381 = vmatpush1.msra.mxu0 0.0
  %3382 = vmatprep.subr.mxu0 0.0
  %3383 = vmatpush1.msra.mxu0 0.0
  %3384 = vmatprep.subr.mxu0 0.0
  %3385 = vmatpush1.msra.mxu0 0.0
  %3386 = vmatprep.subr.mxu0 0.0
  %3387 = vmatpush1.msra.mxu0 0.0
  %3388 = vmatprep.subr.mxu0 0.0
  %3389 = vmatpush1.msra.mxu0 0.0
  %3390 = vmatprep.subr.mxu0 0.0
  %3391 = vmatpush1.msra.mxu0 %v3039
  %3392 = vmatprep.subr.mxu0 0.0
  %3393 = vmatpush1.msra.mxu0 %v3038
  %3394 = vmatprep.subr.mxu0 0.0
  %3395 = vmatpush1.msra.mxu0 %v3037
  %3396 = vmatprep.subr.mxu0 0.0
  %3397 = vmatpush1.msra.mxu0 %v3036
  %3398 = vmatprep.subr.mxu0 0.0
  %3399 = vmatpush2.msra.mxu0 0.0
  %3400 = vmatprep.subr.mxu0 0.0
  %3401 = vmatpush2.msra.mxu0 0.0
  %3402 = vmatprep.subr.mxu0 0.0
  %3403 = vmatpush2.msra.mxu0 0.0
  %3404 = vmatprep.subr.mxu0 0.0
  %3405 = vmatpush2.msra.mxu0 0.0
  %3406 = vmatprep.subr.mxu0 0.0
  %3407 = vmatpush2.msra.mxu0 0.0
  %3408 = vmatprep.subr.mxu0 0.0
  %3409 = vmatpush2.msra.mxu0 0.0
  %3410 = vmatprep.subr.mxu0 0.0
  %3411 = vmatpush2.msra.mxu0 0.0
  %3412 = vmatprep.subr.mxu0 0.0
  %3413 = vmatpush2.msra.mxu0 0.0
  %3414 = vmatprep.subr.mxu0 0.0
  %3415 = vmatpush2.msra.mxu0 0.0
  %3416 = vmatprep.subr.mxu0 0.0
  %3417 = vmatpush2.msra.mxu0 0.0
  %3418 = vmatprep.subr.mxu0 0.0
  %3419 = vmatpush2.msra.mxu0 0.0
  %3420 = vmatprep.subr.mxu0 0.0
  %3421 = vmatpush2.msra.mxu0 0.0
  %3422 = vmatprep.subr.mxu0 0.0
  %3423 = vmatpush2.msra.mxu0 0.0
  %3424 = vmatprep.subr.mxu0 0.0
  %3425 = vmatpush2.msra.mxu0 0.0
  %3426 = vmatprep.subr.mxu0 0.0
  %3427 = vmatpush2.msra.mxu0 0.0
  %3428 = vmatprep.subr.mxu0 0.0
  %3429 = vmatpush2.msra.mxu0 0.0
  %3430 = vmatprep.mubr.f32.mxu0 0.0
  %3431 = vmatmul.mubr.f32.gmra.mxu0 %v3364
  %v3432 = vpop.f32.mrf.mxu0
  %v3433 = vadd.f32 0.0, %v3432
  %v3434 = vpop.f32.mrf.mxu0
  %3435 = vdwg.mxu0
  %v3436 = vadd.f32 %v3127, %v3433
  %v3437 = vxor.u32 %v3436, 2147483648
  %v3438 = vmul.f32 %v3437, 1.442695
  %v3439 = vpow.pop %v3438
  %v3440 = vadd.f32 %v3439, 1.0
  %v3441 = vrcp.pop %v3440
  %v3442 = vmul.f32 1.0, %v3441
  %v3443 = vtanh.pop %v3436
  %v3444 = vmul.f32 %v3442, %v3354
  %3446 = vrot.lane.b32.xlu0 %v3443, 64
  %v3447 = vpop.permute.xlu0 %3446
  %v3449 = vmul.f32 %v3442, %v3447
  %3451 = vrot.lane.b32.xlu0 %v3449, 32
  %v3452 = vpop.permute.xlu0 %3451
  %v3454 = vadd.f32 %v3444, %v3452
  %v3455 = vtanh.pop %v3454
  %3457 = vrot.lane.b32.xlu0 %v3455, 64
  %v3458 = vpop.permute.xlu0 %3457
  %v3460 = vmul.f32 %v3442, %v3458
  %3462 = vrot.lane.b32.xlu0 %v3460, 32
  %v3463 = vpop.permute.xlu0 %3462
  %v3464 = vsel %vm200, %v3463, 0
  %3466 = vmatprep.subr.mxu0 0.0
  %3467 = vmatpush1.msra.mxu0 0.0
  %3468 = vmatprep.subr.mxu0 0.0
  %3469 = vmatpush1.msra.mxu0 0.0
  %3470 = vmatprep.subr.mxu0 0.0
  %3471 = vmatpush1.msra.mxu0 0.0
  %3472 = vmatprep.subr.mxu0 0.0
  %3473 = vmatpush1.msra.mxu0 0.0
  %3474 = vmatprep.subr.mxu0 0.0
  %3475 = vmatpush1.msra.mxu0 0.0
  %3476 = vmatprep.subr.mxu0 0.0
  %3477 = vmatpush1.msra.mxu0 0.0
  %3478 = vmatprep.subr.mxu0 0.0
  %3479 = vmatpush1.msra.mxu0 0.0
  %3480 = vmatprep.subr.mxu0 0.0
  %3481 = vmatpush1.msra.mxu0 0.0
  %3482 = vmatprep.subr.mxu0 0.0
  %3483 = vmatpush1.msra.mxu0 0.0
  %3484 = vmatprep.subr.mxu0 0.0
  %3485 = vmatpush1.msra.mxu0 0.0
  %3486 = vmatprep.subr.mxu0 0.0
  %3487 = vmatpush1.msra.mxu0 0.0
  %3488 = vmatprep.subr.mxu0 0.0
  %3489 = vmatpush1.msra.mxu0 0.0
  %3490 = vmatprep.subr.mxu0 0.0
  %3491 = vmatpush1.msra.mxu0 %v3039
  %3492 = vmatprep.subr.mxu0 0.0
  %3493 = vmatpush1.msra.mxu0 %v3038
  %3494 = vmatprep.subr.mxu0 0.0
  %3495 = vmatpush1.msra.mxu0 %v3037
  %3496 = vmatprep.subr.mxu0 0.0
  %3497 = vmatpush1.msra.mxu0 %v3036
  %3498 = vmatprep.subr.mxu0 0.0
  %3499 = vmatpush2.msra.mxu0 0.0
  %3500 = vmatprep.subr.mxu0 0.0
  %3501 = vmatpush2.msra.mxu0 0.0
  %3502 = vmatprep.subr.mxu0 0.0
  %3503 = vmatpush2.msra.mxu0 0.0
  %3504 = vmatprep.subr.mxu0 0.0
  %3505 = vmatpush2.msra.mxu0 0.0
  %3506 = vmatprep.subr.mxu0 0.0
  %3507 = vmatpush2.msra.mxu0 0.0
  %3508 = vmatprep.subr.mxu0 0.0
  %3509 = vmatpush2.msra.mxu0 0.0
  %3510 = vmatprep.subr.mxu0 0.0
  %3511 = vmatpush2.msra.mxu0 0.0
  %3512 = vmatprep.subr.mxu0 0.0
  %3513 = vmatpush2.msra.mxu0 0.0
  %3514 = vmatprep.subr.mxu0 0.0
  %3515 = vmatpush2.msra.mxu0 0.0
  %3516 = vmatprep.subr.mxu0 0.0
  %3517 = vmatpush2.msra.mxu0 0.0
  %3518 = vmatprep.subr.mxu0 0.0
  %3519 = vmatpush2.msra.mxu0 0.0
  %3520 = vmatprep.subr.mxu0 0.0
  %3521 = vmatpush2.msra.mxu0 0.0
  %3522 = vmatprep.subr.mxu0 0.0
  %3523 = vmatpush2.msra.mxu0 0.0
  %3524 = vmatprep.subr.mxu0 0.0
  %3525 = vmatpush2.msra.mxu0 0.0
  %3526 = vmatprep.subr.mxu0 0.0
  %3527 = vmatpush2.msra.mxu0 0.0
  %3528 = vmatprep.subr.mxu0 0.0
  %3529 = vmatpush2.msra.mxu0 0.0
  %3530 = vmatprep.mubr.f32.mxu0 0.0
  %3531 = vmatmul.mubr.f32.gmra.mxu0 %v3464
  %v3532 = vpop.f32.mrf.mxu0
  %v3533 = vadd.f32 0.0, %v3532
  %v3534 = vpop.f32.mrf.mxu0
  %3535 = vdwg.mxu0
  %v3536 = vadd.f32 %v3132, %v3533
  %v3537 = vxor.u32 %v3536, 2147483648
  %v3538 = vmul.f32 %v3537, 1.442695
  %v3539 = vpow.pop %v3538
  %v3540 = vadd.f32 %v3539, 1.0
  %v3541 = vrcp.pop %v3540
  %v3542 = vmul.f32 1.0, %v3541
  %v3543 = vtanh.pop %v3536
  %v3544 = vmul.f32 %v3542, %v3454
  %3546 = vrot.lane.b32.xlu0 %v3543, 64
  %v3547 = vpop.permute.xlu0 %3546
  %v3549 = vmul.f32 %v3542, %v3547
  %3551 = vrot.lane.b32.xlu0 %v3549, 32
  %v3552 = vpop.permute.xlu0 %3551
  %v3554 = vadd.f32 %v3544, %v3552
  %v3555 = vtanh.pop %v3554
  %3557 = vrot.lane.b32.xlu0 %v3555, 64
  %v3558 = vpop.permute.xlu0 %3557
  %v3560 = vmul.f32 %v3542, %v3558
  %3562 = vrot.lane.b32.xlu0 %v3560, 32
  %v3563 = vpop.permute.xlu0 %3562
  %v3564 = vsel %vm200, %v3563, 0
  %3566 = vmatprep.subr.mxu0 0.0
  %3567 = vmatpush1.msra.mxu0 0.0
  %3568 = vmatprep.subr.mxu0 0.0
  %3569 = vmatpush1.msra.mxu0 0.0
  %3570 = vmatprep.subr.mxu0 0.0
  %3571 = vmatpush1.msra.mxu0 0.0
  %3572 = vmatprep.subr.mxu0 0.0
  %3573 = vmatpush1.msra.mxu0 0.0
  %3574 = vmatprep.subr.mxu0 0.0
  %3575 = vmatpush1.msra.mxu0 0.0
  %3576 = vmatprep.subr.mxu0 0.0
  %3577 = vmatpush1.msra.mxu0 0.0
  %3578 = vmatprep.subr.mxu0 0.0
  %3579 = vmatpush1.msra.mxu0 0.0
  %3580 = vmatprep.subr.mxu0 0.0
  %3581 = vmatpush1.msra.mxu0 0.0
  %3582 = vmatprep.subr.mxu0 0.0
  %3583 = vmatpush1.msra.mxu0 0.0
  %3584 = vmatprep.subr.mxu0 0.0
  %3585 = vmatpush1.msra.mxu0 0.0
  %3586 = vmatprep.subr.mxu0 0.0
  %3587 = vmatpush1.msra.mxu0 0.0
  %3588 = vmatprep.subr.mxu0 0.0
  %3589 = vmatpush1.msra.mxu0 0.0
  %3590 = vmatprep.subr.mxu0 0.0
  %3591 = vmatpush1.msra.mxu0 %v3039
  %3592 = vmatprep.subr.mxu0 0.0
  %3593 = vmatpush1.msra.mxu0 %v3038
  %3594 = vmatprep.subr.mxu0 0.0
  %3595 = vmatpush1.msra.mxu0 %v3037
  %3596 = vmatprep.subr.mxu0 0.0
  %3597 = vmatpush1.msra.mxu0 %v3036
  %3598 = vmatprep.subr.mxu0 0.0
  %3599 = vmatpush2.msra.mxu0 0.0
  %3600 = vmatprep.subr.mxu0 0.0
  %3601 = vmatpush2.msra.mxu0 0.0
  %3602 = vmatprep.subr.mxu0 0.0
  %3603 = vmatpush2.msra.mxu0 0.0
  %3604 = vmatprep.subr.mxu0 0.0
  %3605 = vmatpush2.msra.mxu0 0.0
  %3606 = vmatprep.subr.mxu0 0.0
  %3607 = vmatpush2.msra.mxu0 0.0
  %3608 = vmatprep.subr.mxu0 0.0
  %3609 = vmatpush2.msra.mxu0 0.0
  %3610 = vmatprep.subr.mxu0 0.0
  %3611 = vmatpush2.msra.mxu0 0.0
  %3612 = vmatprep.subr.mxu0 0.0
  %3613 = vmatpush2.msra.mxu0 0.0
  %3614 = vmatprep.subr.mxu0 0.0
  %3615 = vmatpush2.msra.mxu0 0.0
  %3616 = vmatprep.subr.mxu0 0.0
  %3617 = vmatpush2.msra.mxu0 0.0
  %3618 = vmatprep.subr.mxu0 0.0
  %3619 = vmatpush2.msra.mxu0 0.0
  %3620 = vmatprep.subr.mxu0 0.0
  %3621 = vmatpush2.msra.mxu0 0.0
  %3622 = vmatprep.subr.mxu0 0.0
  %3623 = vmatpush2.msra.mxu0 0.0
  %3624 = vmatprep.subr.mxu0 0.0
  %3625 = vmatpush2.msra.mxu0 0.0
  %3626 = vmatprep.subr.mxu0 0.0
  %3627 = vmatpush2.msra.mxu0 0.0
  %3628 = vmatprep.subr.mxu0 0.0
  %3629 = vmatpush2.msra.mxu0 0.0
  %3630 = vmatprep.mubr.f32.mxu0 0.0
  %3631 = vmatmul.mubr.f32.gmra.mxu0 %v3564
  %v3632 = vpop.f32.mrf.mxu0
  %v3633 = vadd.f32 0.0, %v3632
  %v3634 = vpop.f32.mrf.mxu0
  %3635 = vdwg.mxu0
  %v3636 = vadd.f32 %v3137, %v3633
  %v3637 = vxor.u32 %v3636, 2147483648
  %v3638 = vmul.f32 %v3637, 1.442695
  %v3639 = vpow.pop %v3638
  %v3640 = vadd.f32 %v3639, 1.0
  %v3641 = vrcp.pop %v3640
  %v3642 = vmul.f32 1.0, %v3641
  %v3643 = vtanh.pop %v3636
  %v3644 = vmul.f32 %v3642, %v3554
  %3646 = vrot.lane.b32.xlu0 %v3643, 64
  %v3647 = vpop.permute.xlu0 %3646
  %v3649 = vmul.f32 %v3642, %v3647
  %3651 = vrot.lane.b32.xlu0 %v3649, 32
  %v3652 = vpop.permute.xlu0 %3651
  %v3654 = vadd.f32 %v3644, %v3652
  %v3655 = vtanh.pop %v3654
  %3657 = vrot.lane.b32.xlu0 %v3655, 64
  %v3658 = vpop.permute.xlu0 %3657
  %v3660 = vmul.f32 %v3642, %v3658
  %3662 = vrot.lane.b32.xlu0 %v3660, 32
  %v3663 = vpop.permute.xlu0 %3662
  %v3664 = vsel %vm200, %v3663, 0
  %3666 = vmatprep.subr.mxu0 0.0
  %3667 = vmatpush1.msra.mxu0 0.0
  %3668 = vmatprep.subr.mxu0 0.0
  %3669 = vmatpush1.msra.mxu0 0.0
  %3670 = vmatprep.subr.mxu0 0.0
  %3671 = vmatpush1.msra.mxu0 0.0
  %3672 = vmatprep.subr.mxu0 0.0
  %3673 = vmatpush1.msra.mxu0 0.0
  %3674 = vmatprep.subr.mxu0 0.0
  %3675 = vmatpush1.msra.mxu0 0.0
  %3676 = vmatprep.subr.mxu0 0.0
  %3677 = vmatpush1.msra.mxu0 0.0
  %3678 = vmatprep.subr.mxu0 0.0
  %3679 = vmatpush1.msra.mxu0 0.0
  %3680 = vmatprep.subr.mxu0 0.0
  %3681 = vmatpush1.msra.mxu0 0.0
  %3682 = vmatprep.subr.mxu0 0.0
  %3683 = vmatpush1.msra.mxu0 0.0
  %3684 = vmatprep.subr.mxu0 0.0
  %3685 = vmatpush1.msra.mxu0 0.0
  %3686 = vmatprep.subr.mxu0 0.0
  %3687 = vmatpush1.msra.mxu0 0.0
  %3688 = vmatprep.subr.mxu0 0.0
  %3689 = vmatpush1.msra.mxu0 0.0
  %3690 = vmatprep.subr.mxu0 0.0
  %3691 = vmatpush1.msra.mxu0 %v3039
  %3692 = vmatprep.subr.mxu0 0.0
  %3693 = vmatpush1.msra.mxu0 %v3038
  %3694 = vmatprep.subr.mxu0 0.0
  %3695 = vmatpush1.msra.mxu0 %v3037
  %3696 = vmatprep.subr.mxu0 0.0
  %3697 = vmatpush1.msra.mxu0 %v3036
  %3698 = vmatprep.subr.mxu0 0.0
  %3699 = vmatpush2.msra.mxu0 0.0
  %3700 = vmatprep.subr.mxu0 0.0
  %3701 = vmatpush2.msra.mxu0 0.0
  %3702 = vmatprep.subr.mxu0 0.0
  %3703 = vmatpush2.msra.mxu0 0.0
  %3704 = vmatprep.subr.mxu0 0.0
  %3705 = vmatpush2.msra.mxu0 0.0
  %3706 = vmatprep.subr.mxu0 0.0
  %3707 = vmatpush2.msra.mxu0 0.0
  %3708 = vmatprep.subr.mxu0 0.0
  %3709 = vmatpush2.msra.mxu0 0.0
  %3710 = vmatprep.subr.mxu0 0.0
  %3711 = vmatpush2.msra.mxu0 0.0
  %3712 = vmatprep.subr.mxu0 0.0
  %3713 = vmatpush2.msra.mxu0 0.0
  %3714 = vmatprep.subr.mxu0 0.0
  %3715 = vmatpush2.msra.mxu0 0.0
  %3716 = vmatprep.subr.mxu0 0.0
  %3717 = vmatpush2.msra.mxu0 0.0
  %3718 = vmatprep.subr.mxu0 0.0
  %3719 = vmatpush2.msra.mxu0 0.0
  %3720 = vmatprep.subr.mxu0 0.0
  %3721 = vmatpush2.msra.mxu0 0.0
  %3722 = vmatprep.subr.mxu0 0.0
  %3723 = vmatpush2.msra.mxu0 0.0
  %3724 = vmatprep.subr.mxu0 0.0
  %3725 = vmatpush2.msra.mxu0 0.0
  %3726 = vmatprep.subr.mxu0 0.0
  %3727 = vmatpush2.msra.mxu0 0.0
  %3728 = vmatprep.subr.mxu0 0.0
  %3729 = vmatpush2.msra.mxu0 0.0
  %3730 = vmatprep.mubr.f32.mxu0 0.0
  %3731 = vmatmul.mubr.f32.gmra.mxu0 %v3664
  %v3732 = vpop.f32.mrf.mxu0
  %v3733 = vadd.f32 0.0, %v3732
  %v3734 = vpop.f32.mrf.mxu0
  %3735 = vdwg.mxu0
  %v3736 = vadd.f32 %v3142, %v3733
  %v3737 = vxor.u32 %v3736, 2147483648
  %v3738 = vmul.f32 %v3737, 1.442695
  %v3739 = vpow.pop %v3738
  %v3740 = vadd.f32 %v3739, 1.0
  %v3741 = vrcp.pop %v3740
  %v3742 = vmul.f32 1.0, %v3741
  %v3743 = vtanh.pop %v3736
  %v3744 = vmul.f32 %v3742, %v3654
  %3746 = vrot.lane.b32.xlu0 %v3743, 64
  %v3747 = vpop.permute.xlu0 %3746
  %v3749 = vmul.f32 %v3742, %v3747
  %3751 = vrot.lane.b32.xlu0 %v3749, 32
  %v3752 = vpop.permute.xlu0 %3751
  %v3754 = vadd.f32 %v3744, %v3752
  %v3755 = vtanh.pop %v3754
  %3757 = vrot.lane.b32.xlu0 %v3755, 64
  %v3758 = vpop.permute.xlu0 %3757
  %v3760 = vmul.f32 %v3742, %v3758
  %3762 = vrot.lane.b32.xlu0 %v3760, 32
  %v3763 = vpop.permute.xlu0 %3762
  %v3764 = vsel %vm200, %v3763, 0
  %3766 = vmatprep.subr.mxu0 0.0
  %3767 = vmatpush1.msra.mxu0 0.0
  %3768 = vmatprep.subr.mxu0 0.0
  %3769 = vmatpush1.msra.mxu0 0.0
  %3770 = vmatprep.subr.mxu0 0.0
  %3771 = vmatpush1.msra.mxu0 0.0
  %3772 = vmatprep.subr.mxu0 0.0
  %3773 = vmatpush1.msra.mxu0 0.0
  %3774 = vmatprep.subr.mxu0 0.0
  %3775 = vmatpush1.msra.mxu0 0.0
  %3776 = vmatprep.subr.mxu0 0.0
  %3777 = vmatpush1.msra.mxu0 0.0
  %3778 = vmatprep.subr.mxu0 0.0
  %3779 = vmatpush1.msra.mxu0 0.0
  %3780 = vmatprep.subr.mxu0 0.0
  %3781 = vmatpush1.msra.mxu0 0.0
  %3782 = vmatprep.subr.mxu0 0.0
  %3783 = vmatpush1.msra.mxu0 0.0
  %3784 = vmatprep.subr.mxu0 0.0
  %3785 = vmatpush1.msra.mxu0 0.0
  %3786 = vmatprep.subr.mxu0 0.0
  %3787 = vmatpush1.msra.mxu0 0.0
  %3788 = vmatprep.subr.mxu0 0.0
  %3789 = vmatpush1.msra.mxu0 0.0
  %3790 = vmatprep.subr.mxu0 0.0
  %3791 = vmatpush1.msra.mxu0 %v3039
  %3792 = vmatprep.subr.mxu0 0.0
  %3793 = vmatpush1.msra.mxu0 %v3038
  %3794 = vmatprep.subr.mxu0 0.0
  %3795 = vmatpush1.msra.mxu0 %v3037
  %3796 = vmatprep.subr.mxu0 0.0
  %3797 = vmatpush1.msra.mxu0 %v3036
  %3798 = vmatprep.subr.mxu0 0.0
  %3799 = vmatpush2.msra.mxu0 0.0
  %3800 = vmatprep.subr.mxu0 0.0
  %3801 = vmatpush2.msra.mxu0 0.0
  %3802 = vmatprep.subr.mxu0 0.0
  %3803 = vmatpush2.msra.mxu0 0.0
  %3804 = vmatprep.subr.mxu0 0.0
  %3805 = vmatpush2.msra.mxu0 0.0
  %3806 = vmatprep.subr.mxu0 0.0
  %3807 = vmatpush2.msra.mxu0 0.0
  %3808 = vmatprep.subr.mxu0 0.0
  %3809 = vmatpush2.msra.mxu0 0.0
  %3810 = vmatprep.subr.mxu0 0.0
  %3811 = vmatpush2.msra.mxu0 0.0
  %3812 = vmatprep.subr.mxu0 0.0
  %3813 = vmatpush2.msra.mxu0 0.0
  %3814 = vmatprep.subr.mxu0 0.0
  %3815 = vmatpush2.msra.mxu0 0.0
  %3816 = vmatprep.subr.mxu0 0.0
  %3817 = vmatpush2.msra.mxu0 0.0
  %3818 = vmatprep.subr.mxu0 0.0
  %3819 = vmatpush2.msra.mxu0 0.0
  %3820 = vmatprep.subr.mxu0 0.0
  %3821 = vmatpush2.msra.mxu0 0.0
  %3822 = vmatprep.subr.mxu0 0.0
  %3823 = vmatpush2.msra.mxu0 0.0
  %3824 = vmatprep.subr.mxu0 0.0
  %3825 = vmatpush2.msra.mxu0 0.0
  %3826 = vmatprep.subr.mxu0 0.0
  %3827 = vmatpush2.msra.mxu0 0.0
  %3828 = vmatprep.subr.mxu0 0.0
  %3829 = vmatpush2.msra.mxu0 0.0
  %3830 = vmatprep.mubr.f32.mxu0 0.0
  %3831 = vmatmul.mubr.f32.gmra.mxu0 %v3764
  %v3832 = vpop.f32.mrf.mxu0
  %v3833 = vadd.f32 0.0, %v3832
  %v3834 = vpop.f32.mrf.mxu0
  %3835 = vdwg.mxu0
  %v3836 = vadd.f32 %v3147, %v3833
  %v3837 = vxor.u32 %v3836, 2147483648
  %v3838 = vmul.f32 %v3837, 1.442695
  %v3839 = vpow.pop %v3838
  %v3840 = vadd.f32 %v3839, 1.0
  %v3841 = vrcp.pop %v3840
  %v3842 = vmul.f32 1.0, %v3841
  %v3843 = vtanh.pop %v3836
  %v3844 = vmul.f32 %v3842, %v3754
  %3846 = vrot.lane.b32.xlu0 %v3843, 64
  %v3847 = vpop.permute.xlu0 %3846
  %v3849 = vmul.f32 %v3842, %v3847
  %3851 = vrot.lane.b32.xlu0 %v3849, 32
  %v3852 = vpop.permute.xlu0 %3851
  %v3854 = vadd.f32 %v3844, %v3852
  %v3855 = vtanh.pop %v3854
  %3857 = vrot.lane.b32.xlu0 %v3855, 64
  %v3858 = vpop.permute.xlu0 %3857
  %v3860 = vmul.f32 %v3842, %v3858
  %3862 = vrot.lane.b32.xlu0 %v3860, 32
  %v3863 = vpop.permute.xlu0 %3862
  %v3864 = vsel %vm200, %v3863, 0
  %3866 = vmatprep.subr.mxu0 0.0
  %3867 = vmatpush1.msra.mxu0 0.0
  %3868 = vmatprep.subr.mxu0 0.0
  %3869 = vmatpush1.msra.mxu0 0.0
  %3870 = vmatprep.subr.mxu0 0.0
  %3871 = vmatpush1.msra.mxu0 0.0
  %3872 = vmatprep.subr.mxu0 0.0
  %3873 = vmatpush1.msra.mxu0 0.0
  %3874 = vmatprep.subr.mxu0 0.0
  %3875 = vmatpush1.msra.mxu0 0.0
  %3876 = vmatprep.subr.mxu0 0.0
  %3877 = vmatpush1.msra.mxu0 0.0
  %3878 = vmatprep.subr.mxu0 0.0
  %3879 = vmatpush1.msra.mxu0 0.0
  %3880 = vmatprep.subr.mxu0 0.0
  %3881 = vmatpush1.msra.mxu0 0.0
  %3882 = vmatprep.subr.mxu0 0.0
  %3883 = vmatpush1.msra.mxu0 0.0
  %3884 = vmatprep.subr.mxu0 0.0
  %3885 = vmatpush1.msra.mxu0 0.0
  %3886 = vmatprep.subr.mxu0 0.0
  %3887 = vmatpush1.msra.mxu0 0.0
  %3888 = vmatprep.subr.mxu0 0.0
  %3889 = vmatpush1.msra.mxu0 0.0
  %3890 = vmatprep.subr.mxu0 0.0
  %3891 = vmatpush1.msra.mxu0 %v3039
  %3892 = vmatprep.subr.mxu0 0.0
  %3893 = vmatpush1.msra.mxu0 %v3038
  %3894 = vmatprep.subr.mxu0 0.0
  %3895 = vmatpush1.msra.mxu0 %v3037
  %3896 = vmatprep.subr.mxu0 0.0
  %3897 = vmatpush1.msra.mxu0 %v3036
  %3898 = vmatprep.subr.mxu0 0.0
  %3899 = vmatpush2.msra.mxu0 0.0
  %3900 = vmatprep.subr.mxu0 0.0
  %3901 = vmatpush2.msra.mxu0 0.0
  %3902 = vmatprep.subr.mxu0 0.0
  %3903 = vmatpush2.msra.mxu0 0.0
  %3904 = vmatprep.subr.mxu0 0.0
  %3905 = vmatpush2.msra.mxu0 0.0
  %3906 = vmatprep.subr.mxu0 0.0
  %3907 = vmatpush2.msra.mxu0 0.0
  %3908 = vmatprep.subr.mxu0 0.0
  %3909 = vmatpush2.msra.mxu0 0.0
  %3910 = vmatprep.subr.mxu0 0.0
  %3911 = vmatpush2.msra.mxu0 0.0
  %3912 = vmatprep.subr.mxu0 0.0
  %3913 = vmatpush2.msra.mxu0 0.0
  %3914 = vmatprep.subr.mxu0 0.0
  %3915 = vmatpush2.msra.mxu0 0.0
  %3916 = vmatprep.subr.mxu0 0.0
  %3917 = vmatpush2.msra.mxu0 0.0
  %3918 = vmatprep.subr.mxu0 0.0
  %3919 = vmatpush2.msra.mxu0 0.0
  %3920 = vmatprep.subr.mxu0 0.0
  %3921 = vmatpush2.msra.mxu0 0.0
  %3922 = vmatprep.subr.mxu0 0.0
  %3923 = vmatpush2.msra.mxu0 0.0
  %3924 = vmatprep.subr.mxu0 0.0
  %3925 = vmatpush2.msra.mxu0 0.0
  %3926 = vmatprep.subr.mxu0 0.0
  %3927 = vmatpush2.msra.mxu0 0.0
  %3928 = vmatprep.subr.mxu0 0.0
  %3929 = vmatpush2.msra.mxu0 0.0
  %3930 = vmatprep.mubr.f32.mxu0 0.0
  %3931 = vmatmul.mubr.f32.gmra.mxu0 %v3864
  %v3932 = vpop.f32.mrf.mxu0
  %v3933 = vadd.f32 0.0, %v3932
  %v3934 = vpop.f32.mrf.mxu0
  %3935 = vdwg.mxu0
  %v3936 = vadd.f32 %v3152, %v3933
  %v3937 = vxor.u32 %v3936, 2147483648
  %v3938 = vmul.f32 %v3937, 1.442695
  %v3939 = vpow.pop %v3938
  %v3940 = vadd.f32 %v3939, 1.0
  %v3941 = vrcp.pop %v3940
  %v3942 = vmul.f32 1.0, %v3941
  %v3943 = vtanh.pop %v3936
  %v3944 = vmul.f32 %v3942, %v3854
  %3946 = vrot.lane.b32.xlu0 %v3943, 64
  %v3947 = vpop.permute.xlu0 %3946
  %v3949 = vmul.f32 %v3942, %v3947
  %3951 = vrot.lane.b32.xlu0 %v3949, 32
  %v3952 = vpop.permute.xlu0 %3951
  %v3954 = vadd.f32 %v3944, %v3952
  %v3955 = vtanh.pop %v3954
  %3957 = vrot.lane.b32.xlu0 %v3955, 64
  %v3958 = vpop.permute.xlu0 %3957
  %v3960 = vmul.f32 %v3942, %v3958
  %3962 = vrot.lane.b32.xlu0 %v3960, 32
  %v3963 = vpop.permute.xlu0 %3962
  %s3965 = scalar_lea.vmem %s11, 24
  %3966 = vst.msk [vmem:[%s3965] sm:$0xff] %vm200, %v3963
  %3968 = vrot.lane.b32.xlu0 %v3954, 96
  %v3969 = vpop.permute.xlu0 %3968
  %s3971 = scalar_lea.vmem %s12, 24
  %3972 = vst.msk [vmem:[%s3971] sm:$0xff] %vm200, %v3969
  %v3973 = vld [vmem:[%s8] sm:$0xff]
  %v3974 = vld [vmem:[%s8 + $0x8] sm:$0xff]
  %v3975 = vld [vmem:[%s8 + $0x10] sm:$0xff]
  %v3976 = vld [vmem:[%s8 + $0x18] sm:$0xff]
  %v3977 = vld [vmem:[%s9] sm:$0x1]
  %v3979 = vlaneseq
  %v3980 = vshrl.u32 %v3979, 7
  %v3981 = vsub.s32 0, %v3980
  %v3982 = vrot.slane %v3977, %v3981
  %v3984 = vsel %vm200, %v3963, 0
  %3986 = vmatprep.subr.mxu0 0.0
  %3987 = vmatpush1.msra.mxu0 0.0
  %3988 = vmatprep.subr.mxu0 0.0
  %3989 = vmatpush1.msra.mxu0 0.0
  %3990 = vmatprep.subr.mxu0 0.0
  %3991 = vmatpush1.msra.mxu0 0.0
  %3992 = vmatprep.subr.mxu0 0.0
  %3993 = vmatpush1.msra.mxu0 0.0
  %3994 = vmatprep.subr.mxu0 0.0
  %3995 = vmatpush1.msra.mxu0 0.0
  %3996 = vmatprep.subr.mxu0 0.0
  %3997 = vmatpush1.msra.mxu0 0.0
  %3998 = vmatprep.subr.mxu0 0.0
  %3999 = vmatpush1.msra.mxu0 0.0
  %4000 = vmatprep.subr.mxu0 0.0
  %4001 = vmatpush1.msra.mxu0 0.0
  %4002 = vmatprep.subr.mxu0 0.0
  %4003 = vmatpush1.msra.mxu0 0.0
  %4004 = vmatprep.subr.mxu0 0.0
  %4005 = vmatpush1.msra.mxu0 0.0
  %4006 = vmatprep.subr.mxu0 0.0
  %4007 = vmatpush1.msra.mxu0 0.0
  %4008 = vmatprep.subr.mxu0 0.0
  %4009 = vmatpush1.msra.mxu0 0.0
  %4010 = vmatprep.subr.mxu0 0.0
  %4011 = vmatpush1.msra.mxu0 %v3976
  %4012 = vmatprep.subr.mxu0 0.0
  %4013 = vmatpush1.msra.mxu0 %v3975
  %4014 = vmatprep.subr.mxu0 0.0
  %4015 = vmatpush1.msra.mxu0 %v3974
  %4016 = vmatprep.subr.mxu0 0.0
  %4017 = vmatpush1.msra.mxu0 %v3973
  %4018 = vmatprep.subr.mxu0 0.0
  %4019 = vmatpush2.msra.mxu0 0.0
  %4020 = vmatprep.subr.mxu0 0.0
  %4021 = vmatpush2.msra.mxu0 0.0
  %4022 = vmatprep.subr.mxu0 0.0
  %4023 = vmatpush2.msra.mxu0 0.0
  %4024 = vmatprep.subr.mxu0 0.0
  %4025 = vmatpush2.msra.mxu0 0.0
  %4026 = vmatprep.subr.mxu0 0.0
  %4027 = vmatpush2.msra.mxu0 0.0
  %4028 = vmatprep.subr.mxu0 0.0
  %4029 = vmatpush2.msra.mxu0 0.0
  %4030 = vmatprep.subr.mxu0 0.0
  %4031 = vmatpush2.msra.mxu0 0.0
  %4032 = vmatprep.subr.mxu0 0.0
  %4033 = vmatpush2.msra.mxu0 0.0
  %4034 = vmatprep.subr.mxu0 0.0
  %4035 = vmatpush2.msra.mxu0 0.0
  %4036 = vmatprep.subr.mxu0 0.0
  %4037 = vmatpush2.msra.mxu0 0.0
  %4038 = vmatprep.subr.mxu0 0.0
  %4039 = vmatpush2.msra.mxu0 0.0
  %4040 = vmatprep.subr.mxu0 0.0
  %4041 = vmatpush2.msra.mxu0 0.0
  %4042 = vmatprep.subr.mxu0 0.0
  %4043 = vmatpush2.msra.mxu0 0.0
  %4044 = vmatprep.subr.mxu0 0.0
  %4045 = vmatpush2.msra.mxu0 0.0
  %4046 = vmatprep.subr.mxu0 0.0
  %4047 = vmatpush2.msra.mxu0 0.0
  %4048 = vmatprep.subr.mxu0 0.0
  %4049 = vmatpush2.msra.mxu0 0.0
  %4050 = vmatprep.mubr.f32.mxu0 0.0
  %4051 = vmatmul.mubr.f32.gmra.mxu0 %v3264
  %v4052 = vpop.f32.mrf.mxu0
  %v4053 = vadd.f32 %v3982, %v4052
  %v4054 = vpop.f32.mrf.mxu0
  %4055 = vmatprep.mubr.f32.mxu0 0.0
  %4056 = vmatmul.mubr.f32.gmra.mxu0 %v3364
  %v4057 = vpop.f32.mrf.mxu0
  %v4058 = vadd.f32 %v3982, %v4057
  %v4059 = vpop.f32.mrf.mxu0
  %4060 = vmatprep.mubr.f32.mxu0 0.0
  %4061 = vmatmul.mubr.f32.gmra.mxu0 %v3464
  %v4062 = vpop.f32.mrf.mxu0
  %v4063 = vadd.f32 %v3982, %v4062
  %v4064 = vpop.f32.mrf.mxu0
  %4065 = vmatprep.mubr.f32.mxu0 0.0
  %4066 = vmatmul.mubr.f32.gmra.mxu0 %v3564
  %v4067 = vpop.f32.mrf.mxu0
  %v4068 = vadd.f32 %v3982, %v4067
  %v4069 = vpop.f32.mrf.mxu0
  %4070 = vmatprep.mubr.f32.mxu0 0.0
  %4071 = vmatmul.mubr.f32.gmra.mxu0 %v3664
  %v4072 = vpop.f32.mrf.mxu0
  %v4073 = vadd.f32 %v3982, %v4072
  %v4074 = vpop.f32.mrf.mxu0
  %4075 = vmatprep.mubr.f32.mxu0 0.0
  %4076 = vmatmul.mubr.f32.gmra.mxu0 %v3764
  %v4077 = vpop.f32.mrf.mxu0
  %v4078 = vadd.f32 %v3982, %v4077
  %v4079 = vpop.f32.mrf.mxu0
  %4080 = vmatprep.mubr.f32.mxu0 0.0
  %4081 = vmatmul.mubr.f32.gmra.mxu0 %v3864
  %v4082 = vpop.f32.mrf.mxu0
  %v4083 = vadd.f32 %v3982, %v4082
  %v4084 = vpop.f32.mrf.mxu0
  %4085 = vmatprep.mubr.f32.mxu0 0.0
  %4086 = vmatmul.mubr.f32.gmra.mxu0 %v3984
  %v4087 = vpop.f32.mrf.mxu0
  %v4088 = vadd.f32 %v3982, %v4087
  %v4089 = vpop.f32.mrf.mxu0
  %4090 = vdwg.mxu0
  %4091 = vst.msk [vmem:[%s10] sm:$0xff] %vm55, %v4053
  %4092 = vst.msk [vmem:[%s10 + $0x8] sm:$0xff] %vm55, %v4058
  %4093 = vst.msk [vmem:[%s10 + $0x10] sm:$0xff] %vm55, %v4063
  %4094 = vst.msk [vmem:[%s10 + $0x18] sm:$0xff] %vm55, %v4068
  %4095 = vst.msk [vmem:[%s10 + $0x20] sm:$0xff] %vm55, %v4073
  %4096 = vst.msk [vmem:[%s10 + $0x28] sm:$0xff] %vm55, %v4078
  %4097 = vst.msk [vmem:[%s10 + $0x30] sm:$0xff] %vm55, %v4083
  %4098 = vst.msk [vmem:[%s10 + $0x38] sm:$0xff] %vm55, %v4088
  // Predicated region
  $region42: #{rnn_forward.1} parent=0 // pred_check
    _
  $region43: #{rnn_forward.1} parent=0 // pred_check_branch
    %4100 = sbr.rel (0) target = $region45
  $region44: #{rnn_forward.1} parent=0 // pred_region
    _
  $region45: #{rnn_forward.1} parent=0 // pred_fallthru
    _
  // Predicated region
  $region46: #{rnn_forward.1} parent=0 // pred_check
    _
  $region47: #{rnn_forward.1} parent=0 // pred_check_branch
    %4102 = sbr.rel (0) target = $region49
  $region48: #{rnn_forward.1} parent=0 // pred_region
    _
  $region49: #{rnn_forward.1} parent=0 // pred_fallthru
    _
  // Predicated region
  $region50: #{rnn_forward.1} parent=0 // pred_check
    _
  $region51: #{rnn_forward.1} parent=0 // pred_check_branch
    %4104 = sbr.rel (0) target = $region53
  $region52: #{rnn_forward.1} parent=0 // pred_region
    _
  $region53: #{rnn_forward.1} parent=0 // pred_fallthru
    _
  // Predicated region
  $region54: #{rnn_forward.1} parent=0 // pred_check
    _
  $region55: #{rnn_forward.1} parent=0 // pred_check_branch
    %4106 = sbr.rel (0) target = $region57
  $region56: #{rnn_forward.1} parent=0 // pred_region
    _
  $region57: #{rnn_forward.1} parent=0 // pred_fallthru
    _
  // Predicated region
  $region58: #{rnn_forward.1} parent=0 // pred_check
    _
  $region59: #{rnn_forward.1} parent=0 // pred_check_branch
    %4108 = sbr.rel (0) target = $region61
  $region60: #{rnn_forward.1} parent=0 // pred_region
    _
  $region61: #{rnn_forward.1} parent=0 // pred_fallthru
    _
  // Predicated region
  $region62: #{rnn_forward.1} parent=0 // pred_check
    _
  $region63: #{rnn_forward.1} parent=0 // pred_check_branch
    %4110 = sbr.rel (0) target = $region65
  $region64: #{rnn_forward.1} parent=0 // pred_region
    _
  $region65: #{rnn_forward.1} parent=0 // pred_fallthru
    _

</llo_original>
